<compile_context>
chip_gen: v7x
topology: tpu7x:2x2x1
jax: 0.10.0
libtpu: 0.0.40
codegen_flags: <defaults>
</compile_context>

<pallas_src>
import numpy as np
import jax
import jax.numpy as jnp
from jax.experimental import pallas as pl
from jax.experimental.pallas import tpu as pltpu  # noqa: F401  (TPU backend)

# ----------------------------- small synthetic config -----------------------------
B, N = 2, 2
C_IN, C_OUT = 8, 16
FH, FW = 8, 16                          # feature_size
AZIMUTH_RANGE = (-1.0, 1.0)
ELEVATION_RANGE = (-0.5, 0.5)
XBOUND = (-8.0, 8.0, 2.0)
YBOUND = (-8.0, 8.0, 2.0)
ZBOUND = (-4.0, 4.0, 8.0)
DBOUND = (1.0, 9.0, 2.0)                # -> D = 4 depth bins


def gen_dx_bx(xbound, ybound, zbound):
    dx = np.array([row[2] for row in (xbound, ybound, zbound)], np.float32)
    bx = np.array([row[0] + row[2] / 2.0 for row in (xbound, ybound, zbound)], np.float32)
    nx = np.array([int((row[1] - row[0]) / row[2]) for row in (xbound, ybound, zbound)], np.int32)
    return dx, bx, nx


DX, BX, NXv = gen_dx_bx(XBOUND, YBOUND, ZBOUND)
NX, NY, NZ = int(NXv[0]), int(NXv[1]), int(NXv[2])
# Grid origin and inverse cell sizes as exact Python floats. 1/dx is exact here (dx are
# powers of two), so (g - LOW) * INV_DX is identical (bit-exact) under Mosaic and XLA.
LOW = tuple(float(v) for v in (BX - DX / 2.0))
INV_DX = tuple(float(1.0 / v) for v in DX)


def create_frustum():
    ds = np.arange(DBOUND[0], DBOUND[1], DBOUND[2], dtype=np.float32)          # (D,)
    D = ds.shape[0]
    az = np.linspace(AZIMUTH_RANGE[0], AZIMUTH_RANGE[1], FW, dtype=np.float32)
    el = np.linspace(ELEVATION_RANGE[0], ELEVATION_RANGE[1], FH, dtype=np.float32)
    ds_g = np.broadcast_to(ds[:, None, None], (D, FH, FW))
    az_g = np.broadcast_to(az[None, None, :], (D, FH, FW))
    el_g = np.broadcast_to(el[None, :, None], (D, FH, FW))
    xs = ds_g * np.cos(el_g) * np.sin(az_g)
    ys = ds_g * np.sin(el_g)
    zs = ds_g * np.cos(el_g) * np.cos(az_g)
    return np.stack([xs, ys, zs], axis=-1).astype(np.float32)                  # (D, FH, FW, 3)


FRUSTUM = create_frustum()
D_BINS = FRUSTUM.shape[0]
BN = B * N
HW = FH * FW                            # 128 (lane-dense)
DHW = D_BINS * HW                       # 512
NPRIME = BN * DHW                       # 2048
NVOX = B * NZ * NX * NY                 # 128 (lane-dense)


def synthetic_world2cam(pts3):
    # pts3: (3, M) -> pixel coords under an equidistant fisheye model (replaces OcamCamera).
    x, y, z = pts3
    rho = np.sqrt(x * x + y * y)
    theta = np.arctan2(rho, z)
    fov = np.deg2rad(220.0)
    width = height = 640.0
    f = (width / 2.0) / (fov / 2.0)
    r = f * theta
    safe_rho = np.where(rho > 1e-8, rho, 1.0)
    u = width / 2.0 + r * x / safe_rho
    v = height / 2.0 + r * y / safe_rho
    return u.astype(np.float32), v.astype(np.float32), width, height


def get_sphere_grid():
    grids = []
    for d in range(D_BINS):
        u, v, w, h = synthetic_world2cam(FRUSTUM[d].reshape(-1, 3).T)
        mapx = (u.reshape(FH, FW) * 2.0 / w - 1.0)
        mapy = (v.reshape(FH, FW) * 2.0 / h - 1.0)
        grids.append(np.stack([mapx, mapy], axis=-1))
    grid = np.stack(grids, axis=0)                                             # (D, FH, FW, 2)
    depth = np.zeros((D_BINS, FH, FW, 1), np.float32)
    return np.concatenate([grid, depth], axis=-1).astype(np.float32)           # (D, FH, FW, 3)


def build_interp_matrix(sphere_grid):
    # Exact F.grid_sample(bilinear, align_corners=True, padding_mode='zeros') as a matrix.
    gx = sphere_grid[..., 0].reshape(-1)
    gy = sphere_grid[..., 1].reshape(-1)
    ix = (gx + 1.0) * 0.5 * (FW - 1)
    iy = (gy + 1.0) * 0.5 * (FH - 1)
    x0 = np.floor(ix); y0 = np.floor(iy)
    x1 = x0 + 1.0;     y1 = y0 + 1.0
    wx1 = ix - x0; wx0 = 1.0 - wx1
    wy1 = iy - y0; wy0 = 1.0 - wy1
    P = gx.shape[0]
    S = np.zeros((P, HW), np.float32)
    rows = np.arange(P)
    for xc, yc, w in ((x0, y0, wx0 * wy0), (x1, y0, wx1 * wy0),
                      (x0, y1, wx0 * wy1), (x1, y1, wx1 * wy1)):
        xi = xc.astype(np.int64); yi = yc.astype(np.int64)
        valid = (xi >= 0) & (xi < FW) & (yi >= 0) & (yi < FH)
        q = np.clip(yi, 0, FH - 1) * FW + np.clip(xi, 0, FW - 1)
        np.add.at(S, (rows, q), (w * valid).astype(np.float32))
    return S                                                                    # (DHW, HW)


# ----------------------------- fused Pallas kernel ---------------------------------
# Inputs  (whole arrays in VMEM, grid-less single invocation; all lane-dense):
#   x_ref    : (BN*C_IN, HW )   f32  channels-first image features (free NCHW reshape)
#   st_ref   : (HW,      DHW)   f32  S^T interpolation matrix
#   wt_ref   : (C_OUT,   C_IN)  f32  proj_x weight, transposed (shared across cameras)
#   bias_ref : (C_OUT,   1)     f32  proj_x bias column
#   srow_ref : (1,       DHW)   f32  row-sums of S (bias folded through grid_sample)
#   geom_ref : (BN*3,    DHW)   f32  rotated+translated frustum rows (x,y,z per camera)
# Outputs:
#   feats_ref: (C_OUT,   BN*DHW) f32 warped camera features, lane-dense
#   bev_ref  : (C_OUT,   NVOX)   f32 mean-pooled BEV features, lane-dense
def fused_lss_kernel(x_ref, st_ref, wt_ref, bias_ref, srow_ref, geom_ref,
                     feats_ref, bev_ref):
    # ---- stage 1a: warp ALL cameras' input channels through S^T in one MXU matmul ----
    # S-first ordering (~2x fewer MACs than conv-first since C_OUT > C_IN).
    tmp_all = jnp.dot(x_ref[...], st_ref[...],
                      preferred_element_type=jnp.float32)            # (BN*C_IN, DHW)

    # Bias folded through S as an in-kernel rank-1 outer product (replaces the old
    # precomputed (BN*C_OUT, DHW) bias slab DMA). Valid because bias is added before
    # warping and grid_sample uses zeros padding.
    bias_outer = bias_ref[...] * srow_ref[...]                        # (C_OUT, DHW)

    warp_blocks = []
    vox_blocks = []
    for bn in range(BN):                                              # static unroll (BN=4)
        # ---- stage 1b: shared 1x1 conv per camera -> lane-block of (C_OUT, BN*DHW) ----
        tmp_bn = tmp_all[bn * C_IN:(bn + 1) * C_IN, :]                # (C_IN, DHW)
        warp_blocks.append(
            jnp.dot(wt_ref[...], tmp_bn,
                    preferred_element_type=jnp.float32) + bias_outer)  # (C_OUT, DHW)

        # ---- stage 2: voxel ids from geometry rows, fused on the VPU ----
        gx = geom_ref[3 * bn + 0:3 * bn + 1, :]                       # (1, DHW)
        gy = geom_ref[3 * bn + 1:3 * bn + 2, :]
        gz = geom_ref[3 * bn + 2:3 * bn + 3, :]
        # trunc-toward-zero cast matches torch .long(); points slightly below the grid
        # origin truncate to index 0 and are kept (intentionally matching PyTorch).
        ix = ((gx - LOW[0]) * INV_DX[0]).astype(jnp.int32)
        iy = ((gy - LOW[1]) * INV_DX[1]).astype(jnp.int32)
        iz = ((gz - LOW[2]) * INV_DX[2]).astype(jnp.int32)
        kept = ((ix >= 0) & (ix < NX) & (iy >= 0) & (iy < NY) &
                (iz >= 0) & (iz < NZ))
        batch_ix = bn // N                                            # static Python int
        vox = ((batch_ix * NZ + iz) * NX + ix) * NY + iy
        vox_blocks.append(jnp.where(kept, vox, -1))                   # -1 = dropped point

    feats = jnp.concatenate(warp_blocks, axis=1)                      # (C_OUT, NPRIME)
    feats_ref[...] = feats

    # ---- stage 3: scatter-mean BEV pool as ONE concatenated-K matmul ----
    vox_full = jnp.concatenate(vox_blocks, axis=1)                    # (1, NPRIME) i32
    vrange = jax.lax.broadcasted_iota(jnp.int32, (NVOX, NPRIME), 0)   # (NVOX, NPRIME)
    mask = (vrange == vox_full).astype(jnp.float32)                   # -1 never matches

    # Count rows fused into the same matmul: 8 identical ones-rows keep the sublane
    # concat 8-aligned (row 16 of the result is the per-voxel count).
    ones_blk = jnp.ones((8, NPRIME), jnp.float32)
    feats_ext = jnp.concatenate([feats, ones_blk], axis=0)            # (C_OUT+8, NPRIME)
    pooled = jax.lax.dot_general(
        feats_ext, mask, dimension_numbers=(((1,), (1,)), ((), ())),
        preferred_element_type=jnp.float32)                           # (C_OUT+8, NVOX)
    acc = pooled[:C_OUT, :]
    cnt = pooled[C_OUT:C_OUT + 1, :]
    bev_ref[...] = acc / jnp.maximum(cnt, 1.0)                        # mean_pool=True


_COST = pl.CostEstimate(
    flops=(2 * (BN * C_IN) * HW * DHW            # S^T warp
           + BN * 2 * C_OUT * C_IN * DHW         # per-camera 1x1 conv
           + 2 * (C_OUT + 8) * NPRIME * NVOX),   # fused pool + count matmul
    transcendentals=0,
    bytes_accessed=4 * ((BN * C_IN) * HW + HW * DHW + C_OUT * C_IN + C_OUT + DHW
                        + BN * 3 * DHW + C_OUT * NPRIME + C_OUT * NVOX),
)


def fused_lss_pallas(x_t, geom_rows, params):
    return pl.pallas_call(
        fused_lss_kernel,
        out_shape=(jax.ShapeDtypeStruct((C_OUT, NPRIME), jnp.float32),
                   jax.ShapeDtypeStruct((C_OUT, NVOX), jnp.float32)),
        cost_estimate=_COST,
    )(x_t, params['S_T'], params['w_T'], params['b_col'], params['srow'], geom_rows)


# ----------------------------- JAX glue ---------------------------------------------
def get_geometry_rows(camera2lidar, frustum_t):
    # geom[bn, i, p] = sum_j R[bn,i,j] * frustum[j,p] + t[bn,i]   (explicit elementwise
    # formulation -> one fused XLA producer, deterministic numerics in both paths).
    rots = camera2lidar[..., :3, :3].reshape(BN, 3, 3)
    trans = camera2lidar[..., :3, 3].reshape(BN, 3, 1)
    f = frustum_t                                                    # (3, DHW)
    geom = (rots[:, :, 0:1] * f[0:1, :][None, :, :]
            + rots[:, :, 1:2] * f[1:2, :][None, :, :]
            + rots[:, :, 2:3] * f[2:3, :][None, :, :]
            + trans)                                                 # (BN, 3, DHW)
    return geom.reshape(BN * 3, DHW)


def collapse_z(bev_flat):
    # (Nvox, C) -> (B, Z, X, Y, C) -> torch: permute(0,4,1,2,3) then cat(unbind(2),1)
    bev = bev_flat.reshape(B, NZ, NX, NY, C_OUT)
    bev = jnp.transpose(bev, (0, 4, 1, 2, 3))                        # (B, C, Z, X, Y)
    bev = jnp.transpose(bev, (0, 2, 1, 3, 4)).reshape(B, NZ * C_OUT, NX, NY)
    return bev


def fisheye_lss_forward(img_feat, camera2lidar, params):
    x_t = img_feat.reshape(BN * C_IN, HW)                            # NCHW -> lane-dense
    geom_rows = get_geometry_rows(camera2lidar, params['frustum_T'])
    feats_lane, bev_t = fused_lss_pallas(x_t, geom_rows, params)
    bev = collapse_z(jnp.transpose(bev_t, (1, 0)))
    # TODO(synk): channels-last permute kept only for PyTorch-layout parity; consumers
    # should use feats_lane (C_OUT, BN*DHW) directly to skip this HBM pass (v5e feedback).
    feats = jnp.transpose(feats_lane.reshape(C_OUT, B, N, D_BINS, FH, FW),
                          (1, 2, 3, 4, 5, 0))                        # (B,N,D,fH,fW,C)
    return bev, feats                                                # downsample=1 -> Identity


# ----------------------------- pure-JAX reference (sanity check) -------------------
def voxelize_rows(geom_rows):
    g = geom_rows.reshape(BN, 3, DHW)
    ix = ((g[:, 0, :] - LOW[0]) * INV_DX[0]).astype(jnp.int32)
    iy = ((g[:, 1, :] - LOW[1]) * INV_DX[1]).astype(jnp.int32)
    iz = ((g[:, 2, :] - LOW[2]) * INV_DX[2]).astype(jnp.int32)
    kept = (ix >= 0) & (ix < NX) & (iy >= 0) & (iy < NY) & (iz >= 0) & (iz < NZ)
    batch_ix = (jnp.arange(BN, dtype=jnp.int32) // N)[:, None]
    vox = ((batch_ix * NZ + iz) * NX + ix) * NY + iy
    return vox.reshape(-1), kept.reshape(-1)


def reference_forward(img_feat, camera2lidar, params):
    geom_rows = get_geometry_rows(camera2lidar, params['frustum_T'])
    x = jnp.transpose(img_feat.reshape(BN, C_IN, HW), (0, 2, 1))     # (BN, HW, C_IN)
    proj = jnp.einsum('bqc,co->bqo', x, params['w']) + params['b']   # (BN, HW, C_OUT)
    warped = jnp.einsum('pq,bqo->bpo', params['S'], proj)            # (BN, DHW, C_OUT)
    feats = warped.reshape(B, N, D_BINS, FH, FW, C_OUT)
    vox, kept = voxelize_rows(geom_rows)
    pts = feats.reshape(-1, C_OUT)
    vox_safe = jnp.where(kept, vox, 0)
    ssum = jnp.zeros((NVOX, C_OUT), jnp.float32).at[vox_safe].add(pts * kept[:, None])
    cnt = jnp.zeros((NVOX, 1), jnp.float32).at[vox_safe].add(kept[:, None].astype(jnp.float32))
    bev = ssum / jnp.maximum(cnt, 1.0)
    return collapse_z(bev), feats


# ----------------------------- params (all constant prep hoisted here) --------------
def build_params(key):
    k_w, k_b = jax.random.split(key)
    w = (jax.random.normal(k_w, (C_IN, C_OUT), jnp.float32) / np.sqrt(C_IN)).astype(jnp.float32)
    b = (0.01 * jax.random.normal(k_b, (1, C_OUT), jnp.float32)).astype(jnp.float32)
    S_np = build_interp_matrix(get_sphere_grid())                    # (DHW, HW)
    srow_np = S_np.sum(axis=1).reshape(1, DHW).astype(np.float32)
    frustum_t_np = np.ascontiguousarray(FRUSTUM.reshape(DHW, 3).T)   # (3, DHW)
    return {
        # kernel inputs (lane-dense, precomputed once)
        'S_T': jnp.asarray(np.ascontiguousarray(S_np.T)),            # (HW, DHW)
        'srow': jnp.asarray(srow_np),                                # (1, DHW)
        'w_T': w.T,                                                  # (C_OUT, C_IN)
        'b_col': b.reshape(C_OUT, 1),                                # (C_OUT, 1)
        'frustum_T': jnp.asarray(frustum_t_np),                      # (3, DHW)
        # reference-only
        'S': jnp.asarray(S_np),
        'w': w,
        'b': b,
    }


# ----------------------------- main -----------------------------------------------
if __name__ == "__main__":
    key = jax.random.PRNGKey(0)
    k_img, k_rot, k_trans, k_params = jax.random.split(key, 4)

    img_feat = jax.random.normal(k_img, (B, N, C_IN, FH, FW), jnp.float32)

    rots = jnp.eye(3, dtype=jnp.float32)[None, None] + \
        0.1 * jax.random.normal(k_rot, (B, N, 3, 3), jnp.float32)
    trans = 0.5 * jax.random.normal(k_trans, (B, N, 3), jnp.float32)
    camera2lidar = (jnp.zeros((B, N, 4, 4), jnp.float32)
                    .at[..., :3, :3].set(rots)
                    .at[..., :3, 3].set(trans)
                    .at[..., 3, 3].set(1.0))

    params = build_params(k_params)

    bev_feat, cam_feat = jax.jit(fisheye_lss_forward)(img_feat, camera2lidar, params)
    jax.block_until_ready((bev_feat, cam_feat))

    bev_ref, cam_ref = jax.jit(reference_forward)(img_feat, camera2lidar, params)
    np.testing.assert_allclose(np.asarray(cam_feat), np.asarray(cam_ref), rtol=1e-3, atol=1e-3)
    np.testing.assert_allclose(np.asarray(bev_feat), np.asarray(bev_ref), rtol=1e-3, atol=1e-3)

    assert bev_feat.shape == (B, NZ * C_OUT, NX, NY)
    assert cam_feat.shape == (B, N, D_BINS, FH, FW, C_OUT)
    print("KERNEL_OK")
</pallas_src>

<mosaic_0001>
module attributes {stable_mosaic.version = 11 : i64} {
  func.func @fused_lss_kernel(%arg0: memref<32x128xf32, #tpu.memory_space<vmem>>, %arg1: memref<128x512xf32, #tpu.memory_space<vmem>>, %arg2: memref<16x8xf32, #tpu.memory_space<vmem>>, %arg3: memref<16x1xf32, #tpu.memory_space<vmem>>, %arg4: memref<1x512xf32, #tpu.memory_space<vmem>>, %arg5: memref<12x512xf32, #tpu.memory_space<vmem>>, %arg6: memref<16x2048xf32, #tpu.memory_space<vmem>>, %arg7: memref<16x128xf32, #tpu.memory_space<vmem>>) attributes {dimension_semantics = [], scalar_prefetch = 0 : i64, scratch_operands = 0 : i64, tpu.core_type = #tpu.core_type<tc>} {
    %c0 = arith.constant 0 : index
    %c0_0 = arith.constant 0 : index
    %0 = vector.load %arg0[%c0, %c0_0] : memref<32x128xf32, #tpu.memory_space<vmem>>, vector<32x128xf32>
    %c0_1 = arith.constant 0 : index
    %c0_2 = arith.constant 0 : index
    %1 = vector.load %arg1[%c0_1, %c0_2] : memref<128x512xf32, #tpu.memory_space<vmem>>, vector<128x512xf32>
    %cst = arith.constant dense<0.000000e+00> : vector<32x512xf32>
    %2 = tpu.matmul %0, %1, %cst {dimension_numbers = #tpu.dot_dimension_numbers<[1], [0], [0], [1], [0, 0, 1, 1], [], []>} : vector<32x128xf32>, vector<128x512xf32>, vector<32x512xf32> -> vector<32x512xf32>
    %c0_3 = arith.constant 0 : index
    %c0_4 = arith.constant 0 : index
    %3 = vector.load %arg3[%c0_3, %c0_4] : memref<16x1xf32, #tpu.memory_space<vmem>>, vector<16x1xf32>
    %c0_5 = arith.constant 0 : index
    %c0_6 = arith.constant 0 : index
    %4 = vector.load %arg4[%c0_5, %c0_6] : memref<1x512xf32, #tpu.memory_space<vmem>>, vector<1x512xf32>
    %5 = vector.broadcast %3 : vector<16x1xf32> to vector<16x512xf32>
    %6 = vector.broadcast %4 : vector<1x512xf32> to vector<16x512xf32>
    %7 = arith.mulf %5, %6 : vector<16x512xf32>
    %8 = vector.extract_strided_slice %2 {offsets = [0, 0], sizes = [8, 512], strides = [1, 1]} : vector<32x512xf32> to vector<8x512xf32>
    %c0_7 = arith.constant 0 : index
    %c0_8 = arith.constant 0 : index
    %9 = vector.load %arg2[%c0_7, %c0_8] : memref<16x8xf32, #tpu.memory_space<vmem>>, vector<16x8xf32>
    %cst_9 = arith.constant dense<0.000000e+00> : vector<16x512xf32>
    %10 = tpu.matmul %9, %8, %cst_9 {dimension_numbers = #tpu.dot_dimension_numbers<[1], [0], [0], [1], [0, 0, 1, 1], [], []>} : vector<16x8xf32>, vector<8x512xf32>, vector<16x512xf32> -> vector<16x512xf32>
    %11 = arith.addf %10, %7 : vector<16x512xf32>
    %c0_10 = arith.constant 0 : index
    %c0_11 = arith.constant 0 : index
    %12 = vector.load %arg5[%c0_10, %c0_11] : memref<12x512xf32, #tpu.memory_space<vmem>>, vector<1x512xf32>
    %c1 = arith.constant 1 : index
    %c0_12 = arith.constant 0 : index
    %13 = vector.load %arg5[%c1, %c0_12] : memref<12x512xf32, #tpu.memory_space<vmem>>, vector<1x512xf32>
    %c2 = arith.constant 2 : index
    %c0_13 = arith.constant 0 : index
    %14 = vector.load %arg5[%c2, %c0_13] : memref<12x512xf32, #tpu.memory_space<vmem>>, vector<1x512xf32>
    %cst_14 = arith.constant -8.000000e+00 : f32
    %15 = vector.broadcast %cst_14 : f32 to vector<1x512xf32>
    %16 = arith.subf %12, %15 : vector<1x512xf32>
    %cst_15 = arith.constant 5.000000e-01 : f32
    %17 = vector.broadcast %cst_15 : f32 to vector<1x512xf32>
    %18 = arith.mulf %16, %17 : vector<1x512xf32>
    %19 = arith.fptosi %18 : vector<1x512xf32> to vector<1x512xi32>
    %cst_16 = arith.constant -8.000000e+00 : f32
    %20 = vector.broadcast %cst_16 : f32 to vector<1x512xf32>
    %21 = arith.subf %13, %20 : vector<1x512xf32>
    %cst_17 = arith.constant 5.000000e-01 : f32
    %22 = vector.broadcast %cst_17 : f32 to vector<1x512xf32>
    %23 = arith.mulf %21, %22 : vector<1x512xf32>
    %24 = arith.fptosi %23 : vector<1x512xf32> to vector<1x512xi32>
    %cst_18 = arith.constant -4.000000e+00 : f32
    %25 = vector.broadcast %cst_18 : f32 to vector<1x512xf32>
    %26 = arith.subf %14, %25 : vector<1x512xf32>
    %cst_19 = arith.constant 1.250000e-01 : f32
    %27 = vector.broadcast %cst_19 : f32 to vector<1x512xf32>
    %28 = arith.mulf %26, %27 : vector<1x512xf32>
    %29 = arith.fptosi %28 : vector<1x512xf32> to vector<1x512xi32>
    %c0_i32 = arith.constant 0 : i32
    %30 = vector.broadcast %c0_i32 : i32 to vector<1x512xi32>
    %31 = arith.cmpi sge, %19, %30 : vector<1x512xi32>
    %c8_i32 = arith.constant 8 : i32
    %32 = vector.broadcast %c8_i32 : i32 to vector<1x512xi32>
    %33 = arith.cmpi slt, %19, %32 : vector<1x512xi32>
    %34 = arith.andi %31, %33 : vector<1x512xi1>
    %c0_i32_20 = arith.constant 0 : i32
    %35 = vector.broadcast %c0_i32_20 : i32 to vector<1x512xi32>
    %36 = arith.cmpi sge, %24, %35 : vector<1x512xi32>
    %37 = arith.andi %34, %36 : vector<1x512xi1>
    %c8_i32_21 = arith.constant 8 : i32
    %38 = vector.broadcast %c8_i32_21 : i32 to vector<1x512xi32>
    %39 = arith.cmpi slt, %24, %38 : vector<1x512xi32>
    %40 = arith.andi %37, %39 : vector<1x512xi1>
    %c0_i32_22 = arith.constant 0 : i32
    %41 = vector.broadcast %c0_i32_22 : i32 to vector<1x512xi32>
    %42 = arith.cmpi sge, %29, %41 : vector<1x512xi32>
    %43 = arith.andi %40, %42 : vector<1x512xi1>
    %c1_i32 = arith.constant 1 : i32
    %44 = vector.broadcast %c1_i32 : i32 to vector<1x512xi32>
    %45 = arith.cmpi slt, %29, %44 : vector<1x512xi32>
    %46 = arith.andi %43, %45 : vector<1x512xi1>
    %c0_i32_23 = arith.constant 0 : i32
    %47 = vector.broadcast %c0_i32_23 : i32 to vector<1x512xi32>
    %48 = arith.addi %47, %29 : vector<1x512xi32>
    %c8_i32_24 = arith.constant 8 : i32
    %49 = vector.broadcast %c8_i32_24 : i32 to vector<1x512xi32>
    %50 = arith.muli %48, %49 : vector<1x512xi32>
    %51 = arith.addi %50, %19 : vector<1x512xi32>
    %c8_i32_25 = arith.constant 8 : i32
    %52 = vector.broadcast %c8_i32_25 : i32 to vector<1x512xi32>
    %53 = arith.muli %51, %52 : vector<1x512xi32>
    %54 = arith.addi %53, %24 : vector<1x512xi32>
    %c-1_i32 = arith.constant -1 : i32
    %55 = vector.broadcast %c-1_i32 : i32 to vector<1x512xi32>
    %56 = arith.select %46, %54, %55 : vector<1x512xi1>, vector<1x512xi32>
    %57 = vector.extract_strided_slice %2 {offsets = [8, 0], sizes = [8, 512], strides = [1, 1]} : vector<32x512xf32> to vector<8x512xf32>
    %c0_26 = arith.constant 0 : index
    %c0_27 = arith.constant 0 : index
    %58 = vector.load %arg2[%c0_26, %c0_27] : memref<16x8xf32, #tpu.memory_space<vmem>>, vector<16x8xf32>
    %cst_28 = arith.constant dense<0.000000e+00> : vector<16x512xf32>
    %59 = tpu.matmul %58, %57, %cst_28 {dimension_numbers = #tpu.dot_dimension_numbers<[1], [0], [0], [1], [0, 0, 1, 1], [], []>} : vector<16x8xf32>, vector<8x512xf32>, vector<16x512xf32> -> vector<16x512xf32>
    %60 = arith.addf %59, %7 : vector<16x512xf32>
    %c3 = arith.constant 3 : index
    %c0_29 = arith.constant 0 : index
    %61 = vector.load %arg5[%c3, %c0_29] : memref<12x512xf32, #tpu.memory_space<vmem>>, vector<1x512xf32>
    %c4 = arith.constant 4 : index
    %c0_30 = arith.constant 0 : index
    %62 = vector.load %arg5[%c4, %c0_30] : memref<12x512xf32, #tpu.memory_space<vmem>>, vector<1x512xf32>
    %c5 = arith.constant 5 : index
    %c0_31 = arith.constant 0 : index
    %63 = vector.load %arg5[%c5, %c0_31] : memref<12x512xf32, #tpu.memory_space<vmem>>, vector<1x512xf32>
    %cst_32 = arith.constant -8.000000e+00 : f32
    %64 = vector.broadcast %cst_32 : f32 to vector<1x512xf32>
    %65 = arith.subf %61, %64 : vector<1x512xf32>
    %cst_33 = arith.constant 5.000000e-01 : f32
    %66 = vector.broadcast %cst_33 : f32 to vector<1x512xf32>
    %67 = arith.mulf %65, %66 : vector<1x512xf32>
    %68 = arith.fptosi %67 : vector<1x512xf32> to vector<1x512xi32>
    %cst_34 = arith.constant -8.000000e+00 : f32
    %69 = vector.broadcast %cst_34 : f32 to vector<1x512xf32>
    %70 = arith.subf %62, %69 : vector<1x512xf32>
    %cst_35 = arith.constant 5.000000e-01 : f32
    %71 = vector.broadcast %cst_35 : f32 to vector<1x512xf32>
    %72 = arith.mulf %70, %71 : vector<1x512xf32>
    %73 = arith.fptosi %72 : vector<1x512xf32> to vector<1x512xi32>
    %cst_36 = arith.constant -4.000000e+00 : f32
    %74 = vector.broadcast %cst_36 : f32 to vector<1x512xf32>
    %75 = arith.subf %63, %74 : vector<1x512xf32>
    %cst_37 = arith.constant 1.250000e-01 : f32
    %76 = vector.broadcast %cst_37 : f32 to vector<1x512xf32>
    %77 = arith.mulf %75, %76 : vector<1x512xf32>
    %78 = arith.fptosi %77 : vector<1x512xf32> to vector<1x512xi32>
    %c0_i32_38 = arith.constant 0 : i32
    %79 = vector.broadcast %c0_i32_38 : i32 to vector<1x512xi32>
    %80 = arith.cmpi sge, %68, %79 : vector<1x512xi32>
    %c8_i32_39 = arith.constant 8 : i32
    %81 = vector.broadcast %c8_i32_39 : i32 to vector<1x512xi32>
    %82 = arith.cmpi slt, %68, %81 : vector<1x512xi32>
    %83 = arith.andi %80, %82 : vector<1x512xi1>
    %c0_i32_40 = arith.constant 0 : i32
    %84 = vector.broadcast %c0_i32_40 : i32 to vector<1x512xi32>
    %85 = arith.cmpi sge, %73, %84 : vector<1x512xi32>
    %86 = arith.andi %83, %85 : vector<1x512xi1>
    %c8_i32_41 = arith.constant 8 : i32
    %87 = vector.broadcast %c8_i32_41 : i32 to vector<1x512xi32>
    %88 = arith.cmpi slt, %73, %87 : vector<1x512xi32>
    %89 = arith.andi %86, %88 : vector<1x512xi1>
    %c0_i32_42 = arith.constant 0 : i32
    %90 = vector.broadcast %c0_i32_42 : i32 to vector<1x512xi32>
    %91 = arith.cmpi sge, %78, %90 : vector<1x512xi32>
    %92 = arith.andi %89, %91 : vector<1x512xi1>
    %c1_i32_43 = arith.constant 1 : i32
    %93 = vector.broadcast %c1_i32_43 : i32 to vector<1x512xi32>
    %94 = arith.cmpi slt, %78, %93 : vector<1x512xi32>
    %95 = arith.andi %92, %94 : vector<1x512xi1>
    %c0_i32_44 = arith.constant 0 : i32
    %96 = vector.broadcast %c0_i32_44 : i32 to vector<1x512xi32>
    %97 = arith.addi %96, %78 : vector<1x512xi32>
    %c8_i32_45 = arith.constant 8 : i32
    %98 = vector.broadcast %c8_i32_45 : i32 to vector<1x512xi32>
    %99 = arith.muli %97, %98 : vector<1x512xi32>
    %100 = arith.addi %99, %68 : vector<1x512xi32>
    %c8_i32_46 = arith.constant 8 : i32
    %101 = vector.broadcast %c8_i32_46 : i32 to vector<1x512xi32>
    %102 = arith.muli %100, %101 : vector<1x512xi32>
    %103 = arith.addi %102, %73 : vector<1x512xi32>
    %c-1_i32_47 = arith.constant -1 : i32
    %104 = vector.broadcast %c-1_i32_47 : i32 to vector<1x512xi32>
    %105 = arith.select %95, %103, %104 : vector<1x512xi1>, vector<1x512xi32>
    %106 = vector.extract_strided_slice %2 {offsets = [16, 0], sizes = [8, 512], strides = [1, 1]} : vector<32x512xf32> to vector<8x512xf32>
    %c0_48 = arith.constant 0 : index
    %c0_49 = arith.constant 0 : index
    %107 = vector.load %arg2[%c0_48, %c0_49] : memref<16x8xf32, #tpu.memory_space<vmem>>, vector<16x8xf32>
    %cst_50 = arith.constant dense<0.000000e+00> : vector<16x512xf32>
    %108 = tpu.matmul %107, %106, %cst_50 {dimension_numbers = #tpu.dot_dimension_numbers<[1], [0], [0], [1], [0, 0, 1, 1], [], []>} : vector<16x8xf32>, vector<8x512xf32>, vector<16x512xf32> -> vector<16x512xf32>
    %109 = arith.addf %108, %7 : vector<16x512xf32>
    %c6 = arith.constant 6 : index
    %c0_51 = arith.constant 0 : index
    %110 = vector.load %arg5[%c6, %c0_51] : memref<12x512xf32, #tpu.memory_space<vmem>>, vector<1x512xf32>
    %c7 = arith.constant 7 : index
    %c0_52 = arith.constant 0 : index
    %111 = vector.load %arg5[%c7, %c0_52] : memref<12x512xf32, #tpu.memory_space<vmem>>, vector<1x512xf32>
    %c8 = arith.constant 8 : index
    %c0_53 = arith.constant 0 : index
    %112 = vector.load %arg5[%c8, %c0_53] : memref<12x512xf32, #tpu.memory_space<vmem>>, vector<1x512xf32>
    %cst_54 = arith.constant -8.000000e+00 : f32
    %113 = vector.broadcast %cst_54 : f32 to vector<1x512xf32>
    %114 = arith.subf %110, %113 : vector<1x512xf32>
    %cst_55 = arith.constant 5.000000e-01 : f32
    %115 = vector.broadcast %cst_55 : f32 to vector<1x512xf32>
    %116 = arith.mulf %114, %115 : vector<1x512xf32>
    %117 = arith.fptosi %116 : vector<1x512xf32> to vector<1x512xi32>
    %cst_56 = arith.constant -8.000000e+00 : f32
    %118 = vector.broadcast %cst_56 : f32 to vector<1x512xf32>
    %119 = arith.subf %111, %118 : vector<1x512xf32>
    %cst_57 = arith.constant 5.000000e-01 : f32
    %120 = vector.broadcast %cst_57 : f32 to vector<1x512xf32>
    %121 = arith.mulf %119, %120 : vector<1x512xf32>
    %122 = arith.fptosi %121 : vector<1x512xf32> to vector<1x512xi32>
    %cst_58 = arith.constant -4.000000e+00 : f32
    %123 = vector.broadcast %cst_58 : f32 to vector<1x512xf32>
    %124 = arith.subf %112, %123 : vector<1x512xf32>
    %cst_59 = arith.constant 1.250000e-01 : f32
    %125 = vector.broadcast %cst_59 : f32 to vector<1x512xf32>
    %126 = arith.mulf %124, %125 : vector<1x512xf32>
    %127 = arith.fptosi %126 : vector<1x512xf32> to vector<1x512xi32>
    %c0_i32_60 = arith.constant 0 : i32
    %128 = vector.broadcast %c0_i32_60 : i32 to vector<1x512xi32>
    %129 = arith.cmpi sge, %117, %128 : vector<1x512xi32>
    %c8_i32_61 = arith.constant 8 : i32
    %130 = vector.broadcast %c8_i32_61 : i32 to vector<1x512xi32>
    %131 = arith.cmpi slt, %117, %130 : vector<1x512xi32>
    %132 = arith.andi %129, %131 : vector<1x512xi1>
    %c0_i32_62 = arith.constant 0 : i32
    %133 = vector.broadcast %c0_i32_62 : i32 to vector<1x512xi32>
    %134 = arith.cmpi sge, %122, %133 : vector<1x512xi32>
    %135 = arith.andi %132, %134 : vector<1x512xi1>
    %c8_i32_63 = arith.constant 8 : i32
    %136 = vector.broadcast %c8_i32_63 : i32 to vector<1x512xi32>
    %137 = arith.cmpi slt, %122, %136 : vector<1x512xi32>
    %138 = arith.andi %135, %137 : vector<1x512xi1>
    %c0_i32_64 = arith.constant 0 : i32
    %139 = vector.broadcast %c0_i32_64 : i32 to vector<1x512xi32>
    %140 = arith.cmpi sge, %127, %139 : vector<1x512xi32>
    %141 = arith.andi %138, %140 : vector<1x512xi1>
    %c1_i32_65 = arith.constant 1 : i32
    %142 = vector.broadcast %c1_i32_65 : i32 to vector<1x512xi32>
    %143 = arith.cmpi slt, %127, %142 : vector<1x512xi32>
    %144 = arith.andi %141, %143 : vector<1x512xi1>
    %c1_i32_66 = arith.constant 1 : i32
    %145 = vector.broadcast %c1_i32_66 : i32 to vector<1x512xi32>
    %146 = arith.addi %145, %127 : vector<1x512xi32>
    %c8_i32_67 = arith.constant 8 : i32
    %147 = vector.broadcast %c8_i32_67 : i32 to vector<1x512xi32>
    %148 = arith.muli %146, %147 : vector<1x512xi32>
    %149 = arith.addi %148, %117 : vector<1x512xi32>
    %c8_i32_68 = arith.constant 8 : i32
    %150 = vector.broadcast %c8_i32_68 : i32 to vector<1x512xi32>
    %151 = arith.muli %149, %150 : vector<1x512xi32>
    %152 = arith.addi %151, %122 : vector<1x512xi32>
    %c-1_i32_69 = arith.constant -1 : i32
    %153 = vector.broadcast %c-1_i32_69 : i32 to vector<1x512xi32>
    %154 = arith.select %144, %152, %153 : vector<1x512xi1>, vector<1x512xi32>
    %155 = vector.extract_strided_slice %2 {offsets = [24, 0], sizes = [8, 512], strides = [1, 1]} : vector<32x512xf32> to vector<8x512xf32>
    %c0_70 = arith.constant 0 : index
    %c0_71 = arith.constant 0 : index
    %156 = vector.load %arg2[%c0_70, %c0_71] : memref<16x8xf32, #tpu.memory_space<vmem>>, vector<16x8xf32>
    %cst_72 = arith.constant dense<0.000000e+00> : vector<16x512xf32>
    %157 = tpu.matmul %156, %155, %cst_72 {dimension_numbers = #tpu.dot_dimension_numbers<[1], [0], [0], [1], [0, 0, 1, 1], [], []>} : vector<16x8xf32>, vector<8x512xf32>, vector<16x512xf32> -> vector<16x512xf32>
    %158 = arith.addf %157, %7 : vector<16x512xf32>
    %c9 = arith.constant 9 : index
    %c0_73 = arith.constant 0 : index
    %159 = vector.load %arg5[%c9, %c0_73] : memref<12x512xf32, #tpu.memory_space<vmem>>, vector<1x512xf32>
    %c10 = arith.constant 10 : index
    %c0_74 = arith.constant 0 : index
    %160 = vector.load %arg5[%c10, %c0_74] : memref<12x512xf32, #tpu.memory_space<vmem>>, vector<1x512xf32>
    %c11 = arith.constant 11 : index
    %c0_75 = arith.constant 0 : index
    %161 = vector.load %arg5[%c11, %c0_75] : memref<12x512xf32, #tpu.memory_space<vmem>>, vector<1x512xf32>
    %cst_76 = arith.constant -8.000000e+00 : f32
    %162 = vector.broadcast %cst_76 : f32 to vector<1x512xf32>
    %163 = arith.subf %159, %162 : vector<1x512xf32>
    %cst_77 = arith.constant 5.000000e-01 : f32
    %164 = vector.broadcast %cst_77 : f32 to vector<1x512xf32>
    %165 = arith.mulf %163, %164 : vector<1x512xf32>
    %166 = arith.fptosi %165 : vector<1x512xf32> to vector<1x512xi32>
    %cst_78 = arith.constant -8.000000e+00 : f32
    %167 = vector.broadcast %cst_78 : f32 to vector<1x512xf32>
    %168 = arith.subf %160, %167 : vector<1x512xf32>
    %cst_79 = arith.constant 5.000000e-01 : f32
    %169 = vector.broadcast %cst_79 : f32 to vector<1x512xf32>
    %170 = arith.mulf %168, %169 : vector<1x512xf32>
    %171 = arith.fptosi %170 : vector<1x512xf32> to vector<1x512xi32>
    %cst_80 = arith.constant -4.000000e+00 : f32
    %172 = vector.broadcast %cst_80 : f32 to vector<1x512xf32>
    %173 = arith.subf %161, %172 : vector<1x512xf32>
    %cst_81 = arith.constant 1.250000e-01 : f32
    %174 = vector.broadcast %cst_81 : f32 to vector<1x512xf32>
    %175 = arith.mulf %173, %174 : vector<1x512xf32>
    %176 = arith.fptosi %175 : vector<1x512xf32> to vector<1x512xi32>
    %c0_i32_82 = arith.constant 0 : i32
    %177 = vector.broadcast %c0_i32_82 : i32 to vector<1x512xi32>
    %178 = arith.cmpi sge, %166, %177 : vector<1x512xi32>
    %c8_i32_83 = arith.constant 8 : i32
    %179 = vector.broadcast %c8_i32_83 : i32 to vector<1x512xi32>
    %180 = arith.cmpi slt, %166, %179 : vector<1x512xi32>
    %181 = arith.andi %178, %180 : vector<1x512xi1>
    %c0_i32_84 = arith.constant 0 : i32
    %182 = vector.broadcast %c0_i32_84 : i32 to vector<1x512xi32>
    %183 = arith.cmpi sge, %171, %182 : vector<1x512xi32>
    %184 = arith.andi %181, %183 : vector<1x512xi1>
    %c8_i32_85 = arith.constant 8 : i32
    %185 = vector.broadcast %c8_i32_85 : i32 to vector<1x512xi32>
    %186 = arith.cmpi slt, %171, %185 : vector<1x512xi32>
    %187 = arith.andi %184, %186 : vector<1x512xi1>
    %c0_i32_86 = arith.constant 0 : i32
    %188 = vector.broadcast %c0_i32_86 : i32 to vector<1x512xi32>
    %189 = arith.cmpi sge, %176, %188 : vector<1x512xi32>
    %190 = arith.andi %187, %189 : vector<1x512xi1>
    %c1_i32_87 = arith.constant 1 : i32
    %191 = vector.broadcast %c1_i32_87 : i32 to vector<1x512xi32>
    %192 = arith.cmpi slt, %176, %191 : vector<1x512xi32>
    %193 = arith.andi %190, %192 : vector<1x512xi1>
    %c1_i32_88 = arith.constant 1 : i32
    %194 = vector.broadcast %c1_i32_88 : i32 to vector<1x512xi32>
    %195 = arith.addi %194, %176 : vector<1x512xi32>
    %c8_i32_89 = arith.constant 8 : i32
    %196 = vector.broadcast %c8_i32_89 : i32 to vector<1x512xi32>
    %197 = arith.muli %195, %196 : vector<1x512xi32>
    %198 = arith.addi %197, %166 : vector<1x512xi32>
    %c8_i32_90 = arith.constant 8 : i32
    %199 = vector.broadcast %c8_i32_90 : i32 to vector<1x512xi32>
    %200 = arith.muli %198, %199 : vector<1x512xi32>
    %201 = arith.addi %200, %171 : vector<1x512xi32>
    %c-1_i32_91 = arith.constant -1 : i32
    %202 = vector.broadcast %c-1_i32_91 : i32 to vector<1x512xi32>
    %203 = arith.select %193, %201, %202 : vector<1x512xi1>, vector<1x512xi32>
    %204 = tpu.concatenate %11, %60, %109, %158 in 1 : vector<16x512xf32>, vector<16x512xf32>, vector<16x512xf32>, vector<16x512xf32> -> vector<16x2048xf32>
    %c0_92 = arith.constant 0 : index
    %c0_93 = arith.constant 0 : index
    %205 = vector.load %arg6[%c0_92, %c0_93] : memref<16x2048xf32, #tpu.memory_space<vmem>>, vector<16x2048xf32>
    tpu.vector_store %arg6[%c0_92, %c0_93], %204 {strides = array<i32>} : memref<16x2048xf32, #tpu.memory_space<vmem>>, vector<16x2048xf32>,
    %206 = tpu.concatenate %56, %105, %154, %203 in 1 : vector<1x512xi32>, vector<1x512xi32>, vector<1x512xi32>, vector<1x512xi32> -> vector<1x2048xi32>
    %207 = tpu.iota {dimensions = array<i32: 0>} : vector<128x2048xi32>
    %208 = vector.broadcast %206 : vector<1x2048xi32> to vector<128x2048xi32>
    %209 = arith.cmpi eq, %207, %208 : vector<128x2048xi32>
    %210 = arith.extui %209 : vector<128x2048xi1> to vector<128x2048xi32>
    %211 = arith.sitofp %210 : vector<128x2048xi32> to vector<128x2048xf32>
    %cst_94 = arith.constant 1.000000e+00 : f32
    %212 = vector.broadcast %cst_94 : f32 to vector<8x2048xf32>
    %213 = tpu.concatenate %204, %212 in 0 : vector<16x2048xf32>, vector<8x2048xf32> -> vector<24x2048xf32>
    %cst_95 = arith.constant dense<0.000000e+00> : vector<24x128xf32>
    %214 = tpu.matmul %213, %211, %cst_95 {dimension_numbers = #tpu.dot_dimension_numbers<[1], [1], [0], [0], [0, 0, 1, 0], [], []>} : vector<24x2048xf32>, vector<128x2048xf32>, vector<24x128xf32> -> vector<24x128xf32>
    %215 = vector.extract_strided_slice %214 {offsets = [0, 0], sizes = [16, 128], strides = [1, 1]} : vector<24x128xf32> to vector<16x128xf32>
    %216 = vector.extract_strided_slice %214 {offsets = [16, 0], sizes = [1, 128], strides = [1, 1]} : vector<24x128xf32> to vector<1x128xf32>
    %cst_96 = arith.constant 1.000000e+00 : f32
    %217 = vector.broadcast %cst_96 : f32 to vector<1x128xf32>
    %218 = arith.maximumf %216, %217 : vector<1x128xf32>
    %219 = vector.broadcast %218 : vector<1x128xf32> to vector<16x128xf32>
    %220 = arith.divf %215, %219 : vector<16x128xf32>
    %c0_97 = arith.constant 0 : index
    %c0_98 = arith.constant 0 : index
    %221 = vector.load %arg7[%c0_97, %c0_98] : memref<16x128xf32, #tpu.memory_space<vmem>>, vector<16x128xf32>
    tpu.vector_store %arg7[%c0_97, %c0_98], %220 {strides = array<i32>} : memref<16x128xf32, #tpu.memory_space<vmem>>, vector<16x128xf32>,
    return
  }
}

</mosaic_0001>

<llo_original>
// kernel: fisheye_lss_forward.1
$region0: #{fisheye_lss_forward.1}
  #allocation0 [shape = 'u32[]', space=smem, size = 0x4, offset = 0x4, fixed_abs, tag = 'smem constant byte address 0x4 - core index']
  #allocation1 [shape = 'u32[144,128]{1,0:T(1,128)}', space=vmem, size = 0x12000, scoped, tag = 'internal scratch']
  %s0 = inlined_call_operand.vmem [shape: f32[32,128], index: 0, kind: input, shape index: {}]
  %s1 = inlined_call_operand.vmem [shape: f32[128,512], index: 1, kind: input, shape index: {}]
  %s2 = inlined_call_operand.vmem [shape: f32[16,8], index: 2, kind: input, shape index: {}]
  %s3 = inlined_call_operand.vmem [shape: f32[16,1], index: 3, kind: input, shape index: {}]
  %s4 = inlined_call_operand.vmem [shape: f32[1,512], index: 4, kind: input, shape index: {}]
  %s5 = inlined_call_operand.vmem [shape: f32[12,512], index: 5, kind: input, shape index: {}]
  %s6 = inlined_call_operand.vmem [shape: f32[16,2048], index: 6, kind: output, shape index: {0}]
  %s7 = inlined_call_operand.vmem [shape: f32[16,128], index: 7, kind: output, shape index: {1}]
  %8 = xla_tuple %s6, %s7
  %s9 = sld [smem:[#allocation0]]
  $region42: #{fisheye_lss_forward.1} parent=0
    _
  %s11 = ssub.s32 1, %s9
  %s12 = scalar_select 0, %s11, %s9
  // Predicated region
  $region2: #{fisheye_lss_forward.1} parent=0 // pred_check
    _
  $region3: #{fisheye_lss_forward.1} parent=0 // pred_check_branch
    %14 = sbr.rel (0) target = $region5
  $region4: #{fisheye_lss_forward.1} parent=0 // pred_region
    _
  $region5: #{fisheye_lss_forward.1} parent=0 // pred_fallthru
    _
  // Predicated region
  $region6: #{fisheye_lss_forward.1} parent=0 // pred_check
    _
  $region7: #{fisheye_lss_forward.1} parent=0 // pred_check_branch
    %16 = sbr.rel (0) target = $region9
  $region8: #{fisheye_lss_forward.1} parent=0 // pred_region
    _
  $region9: #{fisheye_lss_forward.1} parent=0 // pred_fallthru
    _
  // Predicated region
  $region10: #{fisheye_lss_forward.1} parent=0 // pred_check
    _
  $region11: #{fisheye_lss_forward.1} parent=0 // pred_check_branch
    %18 = sbr.rel (0) target = $region13
  $region12: #{fisheye_lss_forward.1} parent=0 // pred_region
    _
  $region13: #{fisheye_lss_forward.1} parent=0 // pred_fallthru
    _
  // Predicated region
  $region14: #{fisheye_lss_forward.1} parent=0 // pred_check
    _
  $region15: #{fisheye_lss_forward.1} parent=0 // pred_check_branch
    %20 = sbr.rel (0) target = $region17
  $region16: #{fisheye_lss_forward.1} parent=0 // pred_region
    _
  $region17: #{fisheye_lss_forward.1} parent=0 // pred_fallthru
    _
  // Predicated region
  $region18: #{fisheye_lss_forward.1} parent=0 // pred_check
    _
  $region19: #{fisheye_lss_forward.1} parent=0 // pred_check_branch
    %22 = sbr.rel (0) target = $region21
  $region20: #{fisheye_lss_forward.1} parent=0 // pred_region
    _
  $region21: #{fisheye_lss_forward.1} parent=0 // pred_fallthru
    _
  // Predicated region
  $region22: #{fisheye_lss_forward.1} parent=0 // pred_check
    _
  $region23: #{fisheye_lss_forward.1} parent=0 // pred_check_branch
    %24 = sbr.rel (0) target = $region25
  $region24: #{fisheye_lss_forward.1} parent=0 // pred_region
    _
  $region25: #{fisheye_lss_forward.1} parent=0 // pred_fallthru
    _
  %v25 = vld [vmem:[%s0] sm:$0xff]
  %v26 = vld [vmem:[%s0 + $0x8] sm:$0xff]
  %v27 = vld [vmem:[%s0 + $0x10] sm:$0xff]
  %v28 = vld [vmem:[%s0 + $0x18] sm:$0xff]
  %v29 = vld [vmem:[%s1] sm:$0xff]
  %v30 = vld [vmem:[%s1 + $0x8] sm:$0xff]
  %v31 = vld [vmem:[%s1 + $0x10] sm:$0xff]
  %v32 = vld [vmem:[%s1 + $0x18] sm:$0xff]
  %v33 = vld [vmem:[%s1 + $0x20] sm:$0xff]
  %v34 = vld [vmem:[%s1 + $0x28] sm:$0xff]
  %v35 = vld [vmem:[%s1 + $0x30] sm:$0xff]
  %v36 = vld [vmem:[%s1 + $0x38] sm:$0xff]
  %v37 = vld [vmem:[%s1 + $0x40] sm:$0xff]
  %v38 = vld [vmem:[%s1 + $0x48] sm:$0xff]
  %v39 = vld [vmem:[%s1 + $0x50] sm:$0xff]
  %v40 = vld [vmem:[%s1 + $0x58] sm:$0xff]
  %v41 = vld [vmem:[%s1 + $0x60] sm:$0xff]
  %v42 = vld [vmem:[%s1 + $0x68] sm:$0xff]
  %v43 = vld [vmem:[%s1 + $0x70] sm:$0xff]
  %v44 = vld [vmem:[%s1 + $0x78] sm:$0xff]
  %v45 = vld [vmem:[%s1 + $0x80] sm:$0xff]
  %v46 = vld [vmem:[%s1 + $0x88] sm:$0xff]
  %v47 = vld [vmem:[%s1 + $0x90] sm:$0xff]
  %v48 = vld [vmem:[%s1 + $0x98] sm:$0xff]
  %v49 = vld [vmem:[%s1 + $0xa0] sm:$0xff]
  %v50 = vld [vmem:[%s1 + $0xa8] sm:$0xff]
  %v51 = vld [vmem:[%s1 + $0xb0] sm:$0xff]
  %v52 = vld [vmem:[%s1 + $0xb8] sm:$0xff]
  %v53 = vld [vmem:[%s1 + $0xc0] sm:$0xff]
  %v54 = vld [vmem:[%s1 + $0xc8] sm:$0xff]
  %v55 = vld [vmem:[%s1 + $0xd0] sm:$0xff]
  %v56 = vld [vmem:[%s1 + $0xd8] sm:$0xff]
  %v57 = vld [vmem:[%s1 + $0xe0] sm:$0xff]
  %v58 = vld [vmem:[%s1 + $0xe8] sm:$0xff]
  %v59 = vld [vmem:[%s1 + $0xf0] sm:$0xff]
  %v60 = vld [vmem:[%s1 + $0xf8] sm:$0xff]
  %v61 = vld [vmem:[%s1 + $0x100] sm:$0xff]
  %v62 = vld [vmem:[%s1 + $0x108] sm:$0xff]
  %v63 = vld [vmem:[%s1 + $0x110] sm:$0xff]
  %v64 = vld [vmem:[%s1 + $0x118] sm:$0xff]
  %v65 = vld [vmem:[%s1 + $0x120] sm:$0xff]
  %v66 = vld [vmem:[%s1 + $0x128] sm:$0xff]
  %v67 = vld [vmem:[%s1 + $0x130] sm:$0xff]
  %v68 = vld [vmem:[%s1 + $0x138] sm:$0xff]
  %v69 = vld [vmem:[%s1 + $0x140] sm:$0xff]
  %v70 = vld [vmem:[%s1 + $0x148] sm:$0xff]
  %v71 = vld [vmem:[%s1 + $0x150] sm:$0xff]
  %v72 = vld [vmem:[%s1 + $0x158] sm:$0xff]
  %v73 = vld [vmem:[%s1 + $0x160] sm:$0xff]
  %v74 = vld [vmem:[%s1 + $0x168] sm:$0xff]
  %v75 = vld [vmem:[%s1 + $0x170] sm:$0xff]
  %v76 = vld [vmem:[%s1 + $0x178] sm:$0xff]
  %v77 = vld [vmem:[%s1 + $0x180] sm:$0xff]
  %v78 = vld [vmem:[%s1 + $0x188] sm:$0xff]
  %v79 = vld [vmem:[%s1 + $0x190] sm:$0xff]
  %v80 = vld [vmem:[%s1 + $0x198] sm:$0xff]
  %v81 = vld [vmem:[%s1 + $0x1a0] sm:$0xff]
  %v82 = vld [vmem:[%s1 + $0x1a8] sm:$0xff]
  %v83 = vld [vmem:[%s1 + $0x1b0] sm:$0xff]
  %v84 = vld [vmem:[%s1 + $0x1b8] sm:$0xff]
  %v85 = vld [vmem:[%s1 + $0x1c0] sm:$0xff]
  %v86 = vld [vmem:[%s1 + $0x1c8] sm:$0xff]
  %v87 = vld [vmem:[%s1 + $0x1d0] sm:$0xff]
  %v88 = vld [vmem:[%s1 + $0x1d8] sm:$0xff]
  %v89 = vld [vmem:[%s1 + $0x1e0] sm:$0xff]
  %v90 = vld [vmem:[%s1 + $0x1e8] sm:$0xff]
  %v91 = vld [vmem:[%s1 + $0x1f0] sm:$0xff]
  %v92 = vld [vmem:[%s1 + $0x1f8] sm:$0xff]
  %93 = vmatprep.subr.mxu0 %v30
  %94 = vmatpush1.msra.mxu0 %v29
  %95 = vmatprep.subr.mxu0 %v34
  %96 = vmatpush1.msra.mxu0 %v33
  %97 = vmatprep.subr.mxu0 %v38
  %98 = vmatpush1.msra.mxu0 %v37
  %99 = vmatprep.subr.mxu0 %v42
  %100 = vmatpush1.msra.mxu0 %v41
  %101 = vmatprep.subr.mxu0 %v46
  %102 = vmatpush1.msra.mxu0 %v45
  %103 = vmatprep.subr.mxu0 %v50
  %104 = vmatpush1.msra.mxu0 %v49
  %105 = vmatprep.subr.mxu0 %v54
  %106 = vmatpush1.msra.mxu0 %v53
  %107 = vmatprep.subr.mxu0 %v58
  %108 = vmatpush1.msra.mxu0 %v57
  %109 = vmatprep.subr.mxu0 %v62
  %110 = vmatpush1.msra.mxu0 %v61
  %111 = vmatprep.subr.mxu0 %v66
  %112 = vmatpush1.msra.mxu0 %v65
  %113 = vmatprep.subr.mxu0 %v70
  %114 = vmatpush1.msra.mxu0 %v69
  %115 = vmatprep.subr.mxu0 %v74
  %116 = vmatpush1.msra.mxu0 %v73
  %117 = vmatprep.subr.mxu0 %v78
  %118 = vmatpush1.msra.mxu0 %v77
  %119 = vmatprep.subr.mxu0 %v82
  %120 = vmatpush1.msra.mxu0 %v81
  %121 = vmatprep.subr.mxu0 %v86
  %122 = vmatpush1.msra.mxu0 %v85
  %123 = vmatprep.subr.mxu0 %v90
  %124 = vmatpush1.msra.mxu0 %v89
  %125 = vmatprep.subr.mxu0 0.0
  %126 = vmatpush1.msra.mxu0 0.0
  %127 = vmatprep.subr.mxu0 0.0
  %128 = vmatpush1.msra.mxu0 0.0
  %129 = vmatprep.subr.mxu0 0.0
  %130 = vmatpush1.msra.mxu0 0.0
  %131 = vmatprep.subr.mxu0 0.0
  %132 = vmatpush1.msra.mxu0 0.0
  %133 = vmatprep.subr.mxu0 0.0
  %134 = vmatpush1.msra.mxu0 0.0
  %135 = vmatprep.subr.mxu0 0.0
  %136 = vmatpush1.msra.mxu0 0.0
  %137 = vmatprep.subr.mxu0 0.0
  %138 = vmatpush1.msra.mxu0 0.0
  %139 = vmatprep.subr.mxu0 0.0
  %140 = vmatpush1.msra.mxu0 0.0
  %141 = vmatprep.subr.mxu0 0.0
  %142 = vmatpush1.msra.mxu0 0.0
  %143 = vmatprep.subr.mxu0 0.0
  %144 = vmatpush1.msra.mxu0 0.0
  %145 = vmatprep.subr.mxu0 0.0
  %146 = vmatpush1.msra.mxu0 0.0
  %147 = vmatprep.subr.mxu0 0.0
  %148 = vmatpush1.msra.mxu0 0.0
  %149 = vmatprep.subr.mxu0 0.0
  %150 = vmatpush1.msra.mxu0 0.0
  %151 = vmatprep.subr.mxu0 0.0
  %152 = vmatpush1.msra.mxu0 0.0
  %153 = vmatprep.subr.mxu0 0.0
  %154 = vmatpush1.msra.mxu0 0.0
  %155 = vmatprep.subr.mxu0 0.0
  %156 = vmatpush1.msra.mxu0 0.0
  %157 = vmatprep.mubr.f32.mxu0 0.0
  %158 = vmatmul.mubr.f32.gmra.mrb[0].mxu0 %v25
  %v159 = vpop.f32.mrb[0].mxu0
  %v160 = vadd.f32 0.0, %v159
  %v161 = vpop.f32.mrb[0].mxu0
  %v162 = vadd.f32 0.0, %v161
  %163 = vmatprep.mubr.f32.mxu0 0.0
  %164 = vmatmul.mubr.f32.gmra.mrb[0].mxu0 %v26
  %v165 = vpop.f32.mrb[0].mxu0
  %v166 = vadd.f32 0.0, %v165
  %v167 = vpop.f32.mrb[0].mxu0
  %v168 = vadd.f32 0.0, %v167
  %169 = vmatprep.mubr.f32.mxu0 0.0
  %170 = vmatmul.mubr.f32.gmra.mrb[0].mxu0 %v27
  %v171 = vpop.f32.mrb[0].mxu0
  %v172 = vadd.f32 0.0, %v171
  %v173 = vpop.f32.mrb[0].mxu0
  %v174 = vadd.f32 0.0, %v173
  %175 = vmatprep.mubr.f32.mxu0 0.0
  %176 = vmatmul.mubr.f32.gmra.mrb[0].mxu0 %v28
  %v177 = vpop.f32.mrb[0].mxu0
  %v178 = vadd.f32 0.0, %v177
  %v179 = vpop.f32.mrb[0].mxu0
  %v180 = vadd.f32 0.0, %v179
  %181 = vdwg.mxu0
  %182 = vmatprep.subr.mxu0 %v32
  %183 = vmatpush1.msra.mxu0 %v31
  %184 = vmatprep.subr.mxu0 %v36
  %185 = vmatpush1.msra.mxu0 %v35
  %186 = vmatprep.subr.mxu0 %v40
  %187 = vmatpush1.msra.mxu0 %v39
  %188 = vmatprep.subr.mxu0 %v44
  %189 = vmatpush1.msra.mxu0 %v43
  %190 = vmatprep.subr.mxu0 %v48
  %191 = vmatpush1.msra.mxu0 %v47
  %192 = vmatprep.subr.mxu0 %v52
  %193 = vmatpush1.msra.mxu0 %v51
  %194 = vmatprep.subr.mxu0 %v56
  %195 = vmatpush1.msra.mxu0 %v55
  %196 = vmatprep.subr.mxu0 %v60
  %197 = vmatpush1.msra.mxu0 %v59
  %198 = vmatprep.subr.mxu0 %v64
  %199 = vmatpush1.msra.mxu0 %v63
  %200 = vmatprep.subr.mxu0 %v68
  %201 = vmatpush1.msra.mxu0 %v67
  %202 = vmatprep.subr.mxu0 %v72
  %203 = vmatpush1.msra.mxu0 %v71
  %204 = vmatprep.subr.mxu0 %v76
  %205 = vmatpush1.msra.mxu0 %v75
  %206 = vmatprep.subr.mxu0 %v80
  %207 = vmatpush1.msra.mxu0 %v79
  %208 = vmatprep.subr.mxu0 %v84
  %209 = vmatpush1.msra.mxu0 %v83
  %210 = vmatprep.subr.mxu0 %v88
  %211 = vmatpush1.msra.mxu0 %v87
  %212 = vmatprep.subr.mxu0 %v92
  %213 = vmatpush1.msra.mxu0 %v91
  %214 = vmatprep.subr.mxu0 0.0
  %215 = vmatpush1.msra.mxu0 0.0
  %216 = vmatprep.subr.mxu0 0.0
  %217 = vmatpush1.msra.mxu0 0.0
  %218 = vmatprep.subr.mxu0 0.0
  %219 = vmatpush1.msra.mxu0 0.0
  %220 = vmatprep.subr.mxu0 0.0
  %221 = vmatpush1.msra.mxu0 0.0
  %222 = vmatprep.subr.mxu0 0.0
  %223 = vmatpush1.msra.mxu0 0.0
  %224 = vmatprep.subr.mxu0 0.0
  %225 = vmatpush1.msra.mxu0 0.0
  %226 = vmatprep.subr.mxu0 0.0
  %227 = vmatpush1.msra.mxu0 0.0
  %228 = vmatprep.subr.mxu0 0.0
  %229 = vmatpush1.msra.mxu0 0.0
  %230 = vmatprep.subr.mxu0 0.0
  %231 = vmatpush1.msra.mxu0 0.0
  %232 = vmatprep.subr.mxu0 0.0
  %233 = vmatpush1.msra.mxu0 0.0
  %234 = vmatprep.subr.mxu0 0.0
  %235 = vmatpush1.msra.mxu0 0.0
  %236 = vmatprep.subr.mxu0 0.0
  %237 = vmatpush1.msra.mxu0 0.0
  %238 = vmatprep.subr.mxu0 0.0
  %239 = vmatpush1.msra.mxu0 0.0
  %240 = vmatprep.subr.mxu0 0.0
  %241 = vmatpush1.msra.mxu0 0.0
  %242 = vmatprep.subr.mxu0 0.0
  %243 = vmatpush1.msra.mxu0 0.0
  %244 = vmatprep.subr.mxu0 0.0
  %245 = vmatpush1.msra.mxu0 0.0
  %246 = vmatprep.mubr.f32.mxu0 0.0
  %247 = vmatmul.mubr.f32.gmra.mrb[0].mxu0 %v25
  %v248 = vpop.f32.mrb[0].mxu0
  %v249 = vadd.f32 0.0, %v248
  %v250 = vpop.f32.mrb[0].mxu0
  %v251 = vadd.f32 0.0, %v250
  %252 = vmatprep.mubr.f32.mxu0 0.0
  %253 = vmatmul.mubr.f32.gmra.mrb[0].mxu0 %v26
  %v254 = vpop.f32.mrb[0].mxu0
  %v255 = vadd.f32 0.0, %v254
  %v256 = vpop.f32.mrb[0].mxu0
  %v257 = vadd.f32 0.0, %v256
  %258 = vmatprep.mubr.f32.mxu0 0.0
  %259 = vmatmul.mubr.f32.gmra.mrb[0].mxu0 %v27
  %v260 = vpop.f32.mrb[0].mxu0
  %v261 = vadd.f32 0.0, %v260
  %v262 = vpop.f32.mrb[0].mxu0
  %v263 = vadd.f32 0.0, %v262
  %264 = vmatprep.mubr.f32.mxu0 0.0
  %265 = vmatmul.mubr.f32.gmra.mrb[0].mxu0 %v28
  %v266 = vpop.f32.mrb[0].mxu0
  %v267 = vadd.f32 0.0, %v266
  %v268 = vpop.f32.mrb[0].mxu0
  %v269 = vadd.f32 0.0, %v268
  %270 = vdwg.mxu0
  %v271 = vld [vmem:[%s3] sm:$0xff]
  %v272 = vld [vmem:[%s3 + $0x8] sm:$0xff]
  %v273 = vld [vmem:[%s4] sm:$0xf]
  %275 = vset.pattern.permute.xlu0 0
  %276 = vperm.xlu0 %275, %v271
  %v277 = vpop.permute.xlu0 %276
  %280 = vset.pattern.permute.xlu0 0
  %281 = vperm.xlu0 %280, %v272
  %v282 = vpop.permute.xlu0 %281
  %v285 = vlaneseq
  %v286 = vshrl.u32 %v285, 7
  %v287 = vsub.s32 0, %v286
  %v288 = vrot.slane %v273, %v287
  %v289 = vlaneseq
  %v290 = vshrl.u32 %v289, 7
  %v291 = vsub.s32 1, %v290
  %v292 = vrot.slane %v273, %v291
  %v293 = vlaneseq
  %v294 = vshrl.u32 %v293, 7
  %v295 = vsub.s32 2, %v294
  %v296 = vrot.slane %v273, %v295
  %v297 = vlaneseq
  %v298 = vshrl.u32 %v297, 7
  %v299 = vsub.s32 3, %v298
  %v300 = vrot.slane %v273, %v299
  %v305 = vmul.f32 %v277, %v288
  %v306 = vmul.f32 %v277, %v292
  %v307 = vmul.f32 %v277, %v296
  %v308 = vmul.f32 %v277, %v300
  %v309 = vmul.f32 %v282, %v288
  %v310 = vmul.f32 %v282, %v292
  %v311 = vmul.f32 %v282, %v296
  %v312 = vmul.f32 %v282, %v300
  %v313 = vld [vmem:[%s2] sm:$0xff]
  %v314 = vld [vmem:[%s2 + $0x8] sm:$0xff]
  %vm315 = vcmask 64512
  %v317 = vsel %vm315, %v313, 0
  %v320 = vsel %vm315, %v314, 0
  %322 = vmatprep.subr.mxu0 %v162
  %323 = vmatpush1.msra.mxu0 %v160
  %324 = vmatprep.subr.mxu0 0.0
  %325 = vmatpush1.msra.mxu0 0.0
  %326 = vmatprep.subr.mxu0 0.0
  %327 = vmatpush1.msra.mxu0 0.0
  %328 = vmatprep.subr.mxu0 0.0
  %329 = vmatpush1.msra.mxu0 0.0
  %330 = vmatprep.subr.mxu0 0.0
  %331 = vmatpush1.msra.mxu0 0.0
  %332 = vmatprep.subr.mxu0 0.0
  %333 = vmatpush1.msra.mxu0 0.0
  %334 = vmatprep.subr.mxu0 0.0
  %335 = vmatpush1.msra.mxu0 0.0
  %336 = vmatprep.subr.mxu0 0.0
  %337 = vmatpush1.msra.mxu0 0.0
  %338 = vmatprep.subr.mxu0 0.0
  %339 = vmatpush1.msra.mxu0 0.0
  %340 = vmatprep.subr.mxu0 0.0
  %341 = vmatpush1.msra.mxu0 0.0
  %342 = vmatprep.subr.mxu0 0.0
  %343 = vmatpush1.msra.mxu0 0.0
  %344 = vmatprep.subr.mxu0 0.0
  %345 = vmatpush1.msra.mxu0 0.0
  %346 = vmatprep.subr.mxu0 0.0
  %347 = vmatpush1.msra.mxu0 0.0
  %348 = vmatprep.subr.mxu0 0.0
  %349 = vmatpush1.msra.mxu0 0.0
  %350 = vmatprep.subr.mxu0 0.0
  %351 = vmatpush1.msra.mxu0 0.0
  %352 = vmatprep.subr.mxu0 0.0
  %353 = vmatpush1.msra.mxu0 0.0
  %354 = vmatprep.subr.mxu0 0.0
  %355 = vmatpush1.msra.mxu0 0.0
  %356 = vmatprep.subr.mxu0 0.0
  %357 = vmatpush1.msra.mxu0 0.0
  %358 = vmatprep.subr.mxu0 0.0
  %359 = vmatpush1.msra.mxu0 0.0
  %360 = vmatprep.subr.mxu0 0.0
  %361 = vmatpush1.msra.mxu0 0.0
  %362 = vmatprep.subr.mxu0 0.0
  %363 = vmatpush1.msra.mxu0 0.0
  %364 = vmatprep.subr.mxu0 0.0
  %365 = vmatpush1.msra.mxu0 0.0
  %366 = vmatprep.subr.mxu0 0.0
  %367 = vmatpush1.msra.mxu0 0.0
  %368 = vmatprep.subr.mxu0 0.0
  %369 = vmatpush1.msra.mxu0 0.0
  %370 = vmatprep.subr.mxu0 0.0
  %371 = vmatpush1.msra.mxu0 0.0
  %372 = vmatprep.subr.mxu0 0.0
  %373 = vmatpush1.msra.mxu0 0.0
  %374 = vmatprep.subr.mxu0 0.0
  %375 = vmatpush1.msra.mxu0 0.0
  %376 = vmatprep.subr.mxu0 0.0
  %377 = vmatpush1.msra.mxu0 0.0
  %378 = vmatprep.subr.mxu0 0.0
  %379 = vmatpush1.msra.mxu0 0.0
  %380 = vmatprep.subr.mxu0 0.0
  %381 = vmatpush1.msra.mxu0 0.0
  %382 = vmatprep.subr.mxu0 0.0
  %383 = vmatpush1.msra.mxu0 0.0
  %384 = vmatprep.subr.mxu0 0.0
  %385 = vmatpush1.msra.mxu0 0.0
  %386 = vmatprep.mubr.f32.mxu0 0.0
  %387 = vmatmul.mubr.f32.gmra.mrb[0].mxu0 %v317
  %v388 = vpop.f32.mrb[0].mxu0
  %v389 = vadd.f32 %v305, %v388
  %v390 = vpop.f32.mrb[0].mxu0
  %v391 = vadd.f32 %v306, %v390
  %392 = vmatprep.mubr.f32.mxu0 0.0
  %393 = vmatmul.mubr.f32.gmra.mrb[0].mxu0 %v320
  %v394 = vpop.f32.mrb[0].mxu0
  %v395 = vadd.f32 %v309, %v394
  %v396 = vpop.f32.mrb[0].mxu0
  %v397 = vadd.f32 %v310, %v396
  %398 = vdwg.mxu0
  %399 = vmatprep.subr.mxu0 %v251
  %400 = vmatpush1.msra.mxu0 %v249
  %401 = vmatprep.subr.mxu0 0.0
  %402 = vmatpush1.msra.mxu0 0.0
  %403 = vmatprep.subr.mxu0 0.0
  %404 = vmatpush1.msra.mxu0 0.0
  %405 = vmatprep.subr.mxu0 0.0
  %406 = vmatpush1.msra.mxu0 0.0
  %407 = vmatprep.subr.mxu0 0.0
  %408 = vmatpush1.msra.mxu0 0.0
  %409 = vmatprep.subr.mxu0 0.0
  %410 = vmatpush1.msra.mxu0 0.0
  %411 = vmatprep.subr.mxu0 0.0
  %412 = vmatpush1.msra.mxu0 0.0
  %413 = vmatprep.subr.mxu0 0.0
  %414 = vmatpush1.msra.mxu0 0.0
  %415 = vmatprep.subr.mxu0 0.0
  %416 = vmatpush1.msra.mxu0 0.0
  %417 = vmatprep.subr.mxu0 0.0
  %418 = vmatpush1.msra.mxu0 0.0
  %419 = vmatprep.subr.mxu0 0.0
  %420 = vmatpush1.msra.mxu0 0.0
  %421 = vmatprep.subr.mxu0 0.0
  %422 = vmatpush1.msra.mxu0 0.0
  %423 = vmatprep.subr.mxu0 0.0
  %424 = vmatpush1.msra.mxu0 0.0
  %425 = vmatprep.subr.mxu0 0.0
  %426 = vmatpush1.msra.mxu0 0.0
  %427 = vmatprep.subr.mxu0 0.0
  %428 = vmatpush1.msra.mxu0 0.0
  %429 = vmatprep.subr.mxu0 0.0
  %430 = vmatpush1.msra.mxu0 0.0
  %431 = vmatprep.subr.mxu0 0.0
  %432 = vmatpush1.msra.mxu0 0.0
  %433 = vmatprep.subr.mxu0 0.0
  %434 = vmatpush1.msra.mxu0 0.0
  %435 = vmatprep.subr.mxu0 0.0
  %436 = vmatpush1.msra.mxu0 0.0
  %437 = vmatprep.subr.mxu0 0.0
  %438 = vmatpush1.msra.mxu0 0.0
  %439 = vmatprep.subr.mxu0 0.0
  %440 = vmatpush1.msra.mxu0 0.0
  %441 = vmatprep.subr.mxu0 0.0
  %442 = vmatpush1.msra.mxu0 0.0
  %443 = vmatprep.subr.mxu0 0.0
  %444 = vmatpush1.msra.mxu0 0.0
  %445 = vmatprep.subr.mxu0 0.0
  %446 = vmatpush1.msra.mxu0 0.0
  %447 = vmatprep.subr.mxu0 0.0
  %448 = vmatpush1.msra.mxu0 0.0
  %449 = vmatprep.subr.mxu0 0.0
  %450 = vmatpush1.msra.mxu0 0.0
  %451 = vmatprep.subr.mxu0 0.0
  %452 = vmatpush1.msra.mxu0 0.0
  %453 = vmatprep.subr.mxu0 0.0
  %454 = vmatpush1.msra.mxu0 0.0
  %455 = vmatprep.subr.mxu0 0.0
  %456 = vmatpush1.msra.mxu0 0.0
  %457 = vmatprep.subr.mxu0 0.0
  %458 = vmatpush1.msra.mxu0 0.0
  %459 = vmatprep.subr.mxu0 0.0
  %460 = vmatpush1.msra.mxu0 0.0
  %461 = vmatprep.subr.mxu0 0.0
  %462 = vmatpush1.msra.mxu0 0.0
  %463 = vmatprep.mubr.f32.mxu0 0.0
  %464 = vmatmul.mubr.f32.gmra.mrb[0].mxu0 %v317
  %v465 = vpop.f32.mrb[0].mxu0
  %v466 = vadd.f32 %v307, %v465
  %v467 = vpop.f32.mrb[0].mxu0
  %v468 = vadd.f32 %v308, %v467
  %469 = vmatprep.mubr.f32.mxu0 0.0
  %470 = vmatmul.mubr.f32.gmra.mrb[0].mxu0 %v320
  %v471 = vpop.f32.mrb[0].mxu0
  %v472 = vadd.f32 %v311, %v471
  %v473 = vpop.f32.mrb[0].mxu0
  %v474 = vadd.f32 %v312, %v473
  %475 = vdwg.mxu0
  %v476 = vld [vmem:[%s5] ss:$8 sm:$0xf]
  %s477 = scalar_lea.vmem %s5, 1
  %v478 = vld [vmem:[%s477] ss:$8 sm:$0xf]
  %s479 = scalar_lea.vmem %s5, 2
  %v480 = vld [vmem:[%s479] ss:$8 sm:$0xf]
  %v481 = vsub.f32 %v476, -8.0
  %v482 = vmul.f32 %v481, 0.5
  %v483 = vcvt.f32.s32.to.zero.pseudo %v482
  %v484 = vsub.f32 %v478, -8.0
  %v485 = vmul.f32 %v484, 0.5
  %v486 = vcvt.f32.s32.to.zero.pseudo %v485
  %v487 = vsub.f32 %v480, -4.0
  %v488 = vmul.f32 %v487, 0.125
  %v489 = vcvt.f32.s32.to.zero.pseudo %v488
  %vm490 = vcmp.ge.s32.totalorder %v483, 0
  %vm491 = vcmp.lt.s32.totalorder %v483, 8
  %vm492 = vmand %vm490, %vm491
  %vm493 = vcmp.ge.s32.totalorder %v486, 0
  %vm494 = vmand %vm492, %vm493
  %vm495 = vcmp.lt.s32.totalorder %v486, 8
  %vm496 = vmand %vm494, %vm495
  %vm497 = vcmp.ge.s32.totalorder %v489, 0
  %vm498 = vmand %vm496, %vm497
  %vm499 = vcmp.lt.s32.totalorder %v489, 1
  %vm500 = vmand %vm498, %vm499
  %v501 = vmul.u32 %v489, 8
  %v502 = vadd.s32 %v501, %v483
  %v503 = vmul.u32 %v502, 8
  %v504 = vadd.s32 %v503, %v486
  %v505 = vsel %vm500, %v504, 4294967295
  %506 = vmatprep.subr.mxu0 %v168
  %507 = vmatpush1.msra.mxu0 %v166
  %508 = vmatprep.subr.mxu0 0.0
  %509 = vmatpush1.msra.mxu0 0.0
  %510 = vmatprep.subr.mxu0 0.0
  %511 = vmatpush1.msra.mxu0 0.0
  %512 = vmatprep.subr.mxu0 0.0
  %513 = vmatpush1.msra.mxu0 0.0
  %514 = vmatprep.subr.mxu0 0.0
  %515 = vmatpush1.msra.mxu0 0.0
  %516 = vmatprep.subr.mxu0 0.0
  %517 = vmatpush1.msra.mxu0 0.0
  %518 = vmatprep.subr.mxu0 0.0
  %519 = vmatpush1.msra.mxu0 0.0
  %520 = vmatprep.subr.mxu0 0.0
  %521 = vmatpush1.msra.mxu0 0.0
  %522 = vmatprep.subr.mxu0 0.0
  %523 = vmatpush1.msra.mxu0 0.0
  %524 = vmatprep.subr.mxu0 0.0
  %525 = vmatpush1.msra.mxu0 0.0
  %526 = vmatprep.subr.mxu0 0.0
  %527 = vmatpush1.msra.mxu0 0.0
  %528 = vmatprep.subr.mxu0 0.0
  %529 = vmatpush1.msra.mxu0 0.0
  %530 = vmatprep.subr.mxu0 0.0
  %531 = vmatpush1.msra.mxu0 0.0
  %532 = vmatprep.subr.mxu0 0.0
  %533 = vmatpush1.msra.mxu0 0.0
  %534 = vmatprep.subr.mxu0 0.0
  %535 = vmatpush1.msra.mxu0 0.0
  %536 = vmatprep.subr.mxu0 0.0
  %537 = vmatpush1.msra.mxu0 0.0
  %538 = vmatprep.subr.mxu0 0.0
  %539 = vmatpush1.msra.mxu0 0.0
  %540 = vmatprep.subr.mxu0 0.0
  %541 = vmatpush1.msra.mxu0 0.0
  %542 = vmatprep.subr.mxu0 0.0
  %543 = vmatpush1.msra.mxu0 0.0
  %544 = vmatprep.subr.mxu0 0.0
  %545 = vmatpush1.msra.mxu0 0.0
  %546 = vmatprep.subr.mxu0 0.0
  %547 = vmatpush1.msra.mxu0 0.0
  %548 = vmatprep.subr.mxu0 0.0
  %549 = vmatpush1.msra.mxu0 0.0
  %550 = vmatprep.subr.mxu0 0.0
  %551 = vmatpush1.msra.mxu0 0.0
  %552 = vmatprep.subr.mxu0 0.0
  %553 = vmatpush1.msra.mxu0 0.0
  %554 = vmatprep.subr.mxu0 0.0
  %555 = vmatpush1.msra.mxu0 0.0
  %556 = vmatprep.subr.mxu0 0.0
  %557 = vmatpush1.msra.mxu0 0.0
  %558 = vmatprep.subr.mxu0 0.0
  %559 = vmatpush1.msra.mxu0 0.0
  %560 = vmatprep.subr.mxu0 0.0
  %561 = vmatpush1.msra.mxu0 0.0
  %562 = vmatprep.subr.mxu0 0.0
  %563 = vmatpush1.msra.mxu0 0.0
  %564 = vmatprep.subr.mxu0 0.0
  %565 = vmatpush1.msra.mxu0 0.0
  %566 = vmatprep.subr.mxu0 0.0
  %567 = vmatpush1.msra.mxu0 0.0
  %568 = vmatprep.subr.mxu0 0.0
  %569 = vmatpush1.msra.mxu0 0.0
  %570 = vmatprep.mubr.f32.mxu0 0.0
  %571 = vmatmul.mubr.f32.gmra.mrb[0].mxu0 %v317
  %v572 = vpop.f32.mrb[0].mxu0
  %v573 = vadd.f32 %v305, %v572
  %v574 = vpop.f32.mrb[0].mxu0
  %v575 = vadd.f32 %v306, %v574
  %576 = vmatprep.mubr.f32.mxu0 0.0
  %577 = vmatmul.mubr.f32.gmra.mrb[0].mxu0 %v320
  %v578 = vpop.f32.mrb[0].mxu0
  %v579 = vadd.f32 %v309, %v578
  %v580 = vpop.f32.mrb[0].mxu0
  %v581 = vadd.f32 %v310, %v580
  %582 = vdwg.mxu0
  %583 = vmatprep.subr.mxu0 %v257
  %584 = vmatpush1.msra.mxu0 %v255
  %585 = vmatprep.subr.mxu0 0.0
  %586 = vmatpush1.msra.mxu0 0.0
  %587 = vmatprep.subr.mxu0 0.0
  %588 = vmatpush1.msra.mxu0 0.0
  %589 = vmatprep.subr.mxu0 0.0
  %590 = vmatpush1.msra.mxu0 0.0
  %591 = vmatprep.subr.mxu0 0.0
  %592 = vmatpush1.msra.mxu0 0.0
  %593 = vmatprep.subr.mxu0 0.0
  %594 = vmatpush1.msra.mxu0 0.0
  %595 = vmatprep.subr.mxu0 0.0
  %596 = vmatpush1.msra.mxu0 0.0
  %597 = vmatprep.subr.mxu0 0.0
  %598 = vmatpush1.msra.mxu0 0.0
  %599 = vmatprep.subr.mxu0 0.0
  %600 = vmatpush1.msra.mxu0 0.0
  %601 = vmatprep.subr.mxu0 0.0
  %602 = vmatpush1.msra.mxu0 0.0
  %603 = vmatprep.subr.mxu0 0.0
  %604 = vmatpush1.msra.mxu0 0.0
  %605 = vmatprep.subr.mxu0 0.0
  %606 = vmatpush1.msra.mxu0 0.0
  %607 = vmatprep.subr.mxu0 0.0
  %608 = vmatpush1.msra.mxu0 0.0
  %609 = vmatprep.subr.mxu0 0.0
  %610 = vmatpush1.msra.mxu0 0.0
  %611 = vmatprep.subr.mxu0 0.0
  %612 = vmatpush1.msra.mxu0 0.0
  %613 = vmatprep.subr.mxu0 0.0
  %614 = vmatpush1.msra.mxu0 0.0
  %615 = vmatprep.subr.mxu0 0.0
  %616 = vmatpush1.msra.mxu0 0.0
  %617 = vmatprep.subr.mxu0 0.0
  %618 = vmatpush1.msra.mxu0 0.0
  %619 = vmatprep.subr.mxu0 0.0
  %620 = vmatpush1.msra.mxu0 0.0
  %621 = vmatprep.subr.mxu0 0.0
  %622 = vmatpush1.msra.mxu0 0.0
  %623 = vmatprep.subr.mxu0 0.0
  %624 = vmatpush1.msra.mxu0 0.0
  %625 = vmatprep.subr.mxu0 0.0
  %626 = vmatpush1.msra.mxu0 0.0
  %627 = vmatprep.subr.mxu0 0.0
  %628 = vmatpush1.msra.mxu0 0.0
  %629 = vmatprep.subr.mxu0 0.0
  %630 = vmatpush1.msra.mxu0 0.0
  %631 = vmatprep.subr.mxu0 0.0
  %632 = vmatpush1.msra.mxu0 0.0
  %633 = vmatprep.subr.mxu0 0.0
  %634 = vmatpush1.msra.mxu0 0.0
  %635 = vmatprep.subr.mxu0 0.0
  %636 = vmatpush1.msra.mxu0 0.0
  %637 = vmatprep.subr.mxu0 0.0
  %638 = vmatpush1.msra.mxu0 0.0
  %639 = vmatprep.subr.mxu0 0.0
  %640 = vmatpush1.msra.mxu0 0.0
  %641 = vmatprep.subr.mxu0 0.0
  %642 = vmatpush1.msra.mxu0 0.0
  %643 = vmatprep.subr.mxu0 0.0
  %644 = vmatpush1.msra.mxu0 0.0
  %645 = vmatprep.subr.mxu0 0.0
  %646 = vmatpush1.msra.mxu0 0.0
  %647 = vmatprep.mubr.f32.mxu0 0.0
  %648 = vmatmul.mubr.f32.gmra.mrb[0].mxu0 %v317
  %v649 = vpop.f32.mrb[0].mxu0
  %v650 = vadd.f32 %v307, %v649
  %v651 = vpop.f32.mrb[0].mxu0
  %v652 = vadd.f32 %v308, %v651
  %653 = vmatprep.mubr.f32.mxu0 0.0
  %654 = vmatmul.mubr.f32.gmra.mrb[0].mxu0 %v320
  %v655 = vpop.f32.mrb[0].mxu0
  %v656 = vadd.f32 %v311, %v655
  %v657 = vpop.f32.mrb[0].mxu0
  %v658 = vadd.f32 %v312, %v657
  %659 = vdwg.mxu0
  %s660 = scalar_lea.vmem %s5, 3
  %v661 = vld [vmem:[%s660] ss:$8 sm:$0xf]
  %s662 = scalar_lea.vmem %s5, 4
  %v663 = vld [vmem:[%s662] ss:$8 sm:$0xf]
  %s664 = scalar_lea.vmem %s5, 5
  %v665 = vld [vmem:[%s664] ss:$8 sm:$0xf]
  %v666 = vsub.f32 %v661, -8.0
  %v667 = vmul.f32 %v666, 0.5
  %v668 = vcvt.f32.s32.to.zero.pseudo %v667
  %v669 = vsub.f32 %v663, -8.0
  %v670 = vmul.f32 %v669, 0.5
  %v671 = vcvt.f32.s32.to.zero.pseudo %v670
  %v672 = vsub.f32 %v665, -4.0
  %v673 = vmul.f32 %v672, 0.125
  %v674 = vcvt.f32.s32.to.zero.pseudo %v673
  %vm675 = vcmp.ge.s32.totalorder %v668, 0
  %vm676 = vcmp.lt.s32.totalorder %v668, 8
  %vm677 = vmand %vm675, %vm676
  %vm678 = vcmp.ge.s32.totalorder %v671, 0
  %vm679 = vmand %vm677, %vm678
  %vm680 = vcmp.lt.s32.totalorder %v671, 8
  %vm681 = vmand %vm679, %vm680
  %vm682 = vcmp.ge.s32.totalorder %v674, 0
  %vm683 = vmand %vm681, %vm682
  %vm684 = vcmp.lt.s32.totalorder %v674, 1
  %vm685 = vmand %vm683, %vm684
  %v686 = vmul.u32 %v674, 8
  %v687 = vadd.s32 %v686, %v668
  %v688 = vmul.u32 %v687, 8
  %v689 = vadd.s32 %v688, %v671
  %v690 = vsel %vm685, %v689, 4294967295
  %691 = vmatprep.subr.mxu0 %v174
  %692 = vmatpush1.msra.mxu0 %v172
  %693 = vmatprep.subr.mxu0 0.0
  %694 = vmatpush1.msra.mxu0 0.0
  %695 = vmatprep.subr.mxu0 0.0
  %696 = vmatpush1.msra.mxu0 0.0
  %697 = vmatprep.subr.mxu0 0.0
  %698 = vmatpush1.msra.mxu0 0.0
  %699 = vmatprep.subr.mxu0 0.0
  %700 = vmatpush1.msra.mxu0 0.0
  %701 = vmatprep.subr.mxu0 0.0
  %702 = vmatpush1.msra.mxu0 0.0
  %703 = vmatprep.subr.mxu0 0.0
  %704 = vmatpush1.msra.mxu0 0.0
  %705 = vmatprep.subr.mxu0 0.0
  %706 = vmatpush1.msra.mxu0 0.0
  %707 = vmatprep.subr.mxu0 0.0
  %708 = vmatpush1.msra.mxu0 0.0
  %709 = vmatprep.subr.mxu0 0.0
  %710 = vmatpush1.msra.mxu0 0.0
  %711 = vmatprep.subr.mxu0 0.0
  %712 = vmatpush1.msra.mxu0 0.0
  %713 = vmatprep.subr.mxu0 0.0
  %714 = vmatpush1.msra.mxu0 0.0
  %715 = vmatprep.subr.mxu0 0.0
  %716 = vmatpush1.msra.mxu0 0.0
  %717 = vmatprep.subr.mxu0 0.0
  %718 = vmatpush1.msra.mxu0 0.0
  %719 = vmatprep.subr.mxu0 0.0
  %720 = vmatpush1.msra.mxu0 0.0
  %721 = vmatprep.subr.mxu0 0.0
  %722 = vmatpush1.msra.mxu0 0.0
  %723 = vmatprep.subr.mxu0 0.0
  %724 = vmatpush1.msra.mxu0 0.0
  %725 = vmatprep.subr.mxu0 0.0
  %726 = vmatpush1.msra.mxu0 0.0
  %727 = vmatprep.subr.mxu0 0.0
  %728 = vmatpush1.msra.mxu0 0.0
  %729 = vmatprep.subr.mxu0 0.0
  %730 = vmatpush1.msra.mxu0 0.0
  %731 = vmatprep.subr.mxu0 0.0
  %732 = vmatpush1.msra.mxu0 0.0
  %733 = vmatprep.subr.mxu0 0.0
  %734 = vmatpush1.msra.mxu0 0.0
  %735 = vmatprep.subr.mxu0 0.0
  %736 = vmatpush1.msra.mxu0 0.0
  %737 = vmatprep.subr.mxu0 0.0
  %738 = vmatpush1.msra.mxu0 0.0
  %739 = vmatprep.subr.mxu0 0.0
  %740 = vmatpush1.msra.mxu0 0.0
  %741 = vmatprep.subr.mxu0 0.0
  %742 = vmatpush1.msra.mxu0 0.0
  %743 = vmatprep.subr.mxu0 0.0
  %744 = vmatpush1.msra.mxu0 0.0
  %745 = vmatprep.subr.mxu0 0.0
  %746 = vmatpush1.msra.mxu0 0.0
  %747 = vmatprep.subr.mxu0 0.0
  %748 = vmatpush1.msra.mxu0 0.0
  %749 = vmatprep.subr.mxu0 0.0
  %750 = vmatpush1.msra.mxu0 0.0
  %751 = vmatprep.subr.mxu0 0.0
  %752 = vmatpush1.msra.mxu0 0.0
  %753 = vmatprep.subr.mxu0 0.0
  %754 = vmatpush1.msra.mxu0 0.0
  %755 = vmatprep.mubr.f32.mxu0 0.0
  %756 = vmatmul.mubr.f32.gmra.mrb[0].mxu0 %v317
  %v757 = vpop.f32.mrb[0].mxu0
  %v758 = vadd.f32 %v305, %v757
  %v759 = vpop.f32.mrb[0].mxu0
  %v760 = vadd.f32 %v306, %v759
  %761 = vmatprep.mubr.f32.mxu0 0.0
  %762 = vmatmul.mubr.f32.gmra.mrb[0].mxu0 %v320
  %v763 = vpop.f32.mrb[0].mxu0
  %v764 = vadd.f32 %v309, %v763
  %v765 = vpop.f32.mrb[0].mxu0
  %v766 = vadd.f32 %v310, %v765
  %767 = vdwg.mxu0
  %768 = vmatprep.subr.mxu0 %v263
  %769 = vmatpush1.msra.mxu0 %v261
  %770 = vmatprep.subr.mxu0 0.0
  %771 = vmatpush1.msra.mxu0 0.0
  %772 = vmatprep.subr.mxu0 0.0
  %773 = vmatpush1.msra.mxu0 0.0
  %774 = vmatprep.subr.mxu0 0.0
  %775 = vmatpush1.msra.mxu0 0.0
  %776 = vmatprep.subr.mxu0 0.0
  %777 = vmatpush1.msra.mxu0 0.0
  %778 = vmatprep.subr.mxu0 0.0
  %779 = vmatpush1.msra.mxu0 0.0
  %780 = vmatprep.subr.mxu0 0.0
  %781 = vmatpush1.msra.mxu0 0.0
  %782 = vmatprep.subr.mxu0 0.0
  %783 = vmatpush1.msra.mxu0 0.0
  %784 = vmatprep.subr.mxu0 0.0
  %785 = vmatpush1.msra.mxu0 0.0
  %786 = vmatprep.subr.mxu0 0.0
  %787 = vmatpush1.msra.mxu0 0.0
  %788 = vmatprep.subr.mxu0 0.0
  %789 = vmatpush1.msra.mxu0 0.0
  %790 = vmatprep.subr.mxu0 0.0
  %791 = vmatpush1.msra.mxu0 0.0
  %792 = vmatprep.subr.mxu0 0.0
  %793 = vmatpush1.msra.mxu0 0.0
  %794 = vmatprep.subr.mxu0 0.0
  %795 = vmatpush1.msra.mxu0 0.0
  %796 = vmatprep.subr.mxu0 0.0
  %797 = vmatpush1.msra.mxu0 0.0
  %798 = vmatprep.subr.mxu0 0.0
  %799 = vmatpush1.msra.mxu0 0.0
  %800 = vmatprep.subr.mxu0 0.0
  %801 = vmatpush1.msra.mxu0 0.0
  %802 = vmatprep.subr.mxu0 0.0
  %803 = vmatpush1.msra.mxu0 0.0
  %804 = vmatprep.subr.mxu0 0.0
  %805 = vmatpush1.msra.mxu0 0.0
  %806 = vmatprep.subr.mxu0 0.0
  %807 = vmatpush1.msra.mxu0 0.0
  %808 = vmatprep.subr.mxu0 0.0
  %809 = vmatpush1.msra.mxu0 0.0
  %810 = vmatprep.subr.mxu0 0.0
  %811 = vmatpush1.msra.mxu0 0.0
  %812 = vmatprep.subr.mxu0 0.0
  %813 = vmatpush1.msra.mxu0 0.0
  %814 = vmatprep.subr.mxu0 0.0
  %815 = vmatpush1.msra.mxu0 0.0
  %816 = vmatprep.subr.mxu0 0.0
  %817 = vmatpush1.msra.mxu0 0.0
  %818 = vmatprep.subr.mxu0 0.0
  %819 = vmatpush1.msra.mxu0 0.0
  %820 = vmatprep.subr.mxu0 0.0
  %821 = vmatpush1.msra.mxu0 0.0
  %822 = vmatprep.subr.mxu0 0.0
  %823 = vmatpush1.msra.mxu0 0.0
  %824 = vmatprep.subr.mxu0 0.0
  %825 = vmatpush1.msra.mxu0 0.0
  %826 = vmatprep.subr.mxu0 0.0
  %827 = vmatpush1.msra.mxu0 0.0
  %828 = vmatprep.subr.mxu0 0.0
  %829 = vmatpush1.msra.mxu0 0.0
  %830 = vmatprep.subr.mxu0 0.0
  %831 = vmatpush1.msra.mxu0 0.0
  %832 = vmatprep.mubr.f32.mxu0 0.0
  %833 = vmatmul.mubr.f32.gmra.mrb[0].mxu0 %v317
  %v834 = vpop.f32.mrb[0].mxu0
  %v835 = vadd.f32 %v307, %v834
  %v836 = vpop.f32.mrb[0].mxu0
  %v837 = vadd.f32 %v308, %v836
  %838 = vmatprep.mubr.f32.mxu0 0.0
  %839 = vmatmul.mubr.f32.gmra.mrb[0].mxu0 %v320
  %v840 = vpop.f32.mrb[0].mxu0
  %v841 = vadd.f32 %v311, %v840
  %v842 = vpop.f32.mrb[0].mxu0
  %v843 = vadd.f32 %v312, %v842
  %844 = vdwg.mxu0
  %s845 = scalar_lea.vmem %s5, 6
  %v846 = vld [vmem:[%s845] ss:$8 sm:$0xf]
  %s847 = scalar_lea.vmem %s5, 7
  %v848 = vld [vmem:[%s847] ss:$8 sm:$0xf]
  %s849 = scalar_lea.vmem %s5, 32
  %v850 = vld [vmem:[%s849] ss:$8 sm:$0xf]
  %v851 = vsub.f32 %v846, -8.0
  %v852 = vmul.f32 %v851, 0.5
  %v853 = vcvt.f32.s32.to.zero.pseudo %v852
  %v854 = vsub.f32 %v848, -8.0
  %v855 = vmul.f32 %v854, 0.5
  %v856 = vcvt.f32.s32.to.zero.pseudo %v855
  %v857 = vsub.f32 %v850, -4.0
  %v858 = vmul.f32 %v857, 0.125
  %v859 = vcvt.f32.s32.to.zero.pseudo %v858
  %vm860 = vcmp.ge.s32.totalorder %v853, 0
  %vm861 = vcmp.lt.s32.totalorder %v853, 8
  %vm862 = vmand %vm860, %vm861
  %vm863 = vcmp.ge.s32.totalorder %v856, 0
  %vm864 = vmand %vm862, %vm863
  %vm865 = vcmp.lt.s32.totalorder %v856, 8
  %vm866 = vmand %vm864, %vm865
  %vm867 = vcmp.ge.s32.totalorder %v859, 0
  %vm868 = vmand %vm866, %vm867
  %vm869 = vcmp.lt.s32.totalorder %v859, 1
  %vm870 = vmand %vm868, %vm869
  %v871 = vadd.s32 %v859, 1
  %v872 = vmul.u32 %v871, 8
  %v873 = vadd.s32 %v872, %v853
  %v874 = vmul.u32 %v873, 8
  %v875 = vadd.s32 %v874, %v856
  %v876 = vsel %vm870, %v875, 4294967295
  %877 = vmatprep.subr.mxu0 %v180
  %878 = vmatpush1.msra.mxu0 %v178
  %879 = vmatprep.subr.mxu0 0.0
  %880 = vmatpush1.msra.mxu0 0.0
  %881 = vmatprep.subr.mxu0 0.0
  %882 = vmatpush1.msra.mxu0 0.0
  %883 = vmatprep.subr.mxu0 0.0
  %884 = vmatpush1.msra.mxu0 0.0
  %885 = vmatprep.subr.mxu0 0.0
  %886 = vmatpush1.msra.mxu0 0.0
  %887 = vmatprep.subr.mxu0 0.0
  %888 = vmatpush1.msra.mxu0 0.0
  %889 = vmatprep.subr.mxu0 0.0
  %890 = vmatpush1.msra.mxu0 0.0
  %891 = vmatprep.subr.mxu0 0.0
  %892 = vmatpush1.msra.mxu0 0.0
  %893 = vmatprep.subr.mxu0 0.0
  %894 = vmatpush1.msra.mxu0 0.0
  %895 = vmatprep.subr.mxu0 0.0
  %896 = vmatpush1.msra.mxu0 0.0
  %897 = vmatprep.subr.mxu0 0.0
  %898 = vmatpush1.msra.mxu0 0.0
  %899 = vmatprep.subr.mxu0 0.0
  %900 = vmatpush1.msra.mxu0 0.0
  %901 = vmatprep.subr.mxu0 0.0
  %902 = vmatpush1.msra.mxu0 0.0
  %903 = vmatprep.subr.mxu0 0.0
  %904 = vmatpush1.msra.mxu0 0.0
  %905 = vmatprep.subr.mxu0 0.0
  %906 = vmatpush1.msra.mxu0 0.0
  %907 = vmatprep.subr.mxu0 0.0
  %908 = vmatpush1.msra.mxu0 0.0
  %909 = vmatprep.subr.mxu0 0.0
  %910 = vmatpush1.msra.mxu0 0.0
  %911 = vmatprep.subr.mxu0 0.0
  %912 = vmatpush1.msra.mxu0 0.0
  %913 = vmatprep.subr.mxu0 0.0
  %914 = vmatpush1.msra.mxu0 0.0
  %915 = vmatprep.subr.mxu0 0.0
  %916 = vmatpush1.msra.mxu0 0.0
  %917 = vmatprep.subr.mxu0 0.0
  %918 = vmatpush1.msra.mxu0 0.0
  %919 = vmatprep.subr.mxu0 0.0
  %920 = vmatpush1.msra.mxu0 0.0
  %921 = vmatprep.subr.mxu0 0.0
  %922 = vmatpush1.msra.mxu0 0.0
  %923 = vmatprep.subr.mxu0 0.0
  %924 = vmatpush1.msra.mxu0 0.0
  %925 = vmatprep.subr.mxu0 0.0
  %926 = vmatpush1.msra.mxu0 0.0
  %927 = vmatprep.subr.mxu0 0.0
  %928 = vmatpush1.msra.mxu0 0.0
  %929 = vmatprep.subr.mxu0 0.0
  %930 = vmatpush1.msra.mxu0 0.0
  %931 = vmatprep.subr.mxu0 0.0
  %932 = vmatpush1.msra.mxu0 0.0
  %933 = vmatprep.subr.mxu0 0.0
  %934 = vmatpush1.msra.mxu0 0.0
  %935 = vmatprep.subr.mxu0 0.0
  %936 = vmatpush1.msra.mxu0 0.0
  %937 = vmatprep.subr.mxu0 0.0
  %938 = vmatpush1.msra.mxu0 0.0
  %939 = vmatprep.subr.mxu0 0.0
  %940 = vmatpush1.msra.mxu0 0.0
  %941 = vmatprep.mubr.f32.mxu0 0.0
  %942 = vmatmul.mubr.f32.gmra.mrb[0].mxu0 %v317
  %v943 = vpop.f32.mrb[0].mxu0
  %v944 = vadd.f32 %v305, %v943
  %v945 = vpop.f32.mrb[0].mxu0
  %v946 = vadd.f32 %v306, %v945
  %947 = vmatprep.mubr.f32.mxu0 0.0
  %948 = vmatmul.mubr.f32.gmra.mrb[0].mxu0 %v320
  %v949 = vpop.f32.mrb[0].mxu0
  %v950 = vadd.f32 %v309, %v949
  %v951 = vpop.f32.mrb[0].mxu0
  %v952 = vadd.f32 %v310, %v951
  %953 = vdwg.mxu0
  %954 = vmatprep.subr.mxu0 %v269
  %955 = vmatpush1.msra.mxu0 %v267
  %956 = vmatprep.subr.mxu0 0.0
  %957 = vmatpush1.msra.mxu0 0.0
  %958 = vmatprep.subr.mxu0 0.0
  %959 = vmatpush1.msra.mxu0 0.0
  %960 = vmatprep.subr.mxu0 0.0
  %961 = vmatpush1.msra.mxu0 0.0
  %962 = vmatprep.subr.mxu0 0.0
  %963 = vmatpush1.msra.mxu0 0.0
  %964 = vmatprep.subr.mxu0 0.0
  %965 = vmatpush1.msra.mxu0 0.0
  %966 = vmatprep.subr.mxu0 0.0
  %967 = vmatpush1.msra.mxu0 0.0
  %968 = vmatprep.subr.mxu0 0.0
  %969 = vmatpush1.msra.mxu0 0.0
  %970 = vmatprep.subr.mxu0 0.0
  %971 = vmatpush1.msra.mxu0 0.0
  %972 = vmatprep.subr.mxu0 0.0
  %973 = vmatpush1.msra.mxu0 0.0
  %974 = vmatprep.subr.mxu0 0.0
  %975 = vmatpush1.msra.mxu0 0.0
  %976 = vmatprep.subr.mxu0 0.0
  %977 = vmatpush1.msra.mxu0 0.0
  %978 = vmatprep.subr.mxu0 0.0
  %979 = vmatpush1.msra.mxu0 0.0
  %980 = vmatprep.subr.mxu0 0.0
  %981 = vmatpush1.msra.mxu0 0.0
  %982 = vmatprep.subr.mxu0 0.0
  %983 = vmatpush1.msra.mxu0 0.0
  %984 = vmatprep.subr.mxu0 0.0
  %985 = vmatpush1.msra.mxu0 0.0
  %986 = vmatprep.subr.mxu0 0.0
  %987 = vmatpush1.msra.mxu0 0.0
  %988 = vmatprep.subr.mxu0 0.0
  %989 = vmatpush1.msra.mxu0 0.0
  %990 = vmatprep.subr.mxu0 0.0
  %991 = vmatpush1.msra.mxu0 0.0
  %992 = vmatprep.subr.mxu0 0.0
  %993 = vmatpush1.msra.mxu0 0.0
  %994 = vmatprep.subr.mxu0 0.0
  %995 = vmatpush1.msra.mxu0 0.0
  %996 = vmatprep.subr.mxu0 0.0
  %997 = vmatpush1.msra.mxu0 0.0
  %998 = vmatprep.subr.mxu0 0.0
  %999 = vmatpush1.msra.mxu0 0.0
  %1000 = vmatprep.subr.mxu0 0.0
  %1001 = vmatpush1.msra.mxu0 0.0
  %1002 = vmatprep.subr.mxu0 0.0
  %1003 = vmatpush1.msra.mxu0 0.0
  %1004 = vmatprep.subr.mxu0 0.0
  %1005 = vmatpush1.msra.mxu0 0.0
  %1006 = vmatprep.subr.mxu0 0.0
  %1007 = vmatpush1.msra.mxu0 0.0
  %1008 = vmatprep.subr.mxu0 0.0
  %1009 = vmatpush1.msra.mxu0 0.0
  %1010 = vmatprep.subr.mxu0 0.0
  %1011 = vmatpush1.msra.mxu0 0.0
  %1012 = vmatprep.subr.mxu0 0.0
  %1013 = vmatpush1.msra.mxu0 0.0
  %1014 = vmatprep.subr.mxu0 0.0
  %1015 = vmatpush1.msra.mxu0 0.0
  %1016 = vmatprep.subr.mxu0 0.0
  %1017 = vmatpush1.msra.mxu0 0.0
  %1018 = vmatprep.mubr.f32.mxu0 0.0
  %1019 = vmatmul.mubr.f32.gmra.mrb[0].mxu0 %v317
  %v1020 = vpop.f32.mrb[0].mxu0
  %v1021 = vadd.f32 %v307, %v1020
  %v1022 = vpop.f32.mrb[0].mxu0
  %v1023 = vadd.f32 %v308, %v1022
  %1024 = vmatprep.mubr.f32.mxu0 0.0
  %1025 = vmatmul.mubr.f32.gmra.mrb[0].mxu0 %v320
  %v1026 = vpop.f32.mrb[0].mxu0
  %v1027 = vadd.f32 %v311, %v1026
  %v1028 = vpop.f32.mrb[0].mxu0
  %v1029 = vadd.f32 %v312, %v1028
  %1030 = vdwg.mxu0
  %s1031 = scalar_lea.vmem %s5, 33
  %v1032 = vld [vmem:[%s1031] ss:$8 sm:$0xf]
  %s1033 = scalar_lea.vmem %s5, 34
  %v1034 = vld [vmem:[%s1033] ss:$8 sm:$0xf]
  %s1035 = scalar_lea.vmem %s5, 35
  %v1036 = vld [vmem:[%s1035] ss:$8 sm:$0xf]
  %v1037 = vsub.f32 %v1032, -8.0
  %v1038 = vmul.f32 %v1037, 0.5
  %v1039 = vcvt.f32.s32.to.zero.pseudo %v1038
  %v1040 = vsub.f32 %v1034, -8.0
  %v1041 = vmul.f32 %v1040, 0.5
  %v1042 = vcvt.f32.s32.to.zero.pseudo %v1041
  %v1043 = vsub.f32 %v1036, -4.0
  %v1044 = vmul.f32 %v1043, 0.125
  %v1045 = vcvt.f32.s32.to.zero.pseudo %v1044
  %vm1046 = vcmp.ge.s32.totalorder %v1039, 0
  %vm1047 = vcmp.lt.s32.totalorder %v1039, 8
  %vm1048 = vmand %vm1046, %vm1047
  %vm1049 = vcmp.ge.s32.totalorder %v1042, 0
  %vm1050 = vmand %vm1048, %vm1049
  %vm1051 = vcmp.lt.s32.totalorder %v1042, 8
  %vm1052 = vmand %vm1050, %vm1051
  %vm1053 = vcmp.ge.s32.totalorder %v1045, 0
  %vm1054 = vmand %vm1052, %vm1053
  %vm1055 = vcmp.lt.s32.totalorder %v1045, 1
  %vm1056 = vmand %vm1054, %vm1055
  %v1057 = vadd.s32 %v1045, 1
  %v1058 = vmul.u32 %v1057, 8
  %v1059 = vadd.s32 %v1058, %v1039
  %v1060 = vmul.u32 %v1059, 8
  %v1061 = vadd.s32 %v1060, %v1042
  %v1062 = vsel %vm1056, %v1061, 4294967295
  %1063 = vst [vmem:[%s6] sm:$0xff] %v389
  %1064 = vst [vmem:[%s6 + $0x8] sm:$0xff] %v391
  %1065 = vst [vmem:[%s6 + $0x10] sm:$0xff] %v466
  %1066 = vst [vmem:[%s6 + $0x18] sm:$0xff] %v468
  %1067 = vst [vmem:[%s6 + $0x20] sm:$0xff] %v573
  %1068 = vst [vmem:[%s6 + $0x28] sm:$0xff] %v575
  %1069 = vst [vmem:[%s6 + $0x30] sm:$0xff] %v650
  %1070 = vst [vmem:[%s6 + $0x38] sm:$0xff] %v652
  %1071 = vst [vmem:[%s6 + $0x40] sm:$0xff] %v758
  %1072 = vst [vmem:[%s6 + $0x48] sm:$0xff] %v760
  %1073 = vst [vmem:[%s6 + $0x50] sm:$0xff] %v835
  %1074 = vst [vmem:[%s6 + $0x58] sm:$0xff] %v837
  %1075 = vst [vmem:[%s6 + $0x60] sm:$0xff] %v944
  %1076 = vst [vmem:[%s6 + $0x68] sm:$0xff] %v946
  %1077 = vst [vmem:[%s6 + $0x70] sm:$0xff] %v1021
  %1078 = vst [vmem:[%s6 + $0x78] sm:$0xff] %v1023
  %1079 = vst [vmem:[%s6 + $0x80] sm:$0xff] %v395
  %1080 = vst [vmem:[%s6 + $0x88] sm:$0xff] %v397
  %1081 = vst [vmem:[%s6 + $0x90] sm:$0xff] %v472
  %1082 = vst [vmem:[%s6 + $0x98] sm:$0xff] %v474
  %1083 = vst [vmem:[%s6 + $0xa0] sm:$0xff] %v579
  %1084 = vst [vmem:[%s6 + $0xa8] sm:$0xff] %v581
  %1085 = vst [vmem:[%s6 + $0xb0] sm:$0xff] %v656
  %1086 = vst [vmem:[%s6 + $0xb8] sm:$0xff] %v658
  %1087 = vst [vmem:[%s6 + $0xc0] sm:$0xff] %v764
  %1088 = vst [vmem:[%s6 + $0xc8] sm:$0xff] %v766
  %1089 = vst [vmem:[%s6 + $0xd0] sm:$0xff] %v841
  %1090 = vst [vmem:[%s6 + $0xd8] sm:$0xff] %v843
  %1091 = vst [vmem:[%s6 + $0xe0] sm:$0xff] %v950
  %1092 = vst [vmem:[%s6 + $0xe8] sm:$0xff] %v952
  %1093 = vst [vmem:[%s6 + $0xf0] sm:$0xff] %v1027
  %1094 = vst [vmem:[%s6 + $0xf8] sm:$0xff] %v1029
  %v1095 = vlaneseq
  %v1096 = vshrl.u32 %v1095, 7
  %v1097 = vsub.s32 0, %v1096
  %v1098 = vrot.slane %v505, %v1097
  %v1099 = vlaneseq
  %v1100 = vshrl.u32 %v1099, 7
  %v1101 = vsub.s32 1, %v1100
  %v1102 = vrot.slane %v505, %v1101
  %v1103 = vlaneseq
  %v1104 = vshrl.u32 %v1103, 7
  %v1105 = vsub.s32 2, %v1104
  %v1106 = vrot.slane %v505, %v1105
  %v1107 = vlaneseq
  %v1108 = vshrl.u32 %v1107, 7
  %v1109 = vsub.s32 3, %v1108
  %v1110 = vrot.slane %v505, %v1109
  %v1111 = vlaneseq
  %v1112 = vshrl.u32 %v1111, 7
  %v1113 = vsub.s32 0, %v1112
  %v1114 = vrot.slane %v690, %v1113
  %v1115 = vlaneseq
  %v1116 = vshrl.u32 %v1115, 7
  %v1117 = vsub.s32 1, %v1116
  %v1118 = vrot.slane %v690, %v1117
  %v1119 = vlaneseq
  %v1120 = vshrl.u32 %v1119, 7
  %v1121 = vsub.s32 2, %v1120
  %v1122 = vrot.slane %v690, %v1121
  %v1123 = vlaneseq
  %v1124 = vshrl.u32 %v1123, 7
  %v1125 = vsub.s32 3, %v1124
  %v1126 = vrot.slane %v690, %v1125
  %v1127 = vlaneseq
  %v1128 = vshrl.u32 %v1127, 7
  %v1129 = vsub.s32 0, %v1128
  %v1130 = vrot.slane %v876, %v1129
  %v1131 = vlaneseq
  %v1132 = vshrl.u32 %v1131, 7
  %v1133 = vsub.s32 1, %v1132
  %v1134 = vrot.slane %v876, %v1133
  %v1135 = vlaneseq
  %v1136 = vshrl.u32 %v1135, 7
  %v1137 = vsub.s32 2, %v1136
  %v1138 = vrot.slane %v876, %v1137
  %v1139 = vlaneseq
  %v1140 = vshrl.u32 %v1139, 7
  %v1141 = vsub.s32 3, %v1140
  %v1142 = vrot.slane %v876, %v1141
  %v1143 = vlaneseq
  %v1144 = vshrl.u32 %v1143, 7
  %v1145 = vsub.s32 0, %v1144
  %v1146 = vrot.slane %v1062, %v1145
  %v1147 = vlaneseq
  %v1148 = vshrl.u32 %v1147, 7
  %v1149 = vsub.s32 1, %v1148
  %v1150 = vrot.slane %v1062, %v1149
  %v1151 = vlaneseq
  %v1152 = vshrl.u32 %v1151, 7
  %v1153 = vsub.s32 2, %v1152
  %v1154 = vrot.slane %v1062, %v1153
  %v1155 = vlaneseq
  %v1156 = vshrl.u32 %v1155, 7
  %v1157 = vsub.s32 3, %v1156
  %v1158 = vrot.slane %v1062, %v1157
  %v1159 = vlaneseq
  %v1160 = vshrl.u32 %v1159, 7
  %v1161 = vadd.s32 %v1160, 8
  %v1162 = vadd.s32 %v1160, 16
  %v1163 = vadd.s32 %v1160, 24
  %v1164 = vadd.s32 %v1160, 32
  %v1165 = vadd.s32 %v1160, 40
  %v1166 = vadd.s32 %v1160, 48
  %v1167 = vadd.s32 %v1160, 56
  %v1168 = vadd.s32 %v1160, 64
  %v1169 = vadd.s32 %v1160, 72
  %v1170 = vadd.s32 %v1160, 80
  %v1171 = vadd.s32 %v1160, 88
  %v1172 = vadd.s32 %v1160, 96
  %v1173 = vadd.s32 %v1160, 104
  %v1174 = vadd.s32 %v1160, 112
  %v1175 = vadd.s32 %v1160, 120
  %v1176 = vlaneseq
  %v1177 = vshrl.u32 %v1176, 7
  %v1178 = vsub.s32 0, %v1177
  %v1179 = vrot.slane %v1098, %v1178
  %v1180 = vlaneseq
  %v1181 = vshrl.u32 %v1180, 7
  %v1182 = vsub.s32 0, %v1181
  %v1183 = vrot.slane %v1102, %v1182
  %v1184 = vlaneseq
  %v1185 = vshrl.u32 %v1184, 7
  %v1186 = vsub.s32 0, %v1185
  %v1187 = vrot.slane %v1106, %v1186
  %v1188 = vlaneseq
  %v1189 = vshrl.u32 %v1188, 7
  %v1190 = vsub.s32 0, %v1189
  %v1191 = vrot.slane %v1110, %v1190
  %v1192 = vlaneseq
  %v1193 = vshrl.u32 %v1192, 7
  %v1194 = vsub.s32 0, %v1193
  %v1195 = vrot.slane %v1114, %v1194
  %v1196 = vlaneseq
  %v1197 = vshrl.u32 %v1196, 7
  %v1198 = vsub.s32 0, %v1197
  %v1199 = vrot.slane %v1118, %v1198
  %v1200 = vlaneseq
  %v1201 = vshrl.u32 %v1200, 7
  %v1202 = vsub.s32 0, %v1201
  %v1203 = vrot.slane %v1122, %v1202
  %v1204 = vlaneseq
  %v1205 = vshrl.u32 %v1204, 7
  %v1206 = vsub.s32 0, %v1205
  %v1207 = vrot.slane %v1126, %v1206
  %v1208 = vlaneseq
  %v1209 = vshrl.u32 %v1208, 7
  %v1210 = vsub.s32 0, %v1209
  %v1211 = vrot.slane %v1130, %v1210
  %v1212 = vlaneseq
  %v1213 = vshrl.u32 %v1212, 7
  %v1214 = vsub.s32 0, %v1213
  %v1215 = vrot.slane %v1134, %v1214
  %v1216 = vlaneseq
  %v1217 = vshrl.u32 %v1216, 7
  %v1218 = vsub.s32 0, %v1217
  %v1219 = vrot.slane %v1138, %v1218
  %v1220 = vlaneseq
  %v1221 = vshrl.u32 %v1220, 7
  %v1222 = vsub.s32 0, %v1221
  %v1223 = vrot.slane %v1142, %v1222
  %v1224 = vlaneseq
  %v1225 = vshrl.u32 %v1224, 7
  %v1226 = vsub.s32 0, %v1225
  %v1227 = vrot.slane %v1146, %v1226
  %v1228 = vlaneseq
  %v1229 = vshrl.u32 %v1228, 7
  %v1230 = vsub.s32 0, %v1229
  %v1231 = vrot.slane %v1150, %v1230
  %v1232 = vlaneseq
  %v1233 = vshrl.u32 %v1232, 7
  %v1234 = vsub.s32 0, %v1233
  %v1235 = vrot.slane %v1154, %v1234
  %v1236 = vlaneseq
  %v1237 = vshrl.u32 %v1236, 7
  %v1238 = vsub.s32 0, %v1237
  %v1239 = vrot.slane %v1158, %v1238
  %vm1240 = vcmp.eq.s32.totalorder %v1160, %v1179
  %vm1241 = vcmp.eq.s32.totalorder %v1160, %v1183
  %vm1242 = vcmp.eq.s32.totalorder %v1160, %v1187
  %vm1243 = vcmp.eq.s32.totalorder %v1160, %v1191
  %vm1244 = vcmp.eq.s32.totalorder %v1160, %v1195
  %vm1245 = vcmp.eq.s32.totalorder %v1160, %v1199
  %vm1246 = vcmp.eq.s32.totalorder %v1160, %v1203
  %vm1247 = vcmp.eq.s32.totalorder %v1160, %v1207
  %vm1248 = vcmp.eq.s32.totalorder %v1160, %v1211
  %vm1249 = vcmp.eq.s32.totalorder %v1160, %v1215
  %vm1250 = vcmp.eq.s32.totalorder %v1160, %v1219
  %vm1251 = vcmp.eq.s32.totalorder %v1160, %v1223
  %vm1252 = vcmp.eq.s32.totalorder %v1160, %v1227
  %vm1253 = vcmp.eq.s32.totalorder %v1160, %v1231
  %vm1254 = vcmp.eq.s32.totalorder %v1160, %v1235
  %vm1255 = vcmp.eq.s32.totalorder %v1160, %v1239
  %vm1256 = vcmp.eq.s32.totalorder %v1161, %v1179
  %vm1257 = vcmp.eq.s32.totalorder %v1161, %v1183
  %vm1258 = vcmp.eq.s32.totalorder %v1161, %v1187
  %vm1259 = vcmp.eq.s32.totalorder %v1161, %v1191
  %vm1260 = vcmp.eq.s32.totalorder %v1161, %v1195
  %vm1261 = vcmp.eq.s32.totalorder %v1161, %v1199
  %vm1262 = vcmp.eq.s32.totalorder %v1161, %v1203
  %vm1263 = vcmp.eq.s32.totalorder %v1161, %v1207
  %vm1264 = vcmp.eq.s32.totalorder %v1161, %v1211
  %vm1265 = vcmp.eq.s32.totalorder %v1161, %v1215
  %vm1266 = vcmp.eq.s32.totalorder %v1161, %v1219
  %vm1267 = vcmp.eq.s32.totalorder %v1161, %v1223
  %vm1268 = vcmp.eq.s32.totalorder %v1161, %v1227
  %vm1269 = vcmp.eq.s32.totalorder %v1161, %v1231
  %vm1270 = vcmp.eq.s32.totalorder %v1161, %v1235
  %vm1271 = vcmp.eq.s32.totalorder %v1161, %v1239
  %vm1272 = vcmp.eq.s32.totalorder %v1162, %v1179
  %vm1273 = vcmp.eq.s32.totalorder %v1162, %v1183
  %vm1274 = vcmp.eq.s32.totalorder %v1162, %v1187
  %vm1275 = vcmp.eq.s32.totalorder %v1162, %v1191
  %vm1276 = vcmp.eq.s32.totalorder %v1162, %v1195
  %vm1277 = vcmp.eq.s32.totalorder %v1162, %v1199
  %vm1278 = vcmp.eq.s32.totalorder %v1162, %v1203
  %vm1279 = vcmp.eq.s32.totalorder %v1162, %v1207
  %vm1280 = vcmp.eq.s32.totalorder %v1162, %v1211
  %vm1281 = vcmp.eq.s32.totalorder %v1162, %v1215
  %vm1282 = vcmp.eq.s32.totalorder %v1162, %v1219
  %vm1283 = vcmp.eq.s32.totalorder %v1162, %v1223
  %vm1284 = vcmp.eq.s32.totalorder %v1162, %v1227
  %vm1285 = vcmp.eq.s32.totalorder %v1162, %v1231
  %vm1286 = vcmp.eq.s32.totalorder %v1162, %v1235
  %vm1287 = vcmp.eq.s32.totalorder %v1162, %v1239
  %vm1288 = vcmp.eq.s32.totalorder %v1163, %v1179
  %vm1289 = vcmp.eq.s32.totalorder %v1163, %v1183
  %vm1290 = vcmp.eq.s32.totalorder %v1163, %v1187
  %vm1291 = vcmp.eq.s32.totalorder %v1163, %v1191
  %vm1292 = vcmp.eq.s32.totalorder %v1163, %v1195
  %vm1293 = vcmp.eq.s32.totalorder %v1163, %v1199
  %vm1294 = vcmp.eq.s32.totalorder %v1163, %v1203
  %vm1295 = vcmp.eq.s32.totalorder %v1163, %v1207
  %vm1296 = vcmp.eq.s32.totalorder %v1163, %v1211
  %vm1297 = vcmp.eq.s32.totalorder %v1163, %v1215
  %vm1298 = vcmp.eq.s32.totalorder %v1163, %v1219
  %vm1299 = vcmp.eq.s32.totalorder %v1163, %v1223
  %vm1300 = vcmp.eq.s32.totalorder %v1163, %v1227
  %vm1301 = vcmp.eq.s32.totalorder %v1163, %v1231
  %vm1302 = vcmp.eq.s32.totalorder %v1163, %v1235
  %vm1303 = vcmp.eq.s32.totalorder %v1163, %v1239
  %vm1304 = vcmp.eq.s32.totalorder %v1164, %v1179
  %vm1305 = vcmp.eq.s32.totalorder %v1164, %v1183
  %vm1306 = vcmp.eq.s32.totalorder %v1164, %v1187
  %vm1307 = vcmp.eq.s32.totalorder %v1164, %v1191
  %vm1308 = vcmp.eq.s32.totalorder %v1164, %v1195
  %vm1309 = vcmp.eq.s32.totalorder %v1164, %v1199
  %vm1310 = vcmp.eq.s32.totalorder %v1164, %v1203
  %vm1311 = vcmp.eq.s32.totalorder %v1164, %v1207
  %vm1312 = vcmp.eq.s32.totalorder %v1164, %v1211
  %vm1313 = vcmp.eq.s32.totalorder %v1164, %v1215
  %vm1314 = vcmp.eq.s32.totalorder %v1164, %v1219
  %vm1315 = vcmp.eq.s32.totalorder %v1164, %v1223
  %vm1316 = vcmp.eq.s32.totalorder %v1164, %v1227
  %vm1317 = vcmp.eq.s32.totalorder %v1164, %v1231
  %vm1318 = vcmp.eq.s32.totalorder %v1164, %v1235
  %vm1319 = vcmp.eq.s32.totalorder %v1164, %v1239
  %vm1320 = vcmp.eq.s32.totalorder %v1165, %v1179
  %vm1321 = vcmp.eq.s32.totalorder %v1165, %v1183
  %vm1322 = vcmp.eq.s32.totalorder %v1165, %v1187
  %vm1323 = vcmp.eq.s32.totalorder %v1165, %v1191
  %vm1324 = vcmp.eq.s32.totalorder %v1165, %v1195
  %vm1325 = vcmp.eq.s32.totalorder %v1165, %v1199
  %vm1326 = vcmp.eq.s32.totalorder %v1165, %v1203
  %vm1327 = vcmp.eq.s32.totalorder %v1165, %v1207
  %vm1328 = vcmp.eq.s32.totalorder %v1165, %v1211
  %vm1329 = vcmp.eq.s32.totalorder %v1165, %v1215
  %vm1330 = vcmp.eq.s32.totalorder %v1165, %v1219
  %vm1331 = vcmp.eq.s32.totalorder %v1165, %v1223
  %vm1332 = vcmp.eq.s32.totalorder %v1165, %v1227
  %vm1333 = vcmp.eq.s32.totalorder %v1165, %v1231
  %vm1334 = vcmp.eq.s32.totalorder %v1165, %v1235
  %vm1335 = vcmp.eq.s32.totalorder %v1165, %v1239
  %vm1336 = vcmp.eq.s32.totalorder %v1166, %v1179
  %vm1337 = vcmp.eq.s32.totalorder %v1166, %v1183
  %vm1338 = vcmp.eq.s32.totalorder %v1166, %v1187
  %vm1339 = vcmp.eq.s32.totalorder %v1166, %v1191
  %vm1340 = vcmp.eq.s32.totalorder %v1166, %v1195
  %vm1341 = vcmp.eq.s32.totalorder %v1166, %v1199
  %vm1342 = vcmp.eq.s32.totalorder %v1166, %v1203
  %vm1343 = vcmp.eq.s32.totalorder %v1166, %v1207
  %vm1344 = vcmp.eq.s32.totalorder %v1166, %v1211
  %vm1345 = vcmp.eq.s32.totalorder %v1166, %v1215
  %vm1346 = vcmp.eq.s32.totalorder %v1166, %v1219
  %vm1347 = vcmp.eq.s32.totalorder %v1166, %v1223
  %vm1348 = vcmp.eq.s32.totalorder %v1166, %v1227
  %vm1349 = vcmp.eq.s32.totalorder %v1166, %v1231
  %vm1350 = vcmp.eq.s32.totalorder %v1166, %v1235
  %vm1351 = vcmp.eq.s32.totalorder %v1166, %v1239
  %vm1352 = vcmp.eq.s32.totalorder %v1167, %v1179
  %vm1353 = vcmp.eq.s32.totalorder %v1167, %v1183
  %vm1354 = vcmp.eq.s32.totalorder %v1167, %v1187
  %vm1355 = vcmp.eq.s32.totalorder %v1167, %v1191
  %vm1356 = vcmp.eq.s32.totalorder %v1167, %v1195
  %vm1357 = vcmp.eq.s32.totalorder %v1167, %v1199
  %vm1358 = vcmp.eq.s32.totalorder %v1167, %v1203
  %vm1359 = vcmp.eq.s32.totalorder %v1167, %v1207
  %vm1360 = vcmp.eq.s32.totalorder %v1167, %v1211
  %vm1361 = vcmp.eq.s32.totalorder %v1167, %v1215
  %vm1362 = vcmp.eq.s32.totalorder %v1167, %v1219
  %vm1363 = vcmp.eq.s32.totalorder %v1167, %v1223
  %vm1364 = vcmp.eq.s32.totalorder %v1167, %v1227
  %vm1365 = vcmp.eq.s32.totalorder %v1167, %v1231
  %vm1366 = vcmp.eq.s32.totalorder %v1167, %v1235
  %vm1367 = vcmp.eq.s32.totalorder %v1167, %v1239
  %vm1368 = vcmp.eq.s32.totalorder %v1168, %v1179
  %vm1369 = vcmp.eq.s32.totalorder %v1168, %v1183
  %vm1370 = vcmp.eq.s32.totalorder %v1168, %v1187
  %vm1371 = vcmp.eq.s32.totalorder %v1168, %v1191
  %vm1372 = vcmp.eq.s32.totalorder %v1168, %v1195
  %vm1373 = vcmp.eq.s32.totalorder %v1168, %v1199
  %vm1374 = vcmp.eq.s32.totalorder %v1168, %v1203
  %vm1375 = vcmp.eq.s32.totalorder %v1168, %v1207
  %vm1376 = vcmp.eq.s32.totalorder %v1168, %v1211
  %vm1377 = vcmp.eq.s32.totalorder %v1168, %v1215
  %vm1378 = vcmp.eq.s32.totalorder %v1168, %v1219
  %vm1379 = vcmp.eq.s32.totalorder %v1168, %v1223
  %vm1380 = vcmp.eq.s32.totalorder %v1168, %v1227
  %vm1381 = vcmp.eq.s32.totalorder %v1168, %v1231
  %vm1382 = vcmp.eq.s32.totalorder %v1168, %v1235
  %vm1383 = vcmp.eq.s32.totalorder %v1168, %v1239
  %vm1384 = vcmp.eq.s32.totalorder %v1169, %v1179
  %vm1385 = vcmp.eq.s32.totalorder %v1169, %v1183
  %vm1386 = vcmp.eq.s32.totalorder %v1169, %v1187
  %vm1387 = vcmp.eq.s32.totalorder %v1169, %v1191
  %vm1388 = vcmp.eq.s32.totalorder %v1169, %v1195
  %vm1389 = vcmp.eq.s32.totalorder %v1169, %v1199
  %vm1390 = vcmp.eq.s32.totalorder %v1169, %v1203
  %vm1391 = vcmp.eq.s32.totalorder %v1169, %v1207
  %vm1392 = vcmp.eq.s32.totalorder %v1169, %v1211
  %vm1393 = vcmp.eq.s32.totalorder %v1169, %v1215
  %vm1394 = vcmp.eq.s32.totalorder %v1169, %v1219
  %vm1395 = vcmp.eq.s32.totalorder %v1169, %v1223
  %vm1396 = vcmp.eq.s32.totalorder %v1169, %v1227
  %vm1397 = vcmp.eq.s32.totalorder %v1169, %v1231
  %vm1398 = vcmp.eq.s32.totalorder %v1169, %v1235
  %vm1399 = vcmp.eq.s32.totalorder %v1169, %v1239
  %vm1400 = vcmp.eq.s32.totalorder %v1170, %v1179
  %vm1401 = vcmp.eq.s32.totalorder %v1170, %v1183
  %vm1402 = vcmp.eq.s32.totalorder %v1170, %v1187
  %vm1403 = vcmp.eq.s32.totalorder %v1170, %v1191
  %vm1404 = vcmp.eq.s32.totalorder %v1170, %v1195
  %vm1405 = vcmp.eq.s32.totalorder %v1170, %v1199
  %vm1406 = vcmp.eq.s32.totalorder %v1170, %v1203
  %vm1407 = vcmp.eq.s32.totalorder %v1170, %v1207
  %vm1408 = vcmp.eq.s32.totalorder %v1170, %v1211
  %vm1409 = vcmp.eq.s32.totalorder %v1170, %v1215
  %vm1410 = vcmp.eq.s32.totalorder %v1170, %v1219
  %vm1411 = vcmp.eq.s32.totalorder %v1170, %v1223
  %vm1412 = vcmp.eq.s32.totalorder %v1170, %v1227
  %vm1413 = vcmp.eq.s32.totalorder %v1170, %v1231
  %vm1414 = vcmp.eq.s32.totalorder %v1170, %v1235
  %vm1415 = vcmp.eq.s32.totalorder %v1170, %v1239
  %vm1416 = vcmp.eq.s32.totalorder %v1171, %v1179
  %vm1417 = vcmp.eq.s32.totalorder %v1171, %v1183
  %vm1418 = vcmp.eq.s32.totalorder %v1171, %v1187
  %vm1419 = vcmp.eq.s32.totalorder %v1171, %v1191
  %vm1420 = vcmp.eq.s32.totalorder %v1171, %v1195
  %vm1421 = vcmp.eq.s32.totalorder %v1171, %v1199
  %vm1422 = vcmp.eq.s32.totalorder %v1171, %v1203
  %vm1423 = vcmp.eq.s32.totalorder %v1171, %v1207
  %vm1424 = vcmp.eq.s32.totalorder %v1171, %v1211
  %vm1425 = vcmp.eq.s32.totalorder %v1171, %v1215
  %vm1426 = vcmp.eq.s32.totalorder %v1171, %v1219
  %vm1427 = vcmp.eq.s32.totalorder %v1171, %v1223
  %vm1428 = vcmp.eq.s32.totalorder %v1171, %v1227
  %vm1429 = vcmp.eq.s32.totalorder %v1171, %v1231
  %vm1430 = vcmp.eq.s32.totalorder %v1171, %v1235
  %vm1431 = vcmp.eq.s32.totalorder %v1171, %v1239
  %vm1432 = vcmp.eq.s32.totalorder %v1172, %v1179
  %vm1433 = vcmp.eq.s32.totalorder %v1172, %v1183
  %vm1434 = vcmp.eq.s32.totalorder %v1172, %v1187
  %vm1435 = vcmp.eq.s32.totalorder %v1172, %v1191
  %vm1436 = vcmp.eq.s32.totalorder %v1172, %v1195
  %vm1437 = vcmp.eq.s32.totalorder %v1172, %v1199
  %vm1438 = vcmp.eq.s32.totalorder %v1172, %v1203
  %vm1439 = vcmp.eq.s32.totalorder %v1172, %v1207
  %vm1440 = vcmp.eq.s32.totalorder %v1172, %v1211
  %vm1441 = vcmp.eq.s32.totalorder %v1172, %v1215
  %vm1442 = vcmp.eq.s32.totalorder %v1172, %v1219
  %vm1443 = vcmp.eq.s32.totalorder %v1172, %v1223
  %vm1444 = vcmp.eq.s32.totalorder %v1172, %v1227
  %vm1445 = vcmp.eq.s32.totalorder %v1172, %v1231
  %vm1446 = vcmp.eq.s32.totalorder %v1172, %v1235
  %vm1447 = vcmp.eq.s32.totalorder %v1172, %v1239
  %vm1448 = vcmp.eq.s32.totalorder %v1173, %v1179
  %vm1449 = vcmp.eq.s32.totalorder %v1173, %v1183
  %vm1450 = vcmp.eq.s32.totalorder %v1173, %v1187
  %vm1451 = vcmp.eq.s32.totalorder %v1173, %v1191
  %vm1452 = vcmp.eq.s32.totalorder %v1173, %v1195
  %vm1453 = vcmp.eq.s32.totalorder %v1173, %v1199
  %vm1454 = vcmp.eq.s32.totalorder %v1173, %v1203
  %vm1455 = vcmp.eq.s32.totalorder %v1173, %v1207
  %vm1456 = vcmp.eq.s32.totalorder %v1173, %v1211
  %vm1457 = vcmp.eq.s32.totalorder %v1173, %v1215
  %vm1458 = vcmp.eq.s32.totalorder %v1173, %v1219
  %vm1459 = vcmp.eq.s32.totalorder %v1173, %v1223
  %vm1460 = vcmp.eq.s32.totalorder %v1173, %v1227
  %vm1461 = vcmp.eq.s32.totalorder %v1173, %v1231
  %vm1462 = vcmp.eq.s32.totalorder %v1173, %v1235
  %vm1463 = vcmp.eq.s32.totalorder %v1173, %v1239
  %vm1464 = vcmp.eq.s32.totalorder %v1174, %v1179
  %vm1465 = vcmp.eq.s32.totalorder %v1174, %v1183
  %vm1466 = vcmp.eq.s32.totalorder %v1174, %v1187
  %vm1467 = vcmp.eq.s32.totalorder %v1174, %v1191
  %vm1468 = vcmp.eq.s32.totalorder %v1174, %v1195
  %vm1469 = vcmp.eq.s32.totalorder %v1174, %v1199
  %vm1470 = vcmp.eq.s32.totalorder %v1174, %v1203
  %vm1471 = vcmp.eq.s32.totalorder %v1174, %v1207
  %vm1472 = vcmp.eq.s32.totalorder %v1174, %v1211
  %vm1473 = vcmp.eq.s32.totalorder %v1174, %v1215
  %vm1474 = vcmp.eq.s32.totalorder %v1174, %v1219
  %vm1475 = vcmp.eq.s32.totalorder %v1174, %v1223
  %vm1476 = vcmp.eq.s32.totalorder %v1174, %v1227
  %vm1477 = vcmp.eq.s32.totalorder %v1174, %v1231
  %vm1478 = vcmp.eq.s32.totalorder %v1174, %v1235
  %vm1479 = vcmp.eq.s32.totalorder %v1174, %v1239
  %vm1480 = vcmp.eq.s32.totalorder %v1175, %v1179
  %vm1481 = vcmp.eq.s32.totalorder %v1175, %v1183
  %vm1482 = vcmp.eq.s32.totalorder %v1175, %v1187
  %vm1483 = vcmp.eq.s32.totalorder %v1175, %v1191
  %vm1484 = vcmp.eq.s32.totalorder %v1175, %v1195
  %vm1485 = vcmp.eq.s32.totalorder %v1175, %v1199
  %vm1486 = vcmp.eq.s32.totalorder %v1175, %v1203
  %vm1487 = vcmp.eq.s32.totalorder %v1175, %v1207
  %vm1488 = vcmp.eq.s32.totalorder %v1175, %v1211
  %vm1489 = vcmp.eq.s32.totalorder %v1175, %v1215
  %vm1490 = vcmp.eq.s32.totalorder %v1175, %v1219
  %vm1491 = vcmp.eq.s32.totalorder %v1175, %v1223
  %vm1492 = vcmp.eq.s32.totalorder %v1175, %v1227
  %vm1493 = vcmp.eq.s32.totalorder %v1175, %v1231
  %vm1494 = vcmp.eq.s32.totalorder %v1175, %v1235
  %vm1495 = vcmp.eq.s32.totalorder %v1175, %v1239
  %v1496 = vsel %vm1240, 1, 0
  %v1497 = vsel %vm1241, 1, 0
  %v1498 = vsel %vm1242, 1, 0
  %v1499 = vsel %vm1243, 1, 0
  %v1500 = vsel %vm1244, 1, 0
  %v1501 = vsel %vm1245, 1, 0
  %v1502 = vsel %vm1246, 1, 0
  %v1503 = vsel %vm1247, 1, 0
  %v1504 = vsel %vm1248, 1, 0
  %v1505 = vsel %vm1249, 1, 0
  %v1506 = vsel %vm1250, 1, 0
  %v1507 = vsel %vm1251, 1, 0
  %v1508 = vsel %vm1252, 1, 0
  %v1509 = vsel %vm1253, 1, 0
  %v1510 = vsel %vm1254, 1, 0
  %v1511 = vsel %vm1255, 1, 0
  %v1512 = vsel %vm1256, 1, 0
  %v1513 = vsel %vm1257, 1, 0
  %v1514 = vsel %vm1258, 1, 0
  %v1515 = vsel %vm1259, 1, 0
  %v1516 = vsel %vm1260, 1, 0
  %v1517 = vsel %vm1261, 1, 0
  %v1518 = vsel %vm1262, 1, 0
  %v1519 = vsel %vm1263, 1, 0
  %v1520 = vsel %vm1264, 1, 0
  %v1521 = vsel %vm1265, 1, 0
  %v1522 = vsel %vm1266, 1, 0
  %v1523 = vsel %vm1267, 1, 0
  %v1524 = vsel %vm1268, 1, 0
  %v1525 = vsel %vm1269, 1, 0
  %v1526 = vsel %vm1270, 1, 0
  %v1527 = vsel %vm1271, 1, 0
  %v1528 = vsel %vm1272, 1, 0
  %v1529 = vsel %vm1273, 1, 0
  %v1530 = vsel %vm1274, 1, 0
  %v1531 = vsel %vm1275, 1, 0
  %v1532 = vsel %vm1276, 1, 0
  %v1533 = vsel %vm1277, 1, 0
  %v1534 = vsel %vm1278, 1, 0
  %v1535 = vsel %vm1279, 1, 0
  %v1536 = vsel %vm1280, 1, 0
  %v1537 = vsel %vm1281, 1, 0
  %v1538 = vsel %vm1282, 1, 0
  %v1539 = vsel %vm1283, 1, 0
  %v1540 = vsel %vm1284, 1, 0
  %v1541 = vsel %vm1285, 1, 0
  %v1542 = vsel %vm1286, 1, 0
  %v1543 = vsel %vm1287, 1, 0
  %v1544 = vsel %vm1288, 1, 0
  %v1545 = vsel %vm1289, 1, 0
  %v1546 = vsel %vm1290, 1, 0
  %v1547 = vsel %vm1291, 1, 0
  %v1548 = vsel %vm1292, 1, 0
  %v1549 = vsel %vm1293, 1, 0
  %v1550 = vsel %vm1294, 1, 0
  %v1551 = vsel %vm1295, 1, 0
  %v1552 = vsel %vm1296, 1, 0
  %v1553 = vsel %vm1297, 1, 0
  %v1554 = vsel %vm1298, 1, 0
  %v1555 = vsel %vm1299, 1, 0
  %v1556 = vsel %vm1300, 1, 0
  %v1557 = vsel %vm1301, 1, 0
  %v1558 = vsel %vm1302, 1, 0
  %v1559 = vsel %vm1303, 1, 0
  %v1560 = vsel %vm1304, 1, 0
  %v1561 = vsel %vm1305, 1, 0
  %v1562 = vsel %vm1306, 1, 0
  %v1563 = vsel %vm1307, 1, 0
  %v1564 = vsel %vm1308, 1, 0
  %v1565 = vsel %vm1309, 1, 0
  %v1566 = vsel %vm1310, 1, 0
  %v1567 = vsel %vm1311, 1, 0
  %v1568 = vsel %vm1312, 1, 0
  %v1569 = vsel %vm1313, 1, 0
  %v1570 = vsel %vm1314, 1, 0
  %v1571 = vsel %vm1315, 1, 0
  %v1572 = vsel %vm1316, 1, 0
  %v1573 = vsel %vm1317, 1, 0
  %v1574 = vsel %vm1318, 1, 0
  %v1575 = vsel %vm1319, 1, 0
  %v1576 = vsel %vm1320, 1, 0
  %v1577 = vsel %vm1321, 1, 0
  %v1578 = vsel %vm1322, 1, 0
  %v1579 = vsel %vm1323, 1, 0
  %v1580 = vsel %vm1324, 1, 0
  %v1581 = vsel %vm1325, 1, 0
  %v1582 = vsel %vm1326, 1, 0
  %v1583 = vsel %vm1327, 1, 0
  %v1584 = vsel %vm1328, 1, 0
  %v1585 = vsel %vm1329, 1, 0
  %v1586 = vsel %vm1330, 1, 0
  %v1587 = vsel %vm1331, 1, 0
  %v1588 = vsel %vm1332, 1, 0
  %v1589 = vsel %vm1333, 1, 0
  %v1590 = vsel %vm1334, 1, 0
  %v1591 = vsel %vm1335, 1, 0
  %v1592 = vsel %vm1336, 1, 0
  %v1593 = vsel %vm1337, 1, 0
  %v1594 = vsel %vm1338, 1, 0
  %v1595 = vsel %vm1339, 1, 0
  %v1596 = vsel %vm1340, 1, 0
  %v1597 = vsel %vm1341, 1, 0
  %v1598 = vsel %vm1342, 1, 0
  %v1599 = vsel %vm1343, 1, 0
  %v1600 = vsel %vm1344, 1, 0
  %v1601 = vsel %vm1345, 1, 0
  %v1602 = vsel %vm1346, 1, 0
  %v1603 = vsel %vm1347, 1, 0
  %v1604 = vsel %vm1348, 1, 0
  %v1605 = vsel %vm1349, 1, 0
  %v1606 = vsel %vm1350, 1, 0
  %v1607 = vsel %vm1351, 1, 0
  %v1608 = vsel %vm1352, 1, 0
  %v1609 = vsel %vm1353, 1, 0
  %v1610 = vsel %vm1354, 1, 0
  %v1611 = vsel %vm1355, 1, 0
  %v1612 = vsel %vm1356, 1, 0
  %v1613 = vsel %vm1357, 1, 0
  %v1614 = vsel %vm1358, 1, 0
  %v1615 = vsel %vm1359, 1, 0
  %v1616 = vsel %vm1360, 1, 0
  %v1617 = vsel %vm1361, 1, 0
  %v1618 = vsel %vm1362, 1, 0
  %v1619 = vsel %vm1363, 1, 0
  %v1620 = vsel %vm1364, 1, 0
  %v1621 = vsel %vm1365, 1, 0
  %v1622 = vsel %vm1366, 1, 0
  %v1623 = vsel %vm1367, 1, 0
  %v1624 = vsel %vm1368, 1, 0
  %v1625 = vsel %vm1369, 1, 0
  %v1626 = vsel %vm1370, 1, 0
  %v1627 = vsel %vm1371, 1, 0
  %v1628 = vsel %vm1372, 1, 0
  %v1629 = vsel %vm1373, 1, 0
  %v1630 = vsel %vm1374, 1, 0
  %v1631 = vsel %vm1375, 1, 0
  %v1632 = vsel %vm1376, 1, 0
  %v1633 = vsel %vm1377, 1, 0
  %v1634 = vsel %vm1378, 1, 0
  %v1635 = vsel %vm1379, 1, 0
  %v1636 = vsel %vm1380, 1, 0
  %v1637 = vsel %vm1381, 1, 0
  %v1638 = vsel %vm1382, 1, 0
  %v1639 = vsel %vm1383, 1, 0
  %v1640 = vsel %vm1384, 1, 0
  %v1641 = vsel %vm1385, 1, 0
  %v1642 = vsel %vm1386, 1, 0
  %v1643 = vsel %vm1387, 1, 0
  %v1644 = vsel %vm1388, 1, 0
  %v1645 = vsel %vm1389, 1, 0
  %v1646 = vsel %vm1390, 1, 0
  %v1647 = vsel %vm1391, 1, 0
  %v1648 = vsel %vm1392, 1, 0
  %v1649 = vsel %vm1393, 1, 0
  %v1650 = vsel %vm1394, 1, 0
  %v1651 = vsel %vm1395, 1, 0
  %v1652 = vsel %vm1396, 1, 0
  %v1653 = vsel %vm1397, 1, 0
  %v1654 = vsel %vm1398, 1, 0
  %v1655 = vsel %vm1399, 1, 0
  %v1656 = vsel %vm1400, 1, 0
  %v1657 = vsel %vm1401, 1, 0
  %v1658 = vsel %vm1402, 1, 0
  %v1659 = vsel %vm1403, 1, 0
  %v1660 = vsel %vm1404, 1, 0
  %v1661 = vsel %vm1405, 1, 0
  %v1662 = vsel %vm1406, 1, 0
  %v1663 = vsel %vm1407, 1, 0
  %v1664 = vsel %vm1408, 1, 0
  %v1665 = vsel %vm1409, 1, 0
  %v1666 = vsel %vm1410, 1, 0
  %v1667 = vsel %vm1411, 1, 0
  %v1668 = vsel %vm1412, 1, 0
  %v1669 = vsel %vm1413, 1, 0
  %v1670 = vsel %vm1414, 1, 0
  %v1671 = vsel %vm1415, 1, 0
  %v1672 = vsel %vm1416, 1, 0
  %v1673 = vsel %vm1417, 1, 0
  %v1674 = vsel %vm1418, 1, 0
  %v1675 = vsel %vm1419, 1, 0
  %v1676 = vsel %vm1420, 1, 0
  %v1677 = vsel %vm1421, 1, 0
  %v1678 = vsel %vm1422, 1, 0
  %v1679 = vsel %vm1423, 1, 0
  %v1680 = vsel %vm1424, 1, 0
  %v1681 = vsel %vm1425, 1, 0
  %v1682 = vsel %vm1426, 1, 0
  %v1683 = vsel %vm1427, 1, 0
  %v1684 = vsel %vm1428, 1, 0
  %v1685 = vsel %vm1429, 1, 0
  %v1686 = vsel %vm1430, 1, 0
  %v1687 = vsel %vm1431, 1, 0
  %v1688 = vsel %vm1432, 1, 0
  %v1689 = vsel %vm1433, 1, 0
  %v1690 = vsel %vm1434, 1, 0
  %v1691 = vsel %vm1435, 1, 0
  %v1692 = vsel %vm1436, 1, 0
  %v1693 = vsel %vm1437, 1, 0
  %v1694 = vsel %vm1438, 1, 0
  %v1695 = vsel %vm1439, 1, 0
  %v1696 = vsel %vm1440, 1, 0
  %v1697 = vsel %vm1441, 1, 0
  %v1698 = vsel %vm1442, 1, 0
  %v1699 = vsel %vm1443, 1, 0
  %v1700 = vsel %vm1444, 1, 0
  %v1701 = vsel %vm1445, 1, 0
  %v1702 = vsel %vm1446, 1, 0
  %v1703 = vsel %vm1447, 1, 0
  %v1704 = vsel %vm1448, 1, 0
  %v1705 = vsel %vm1449, 1, 0
  %v1706 = vsel %vm1450, 1, 0
  %v1707 = vsel %vm1451, 1, 0
  %v1708 = vsel %vm1452, 1, 0
  %v1709 = vsel %vm1453, 1, 0
  %v1710 = vsel %vm1454, 1, 0
  %v1711 = vsel %vm1455, 1, 0
  %v1712 = vsel %vm1456, 1, 0
  %v1713 = vsel %vm1457, 1, 0
  %v1714 = vsel %vm1458, 1, 0
  %v1715 = vsel %vm1459, 1, 0
  %v1716 = vsel %vm1460, 1, 0
  %v1717 = vsel %vm1461, 1, 0
  %v1718 = vsel %vm1462, 1, 0
  %v1719 = vsel %vm1463, 1, 0
  %v1720 = vsel %vm1464, 1, 0
  %v1721 = vsel %vm1465, 1, 0
  %v1722 = vsel %vm1466, 1, 0
  %v1723 = vsel %vm1467, 1, 0
  %v1724 = vsel %vm1468, 1, 0
  %v1725 = vsel %vm1469, 1, 0
  %v1726 = vsel %vm1470, 1, 0
  %v1727 = vsel %vm1471, 1, 0
  %v1728 = vsel %vm1472, 1, 0
  %v1729 = vsel %vm1473, 1, 0
  %v1730 = vsel %vm1474, 1, 0
  %v1731 = vsel %vm1475, 1, 0
  %v1732 = vsel %vm1476, 1, 0
  %v1733 = vsel %vm1477, 1, 0
  %v1734 = vsel %vm1478, 1, 0
  %v1735 = vsel %vm1479, 1, 0
  %v1736 = vsel %vm1480, 1, 0
  %v1737 = vsel %vm1481, 1, 0
  %v1738 = vsel %vm1482, 1, 0
  %v1739 = vsel %vm1483, 1, 0
  %v1740 = vsel %vm1484, 1, 0
  %v1741 = vsel %vm1485, 1, 0
  %v1742 = vsel %vm1486, 1, 0
  %v1743 = vsel %vm1487, 1, 0
  %v1744 = vsel %vm1488, 1, 0
  %v1745 = vsel %vm1489, 1, 0
  %v1746 = vsel %vm1490, 1, 0
  %v1747 = vsel %vm1491, 1, 0
  %v1748 = vsel %vm1492, 1, 0
  %v1749 = vsel %vm1493, 1, 0
  %v1750 = vsel %vm1494, 1, 0
  %v1751 = vsel %vm1495, 1, 0
  %v1752 = vcvt.s32.f32 %v1496
  %v1753 = vcvt.s32.f32 %v1497
  %v1754 = vcvt.s32.f32 %v1498
  %v1755 = vcvt.s32.f32 %v1499
  %v1756 = vcvt.s32.f32 %v1500
  %v1757 = vcvt.s32.f32 %v1501
  %v1758 = vcvt.s32.f32 %v1502
  %v1759 = vcvt.s32.f32 %v1503
  %v1760 = vcvt.s32.f32 %v1504
  %v1761 = vcvt.s32.f32 %v1505
  %v1762 = vcvt.s32.f32 %v1506
  %v1763 = vcvt.s32.f32 %v1507
  %v1764 = vcvt.s32.f32 %v1508
  %v1765 = vcvt.s32.f32 %v1509
  %v1766 = vcvt.s32.f32 %v1510
  %v1767 = vcvt.s32.f32 %v1511
  %v1768 = vcvt.s32.f32 %v1512
  %v1769 = vcvt.s32.f32 %v1513
  %v1770 = vcvt.s32.f32 %v1514
  %v1771 = vcvt.s32.f32 %v1515
  %v1772 = vcvt.s32.f32 %v1516
  %v1773 = vcvt.s32.f32 %v1517
  %v1774 = vcvt.s32.f32 %v1518
  %v1775 = vcvt.s32.f32 %v1519
  %v1776 = vcvt.s32.f32 %v1520
  %v1777 = vcvt.s32.f32 %v1521
  %v1778 = vcvt.s32.f32 %v1522
  %v1779 = vcvt.s32.f32 %v1523
  %v1780 = vcvt.s32.f32 %v1524
  %v1781 = vcvt.s32.f32 %v1525
  %v1782 = vcvt.s32.f32 %v1526
  %v1783 = vcvt.s32.f32 %v1527
  %v1784 = vcvt.s32.f32 %v1528
  %v1785 = vcvt.s32.f32 %v1529
  %v1786 = vcvt.s32.f32 %v1530
  %v1787 = vcvt.s32.f32 %v1531
  %v1788 = vcvt.s32.f32 %v1532
  %v1789 = vcvt.s32.f32 %v1533
  %v1790 = vcvt.s32.f32 %v1534
  %v1791 = vcvt.s32.f32 %v1535
  %v1792 = vcvt.s32.f32 %v1536
  %v1793 = vcvt.s32.f32 %v1537
  %v1794 = vcvt.s32.f32 %v1538
  %v1795 = vcvt.s32.f32 %v1539
  %v1796 = vcvt.s32.f32 %v1540
  %v1797 = vcvt.s32.f32 %v1541
  %v1798 = vcvt.s32.f32 %v1542
  %v1799 = vcvt.s32.f32 %v1543
  %v1800 = vcvt.s32.f32 %v1544
  %v1801 = vcvt.s32.f32 %v1545
  %v1802 = vcvt.s32.f32 %v1546
  %v1803 = vcvt.s32.f32 %v1547
  %v1804 = vcvt.s32.f32 %v1548
  %v1805 = vcvt.s32.f32 %v1549
  %v1806 = vcvt.s32.f32 %v1550
  %v1807 = vcvt.s32.f32 %v1551
  %v1808 = vcvt.s32.f32 %v1552
  %v1809 = vcvt.s32.f32 %v1553
  %v1810 = vcvt.s32.f32 %v1554
  %v1811 = vcvt.s32.f32 %v1555
  %v1812 = vcvt.s32.f32 %v1556
  %v1813 = vcvt.s32.f32 %v1557
  %v1814 = vcvt.s32.f32 %v1558
  %v1815 = vcvt.s32.f32 %v1559
  %v1816 = vcvt.s32.f32 %v1560
  %v1817 = vcvt.s32.f32 %v1561
  %v1818 = vcvt.s32.f32 %v1562
  %v1819 = vcvt.s32.f32 %v1563
  %v1820 = vcvt.s32.f32 %v1564
  %v1821 = vcvt.s32.f32 %v1565
  %v1822 = vcvt.s32.f32 %v1566
  %v1823 = vcvt.s32.f32 %v1567
  %v1824 = vcvt.s32.f32 %v1568
  %v1825 = vcvt.s32.f32 %v1569
  %v1826 = vcvt.s32.f32 %v1570
  %v1827 = vcvt.s32.f32 %v1571
  %v1828 = vcvt.s32.f32 %v1572
  %v1829 = vcvt.s32.f32 %v1573
  %v1830 = vcvt.s32.f32 %v1574
  %v1831 = vcvt.s32.f32 %v1575
  %v1832 = vcvt.s32.f32 %v1576
  %v1833 = vcvt.s32.f32 %v1577
  %v1834 = vcvt.s32.f32 %v1578
  %v1835 = vcvt.s32.f32 %v1579
  %v1836 = vcvt.s32.f32 %v1580
  %v1837 = vcvt.s32.f32 %v1581
  %v1838 = vcvt.s32.f32 %v1582
  %v1839 = vcvt.s32.f32 %v1583
  %v1840 = vcvt.s32.f32 %v1584
  %v1841 = vcvt.s32.f32 %v1585
  %v1842 = vcvt.s32.f32 %v1586
  %v1843 = vcvt.s32.f32 %v1587
  %v1844 = vcvt.s32.f32 %v1588
  %v1845 = vcvt.s32.f32 %v1589
  %v1846 = vcvt.s32.f32 %v1590
  %v1847 = vcvt.s32.f32 %v1591
  %v1848 = vcvt.s32.f32 %v1592
  %v1849 = vcvt.s32.f32 %v1593
  %v1850 = vcvt.s32.f32 %v1594
  %v1851 = vcvt.s32.f32 %v1595
  %v1852 = vcvt.s32.f32 %v1596
  %v1853 = vcvt.s32.f32 %v1597
  %v1854 = vcvt.s32.f32 %v1598
  %v1855 = vcvt.s32.f32 %v1599
  %v1856 = vcvt.s32.f32 %v1600
  %v1857 = vcvt.s32.f32 %v1601
  %v1858 = vcvt.s32.f32 %v1602
  %v1859 = vcvt.s32.f32 %v1603
  %v1860 = vcvt.s32.f32 %v1604
  %v1861 = vcvt.s32.f32 %v1605
  %v1862 = vcvt.s32.f32 %v1606
  %v1863 = vcvt.s32.f32 %v1607
  %v1864 = vcvt.s32.f32 %v1608
  %v1865 = vcvt.s32.f32 %v1609
  %v1866 = vcvt.s32.f32 %v1610
  %v1867 = vcvt.s32.f32 %v1611
  %v1868 = vcvt.s32.f32 %v1612
  %v1869 = vcvt.s32.f32 %v1613
  %v1870 = vcvt.s32.f32 %v1614
  %v1871 = vcvt.s32.f32 %v1615
  %v1872 = vcvt.s32.f32 %v1616
  %v1873 = vcvt.s32.f32 %v1617
  %v1874 = vcvt.s32.f32 %v1618
  %v1875 = vcvt.s32.f32 %v1619
  %v1876 = vcvt.s32.f32 %v1620
  %v1877 = vcvt.s32.f32 %v1621
  %v1878 = vcvt.s32.f32 %v1622
  %v1879 = vcvt.s32.f32 %v1623
  %v1880 = vcvt.s32.f32 %v1624
  %v1881 = vcvt.s32.f32 %v1625
  %v1882 = vcvt.s32.f32 %v1626
  %v1883 = vcvt.s32.f32 %v1627
  %v1884 = vcvt.s32.f32 %v1628
  %v1885 = vcvt.s32.f32 %v1629
  %v1886 = vcvt.s32.f32 %v1630
  %v1887 = vcvt.s32.f32 %v1631
  %v1888 = vcvt.s32.f32 %v1632
  %v1889 = vcvt.s32.f32 %v1633
  %v1890 = vcvt.s32.f32 %v1634
  %v1891 = vcvt.s32.f32 %v1635
  %v1892 = vcvt.s32.f32 %v1636
  %v1893 = vcvt.s32.f32 %v1637
  %v1894 = vcvt.s32.f32 %v1638
  %v1895 = vcvt.s32.f32 %v1639
  %v1896 = vcvt.s32.f32 %v1640
  %v1897 = vcvt.s32.f32 %v1641
  %v1898 = vcvt.s32.f32 %v1642
  %v1899 = vcvt.s32.f32 %v1643
  %v1900 = vcvt.s32.f32 %v1644
  %v1901 = vcvt.s32.f32 %v1645
  %v1902 = vcvt.s32.f32 %v1646
  %v1903 = vcvt.s32.f32 %v1647
  %v1904 = vcvt.s32.f32 %v1648
  %v1905 = vcvt.s32.f32 %v1649
  %v1906 = vcvt.s32.f32 %v1650
  %v1907 = vcvt.s32.f32 %v1651
  %v1908 = vcvt.s32.f32 %v1652
  %v1909 = vcvt.s32.f32 %v1653
  %v1910 = vcvt.s32.f32 %v1654
  %v1911 = vcvt.s32.f32 %v1655
  %v1912 = vcvt.s32.f32 %v1656
  %v1913 = vcvt.s32.f32 %v1657
  %v1914 = vcvt.s32.f32 %v1658
  %v1915 = vcvt.s32.f32 %v1659
  %v1916 = vcvt.s32.f32 %v1660
  %v1917 = vcvt.s32.f32 %v1661
  %v1918 = vcvt.s32.f32 %v1662
  %v1919 = vcvt.s32.f32 %v1663
  %v1920 = vcvt.s32.f32 %v1664
  %v1921 = vcvt.s32.f32 %v1665
  %v1922 = vcvt.s32.f32 %v1666
  %v1923 = vcvt.s32.f32 %v1667
  %v1924 = vcvt.s32.f32 %v1668
  %v1925 = vcvt.s32.f32 %v1669
  %v1926 = vcvt.s32.f32 %v1670
  %v1927 = vcvt.s32.f32 %v1671
  %v1928 = vcvt.s32.f32 %v1672
  %v1929 = vcvt.s32.f32 %v1673
  %v1930 = vcvt.s32.f32 %v1674
  %v1931 = vcvt.s32.f32 %v1675
  %v1932 = vcvt.s32.f32 %v1676
  %v1933 = vcvt.s32.f32 %v1677
  %v1934 = vcvt.s32.f32 %v1678
  %v1935 = vcvt.s32.f32 %v1679
  %v1936 = vcvt.s32.f32 %v1680
  %v1937 = vcvt.s32.f32 %v1681
  %v1938 = vcvt.s32.f32 %v1682
  %v1939 = vcvt.s32.f32 %v1683
  %v1940 = vcvt.s32.f32 %v1684
  %v1941 = vcvt.s32.f32 %v1685
  %v1942 = vcvt.s32.f32 %v1686
  %v1943 = vcvt.s32.f32 %v1687
  %v1944 = vcvt.s32.f32 %v1688
  %v1945 = vcvt.s32.f32 %v1689
  %v1946 = vcvt.s32.f32 %v1690
  %v1947 = vcvt.s32.f32 %v1691
  %v1948 = vcvt.s32.f32 %v1692
  %v1949 = vcvt.s32.f32 %v1693
  %v1950 = vcvt.s32.f32 %v1694
  %v1951 = vcvt.s32.f32 %v1695
  %v1952 = vcvt.s32.f32 %v1696
  %v1953 = vcvt.s32.f32 %v1697
  %v1954 = vcvt.s32.f32 %v1698
  %v1955 = vcvt.s32.f32 %v1699
  %v1956 = vcvt.s32.f32 %v1700
  %v1957 = vcvt.s32.f32 %v1701
  %v1958 = vcvt.s32.f32 %v1702
  %v1959 = vcvt.s32.f32 %v1703
  %v1960 = vcvt.s32.f32 %v1704
  %v1961 = vcvt.s32.f32 %v1705
  %v1962 = vcvt.s32.f32 %v1706
  %v1963 = vcvt.s32.f32 %v1707
  %v1964 = vcvt.s32.f32 %v1708
  %v1965 = vcvt.s32.f32 %v1709
  %v1966 = vcvt.s32.f32 %v1710
  %v1967 = vcvt.s32.f32 %v1711
  %v1968 = vcvt.s32.f32 %v1712
  %v1969 = vcvt.s32.f32 %v1713
  %v1970 = vcvt.s32.f32 %v1714
  %v1971 = vcvt.s32.f32 %v1715
  %v1972 = vcvt.s32.f32 %v1716
  %v1973 = vcvt.s32.f32 %v1717
  %v1974 = vcvt.s32.f32 %v1718
  %v1975 = vcvt.s32.f32 %v1719
  %v1976 = vcvt.s32.f32 %v1720
  %v1977 = vcvt.s32.f32 %v1721
  %v1978 = vcvt.s32.f32 %v1722
  %v1979 = vcvt.s32.f32 %v1723
  %v1980 = vcvt.s32.f32 %v1724
  %v1981 = vcvt.s32.f32 %v1725
  %v1982 = vcvt.s32.f32 %v1726
  %v1983 = vcvt.s32.f32 %v1727
  %v1984 = vcvt.s32.f32 %v1728
  %v1985 = vcvt.s32.f32 %v1729
  %v1986 = vcvt.s32.f32 %v1730
  %v1987 = vcvt.s32.f32 %v1731
  %v1988 = vcvt.s32.f32 %v1732
  %v1989 = vcvt.s32.f32 %v1733
  %v1990 = vcvt.s32.f32 %v1734
  %v1991 = vcvt.s32.f32 %v1735
  %v1992 = vcvt.s32.f32 %v1736
  %v1993 = vcvt.s32.f32 %v1737
  %v1994 = vcvt.s32.f32 %v1738
  %v1995 = vcvt.s32.f32 %v1739
  %v1996 = vcvt.s32.f32 %v1740
  %v1997 = vcvt.s32.f32 %v1741
  %v1998 = vcvt.s32.f32 %v1742
  %v1999 = vcvt.s32.f32 %v1743
  %v2000 = vcvt.s32.f32 %v1744
  %v2001 = vcvt.s32.f32 %v1745
  %v2002 = vcvt.s32.f32 %v1746
  %v2003 = vcvt.s32.f32 %v1747
  %v2004 = vcvt.s32.f32 %v1748
  %v2005 = vcvt.s32.f32 %v1749
  %v2006 = vcvt.s32.f32 %v1750
  %v2007 = vcvt.s32.f32 %v1751
  %2008 = vmatprep.subr.mxu0 %v1753
  %2009 = vmatpush1.xpose.msra.mxu0 %v1752
  %2010 = vmatprep.subr.mxu0 %v1769
  %2011 = vmatpush1.xpose.msra.mxu0 %v1768
  %2012 = vmatprep.subr.mxu0 %v1785
  %2013 = vmatpush1.xpose.msra.mxu0 %v1784
  %2014 = vmatprep.subr.mxu0 %v1801
  %2015 = vmatpush1.xpose.msra.mxu0 %v1800
  %2016 = vmatprep.subr.mxu0 %v1817
  %2017 = vmatpush1.xpose.msra.mxu0 %v1816
  %2018 = vmatprep.subr.mxu0 %v1833
  %2019 = vmatpush1.xpose.msra.mxu0 %v1832
  %2020 = vmatprep.subr.mxu0 %v1849
  %2021 = vmatpush1.xpose.msra.mxu0 %v1848
  %2022 = vmatprep.subr.mxu0 %v1865
  %2023 = vmatpush1.xpose.msra.mxu0 %v1864
  %2024 = vmatprep.subr.mxu0 %v1881
  %2025 = vmatpush1.xpose.msra.mxu0 %v1880
  %2026 = vmatprep.subr.mxu0 %v1897
  %2027 = vmatpush1.xpose.msra.mxu0 %v1896
  %2028 = vmatprep.subr.mxu0 %v1913
  %2029 = vmatpush1.xpose.msra.mxu0 %v1912
  %2030 = vmatprep.subr.mxu0 %v1929
  %2031 = vmatpush1.xpose.msra.mxu0 %v1928
  %2032 = vmatprep.subr.mxu0 %v1945
  %2033 = vmatpush1.xpose.msra.mxu0 %v1944
  %2034 = vmatprep.subr.mxu0 %v1961
  %2035 = vmatpush1.xpose.msra.mxu0 %v1960
  %2036 = vmatprep.subr.mxu0 %v1977
  %2037 = vmatpush1.xpose.msra.mxu0 %v1976
  %2038 = vmatprep.subr.mxu0 %v1993
  %2039 = vmatpush1.xpose.msra.mxu0 %v1992
  %2040 = vmatprep.subr.mxu0 0.0
  %2041 = vmatpush1.xpose.msra.mxu0 0.0
  %2042 = vmatprep.subr.mxu0 0.0
  %2043 = vmatpush1.xpose.msra.mxu0 0.0
  %2044 = vmatprep.subr.mxu0 0.0
  %2045 = vmatpush1.xpose.msra.mxu0 0.0
  %2046 = vmatprep.subr.mxu0 0.0
  %2047 = vmatpush1.xpose.msra.mxu0 0.0
  %2048 = vmatprep.subr.mxu0 0.0
  %2049 = vmatpush1.xpose.msra.mxu0 0.0
  %2050 = vmatprep.subr.mxu0 0.0
  %2051 = vmatpush1.xpose.msra.mxu0 0.0
  %2052 = vmatprep.subr.mxu0 0.0
  %2053 = vmatpush1.xpose.msra.mxu0 0.0
  %2054 = vmatprep.subr.mxu0 0.0
  %2055 = vmatpush1.xpose.msra.mxu0 0.0
  %2056 = vmatprep.subr.mxu0 0.0
  %2057 = vmatpush1.xpose.msra.mxu0 0.0
  %2058 = vmatprep.subr.mxu0 0.0
  %2059 = vmatpush1.xpose.msra.mxu0 0.0
  %2060 = vmatprep.subr.mxu0 0.0
  %2061 = vmatpush1.xpose.msra.mxu0 0.0
  %2062 = vmatprep.subr.mxu0 0.0
  %2063 = vmatpush1.xpose.msra.mxu0 0.0
  %2064 = vmatprep.subr.mxu0 0.0
  %2065 = vmatpush1.xpose.msra.mxu0 0.0
  %2066 = vmatprep.subr.mxu0 0.0
  %2067 = vmatpush1.xpose.msra.mxu0 0.0
  %2068 = vmatprep.subr.mxu0 0.0
  %2069 = vmatpush1.xpose.msra.mxu0 0.0
  %2070 = vmatprep.subr.mxu0 0.0
  %2071 = vmatpush1.xpose.msra.mxu0 0.0
  %2072 = vmatprep.mubr.f32.mxu0 %v391
  %2073 = vmatmul.mubr.f32.gmra.mrb[0].mxu0 %v389
  %v2074 = vpop.f32.mrb[0].mxu0
  %v2075 = vadd.f32 0.0, %v2074
  %v2076 = vpop.f32.mrb[0].mxu0
  %2077 = vmatprep.mubr.f32.mxu0 %v397
  %2078 = vmatmul.mubr.f32.gmra.mrb[0].mxu0 %v395
  %v2079 = vpop.f32.mrb[0].mxu0
  %v2080 = vadd.f32 0.0, %v2079
  %v2081 = vpop.f32.mrb[0].mxu0
  %2082 = vmatprep.mubr.f32.mxu0 1.0
  %2083 = vmatmul.mubr.f32.gmra.mrb[0].mxu0 1.0
  %v2084 = vpop.f32.mrb[0].mxu0
  %v2085 = vadd.f32 0.0, %v2084
  %v2086 = vpop.f32.mrb[0].mxu0
  %2087 = vdwg.mxu0
  %2088 = vmatprep.subr.mxu0 %v1755
  %2089 = vmatpush1.xpose.msra.mxu0 %v1754
  %2090 = vmatprep.subr.mxu0 %v1771
  %2091 = vmatpush1.xpose.msra.mxu0 %v1770
  %2092 = vmatprep.subr.mxu0 %v1787
  %2093 = vmatpush1.xpose.msra.mxu0 %v1786
  %2094 = vmatprep.subr.mxu0 %v1803
  %2095 = vmatpush1.xpose.msra.mxu0 %v1802
  %2096 = vmatprep.subr.mxu0 %v1819
  %2097 = vmatpush1.xpose.msra.mxu0 %v1818
  %2098 = vmatprep.subr.mxu0 %v1835
  %2099 = vmatpush1.xpose.msra.mxu0 %v1834
  %2100 = vmatprep.subr.mxu0 %v1851
  %2101 = vmatpush1.xpose.msra.mxu0 %v1850
  %2102 = vmatprep.subr.mxu0 %v1867
  %2103 = vmatpush1.xpose.msra.mxu0 %v1866
  %2104 = vmatprep.subr.mxu0 %v1883
  %2105 = vmatpush1.xpose.msra.mxu0 %v1882
  %2106 = vmatprep.subr.mxu0 %v1899
  %2107 = vmatpush1.xpose.msra.mxu0 %v1898
  %2108 = vmatprep.subr.mxu0 %v1915
  %2109 = vmatpush1.xpose.msra.mxu0 %v1914
  %2110 = vmatprep.subr.mxu0 %v1931
  %2111 = vmatpush1.xpose.msra.mxu0 %v1930
  %2112 = vmatprep.subr.mxu0 %v1947
  %2113 = vmatpush1.xpose.msra.mxu0 %v1946
  %2114 = vmatprep.subr.mxu0 %v1963
  %2115 = vmatpush1.xpose.msra.mxu0 %v1962
  %2116 = vmatprep.subr.mxu0 %v1979
  %2117 = vmatpush1.xpose.msra.mxu0 %v1978
  %2118 = vmatprep.subr.mxu0 %v1995
  %2119 = vmatpush1.xpose.msra.mxu0 %v1994
  %2120 = vmatprep.subr.mxu0 0.0
  %2121 = vmatpush1.xpose.msra.mxu0 0.0
  %2122 = vmatprep.subr.mxu0 0.0
  %2123 = vmatpush1.xpose.msra.mxu0 0.0
  %2124 = vmatprep.subr.mxu0 0.0
  %2125 = vmatpush1.xpose.msra.mxu0 0.0
  %2126 = vmatprep.subr.mxu0 0.0
  %2127 = vmatpush1.xpose.msra.mxu0 0.0
  %2128 = vmatprep.subr.mxu0 0.0
  %2129 = vmatpush1.xpose.msra.mxu0 0.0
  %2130 = vmatprep.subr.mxu0 0.0
  %2131 = vmatpush1.xpose.msra.mxu0 0.0
  %2132 = vmatprep.subr.mxu0 0.0
  %2133 = vmatpush1.xpose.msra.mxu0 0.0
  %2134 = vmatprep.subr.mxu0 0.0
  %2135 = vmatpush1.xpose.msra.mxu0 0.0
  %2136 = vmatprep.subr.mxu0 0.0
  %2137 = vmatpush1.xpose.msra.mxu0 0.0
  %2138 = vmatprep.subr.mxu0 0.0
  %2139 = vmatpush1.xpose.msra.mxu0 0.0
  %2140 = vmatprep.subr.mxu0 0.0
  %2141 = vmatpush1.xpose.msra.mxu0 0.0
  %2142 = vmatprep.subr.mxu0 0.0
  %2143 = vmatpush1.xpose.msra.mxu0 0.0
  %2144 = vmatprep.subr.mxu0 0.0
  %2145 = vmatpush1.xpose.msra.mxu0 0.0
  %2146 = vmatprep.subr.mxu0 0.0
  %2147 = vmatpush1.xpose.msra.mxu0 0.0
  %2148 = vmatprep.subr.mxu0 0.0
  %2149 = vmatpush1.xpose.msra.mxu0 0.0
  %2150 = vmatprep.subr.mxu0 0.0
  %2151 = vmatpush1.xpose.msra.mxu0 0.0
  %2152 = vmatprep.mubr.f32.mxu0 %v468
  %2153 = vmatmul.mubr.f32.gmra.mrb[0].mxu0 %v466
  %v2154 = vpop.f32.mrb[0].mxu0
  %v2155 = vadd.f32 %v2075, %v2154
  %v2156 = vpop.f32.mrb[0].mxu0
  %2157 = vmatprep.mubr.f32.mxu0 %v474
  %2158 = vmatmul.mubr.f32.gmra.mrb[0].mxu0 %v472
  %v2159 = vpop.f32.mrb[0].mxu0
  %v2160 = vadd.f32 %v2080, %v2159
  %v2161 = vpop.f32.mrb[0].mxu0
  %2162 = vmatprep.mubr.f32.mxu0 1.0
  %2163 = vmatmul.mubr.f32.gmra.mrb[0].mxu0 1.0
  %v2164 = vpop.f32.mrb[0].mxu0
  %v2165 = vadd.f32 %v2085, %v2164
  %v2166 = vpop.f32.mrb[0].mxu0
  %2167 = vdwg.mxu0
  %2168 = vmatprep.subr.mxu0 %v1757
  %2169 = vmatpush1.xpose.msra.mxu0 %v1756
  %2170 = vmatprep.subr.mxu0 %v1773
  %2171 = vmatpush1.xpose.msra.mxu0 %v1772
  %2172 = vmatprep.subr.mxu0 %v1789
  %2173 = vmatpush1.xpose.msra.mxu0 %v1788
  %2174 = vmatprep.subr.mxu0 %v1805
  %2175 = vmatpush1.xpose.msra.mxu0 %v1804
  %2176 = vmatprep.subr.mxu0 %v1821
  %2177 = vmatpush1.xpose.msra.mxu0 %v1820
  %2178 = vmatprep.subr.mxu0 %v1837
  %2179 = vmatpush1.xpose.msra.mxu0 %v1836
  %2180 = vmatprep.subr.mxu0 %v1853
  %2181 = vmatpush1.xpose.msra.mxu0 %v1852
  %2182 = vmatprep.subr.mxu0 %v1869
  %2183 = vmatpush1.xpose.msra.mxu0 %v1868
  %2184 = vmatprep.subr.mxu0 %v1885
  %2185 = vmatpush1.xpose.msra.mxu0 %v1884
  %2186 = vmatprep.subr.mxu0 %v1901
  %2187 = vmatpush1.xpose.msra.mxu0 %v1900
  %2188 = vmatprep.subr.mxu0 %v1917
  %2189 = vmatpush1.xpose.msra.mxu0 %v1916
  %2190 = vmatprep.subr.mxu0 %v1933
  %2191 = vmatpush1.xpose.msra.mxu0 %v1932
  %2192 = vmatprep.subr.mxu0 %v1949
  %2193 = vmatpush1.xpose.msra.mxu0 %v1948
  %2194 = vmatprep.subr.mxu0 %v1965
  %2195 = vmatpush1.xpose.msra.mxu0 %v1964
  %2196 = vmatprep.subr.mxu0 %v1981
  %2197 = vmatpush1.xpose.msra.mxu0 %v1980
  %2198 = vmatprep.subr.mxu0 %v1997
  %2199 = vmatpush1.xpose.msra.mxu0 %v1996
  %2200 = vmatprep.subr.mxu0 0.0
  %2201 = vmatpush1.xpose.msra.mxu0 0.0
  %2202 = vmatprep.subr.mxu0 0.0
  %2203 = vmatpush1.xpose.msra.mxu0 0.0
  %2204 = vmatprep.subr.mxu0 0.0
  %2205 = vmatpush1.xpose.msra.mxu0 0.0
  %2206 = vmatprep.subr.mxu0 0.0
  %2207 = vmatpush1.xpose.msra.mxu0 0.0
  %2208 = vmatprep.subr.mxu0 0.0
  %2209 = vmatpush1.xpose.msra.mxu0 0.0
  %2210 = vmatprep.subr.mxu0 0.0
  %2211 = vmatpush1.xpose.msra.mxu0 0.0
  %2212 = vmatprep.subr.mxu0 0.0
  %2213 = vmatpush1.xpose.msra.mxu0 0.0
  %2214 = vmatprep.subr.mxu0 0.0
  %2215 = vmatpush1.xpose.msra.mxu0 0.0
  %2216 = vmatprep.subr.mxu0 0.0
  %2217 = vmatpush1.xpose.msra.mxu0 0.0
  %2218 = vmatprep.subr.mxu0 0.0
  %2219 = vmatpush1.xpose.msra.mxu0 0.0
  %2220 = vmatprep.subr.mxu0 0.0
  %2221 = vmatpush1.xpose.msra.mxu0 0.0
  %2222 = vmatprep.subr.mxu0 0.0
  %2223 = vmatpush1.xpose.msra.mxu0 0.0
  %2224 = vmatprep.subr.mxu0 0.0
  %2225 = vmatpush1.xpose.msra.mxu0 0.0
  %2226 = vmatprep.subr.mxu0 0.0
  %2227 = vmatpush1.xpose.msra.mxu0 0.0
  %2228 = vmatprep.subr.mxu0 0.0
  %2229 = vmatpush1.xpose.msra.mxu0 0.0
  %2230 = vmatprep.subr.mxu0 0.0
  %2231 = vmatpush1.xpose.msra.mxu0 0.0
  %2232 = vmatprep.mubr.f32.mxu0 %v575
  %2233 = vmatmul.mubr.f32.gmra.mrb[0].mxu0 %v573
  %v2234 = vpop.f32.mrb[0].mxu0
  %v2235 = vadd.f32 %v2155, %v2234
  %v2236 = vpop.f32.mrb[0].mxu0
  %2237 = vmatprep.mubr.f32.mxu0 %v581
  %2238 = vmatmul.mubr.f32.gmra.mrb[0].mxu0 %v579
  %v2239 = vpop.f32.mrb[0].mxu0
  %v2240 = vadd.f32 %v2160, %v2239
  %v2241 = vpop.f32.mrb[0].mxu0
  %2242 = vmatprep.mubr.f32.mxu0 1.0
  %2243 = vmatmul.mubr.f32.gmra.mrb[0].mxu0 1.0
  %v2244 = vpop.f32.mrb[0].mxu0
  %v2245 = vadd.f32 %v2165, %v2244
  %v2246 = vpop.f32.mrb[0].mxu0
  %2247 = vdwg.mxu0
  %2248 = vmatprep.subr.mxu0 %v1759
  %2249 = vmatpush1.xpose.msra.mxu0 %v1758
  %2250 = vmatprep.subr.mxu0 %v1775
  %2251 = vmatpush1.xpose.msra.mxu0 %v1774
  %2252 = vmatprep.subr.mxu0 %v1791
  %2253 = vmatpush1.xpose.msra.mxu0 %v1790
  %2254 = vmatprep.subr.mxu0 %v1807
  %2255 = vmatpush1.xpose.msra.mxu0 %v1806
  %2256 = vmatprep.subr.mxu0 %v1823
  %2257 = vmatpush1.xpose.msra.mxu0 %v1822
  %2258 = vmatprep.subr.mxu0 %v1839
  %2259 = vmatpush1.xpose.msra.mxu0 %v1838
  %2260 = vmatprep.subr.mxu0 %v1855
  %2261 = vmatpush1.xpose.msra.mxu0 %v1854
  %2262 = vmatprep.subr.mxu0 %v1871
  %2263 = vmatpush1.xpose.msra.mxu0 %v1870
  %2264 = vmatprep.subr.mxu0 %v1887
  %2265 = vmatpush1.xpose.msra.mxu0 %v1886
  %2266 = vmatprep.subr.mxu0 %v1903
  %2267 = vmatpush1.xpose.msra.mxu0 %v1902
  %2268 = vmatprep.subr.mxu0 %v1919
  %2269 = vmatpush1.xpose.msra.mxu0 %v1918
  %2270 = vmatprep.subr.mxu0 %v1935
  %2271 = vmatpush1.xpose.msra.mxu0 %v1934
  %2272 = vmatprep.subr.mxu0 %v1951
  %2273 = vmatpush1.xpose.msra.mxu0 %v1950
  %2274 = vmatprep.subr.mxu0 %v1967
  %2275 = vmatpush1.xpose.msra.mxu0 %v1966
  %2276 = vmatprep.subr.mxu0 %v1983
  %2277 = vmatpush1.xpose.msra.mxu0 %v1982
  %2278 = vmatprep.subr.mxu0 %v1999
  %2279 = vmatpush1.xpose.msra.mxu0 %v1998
  %2280 = vmatprep.subr.mxu0 0.0
  %2281 = vmatpush1.xpose.msra.mxu0 0.0
  %2282 = vmatprep.subr.mxu0 0.0
  %2283 = vmatpush1.xpose.msra.mxu0 0.0
  %2284 = vmatprep.subr.mxu0 0.0
  %2285 = vmatpush1.xpose.msra.mxu0 0.0
  %2286 = vmatprep.subr.mxu0 0.0
  %2287 = vmatpush1.xpose.msra.mxu0 0.0
  %2288 = vmatprep.subr.mxu0 0.0
  %2289 = vmatpush1.xpose.msra.mxu0 0.0
  %2290 = vmatprep.subr.mxu0 0.0
  %2291 = vmatpush1.xpose.msra.mxu0 0.0
  %2292 = vmatprep.subr.mxu0 0.0
  %2293 = vmatpush1.xpose.msra.mxu0 0.0
  %2294 = vmatprep.subr.mxu0 0.0
  %2295 = vmatpush1.xpose.msra.mxu0 0.0
  %2296 = vmatprep.subr.mxu0 0.0
  %2297 = vmatpush1.xpose.msra.mxu0 0.0
  %2298 = vmatprep.subr.mxu0 0.0
  %2299 = vmatpush1.xpose.msra.mxu0 0.0
  %2300 = vmatprep.subr.mxu0 0.0
  %2301 = vmatpush1.xpose.msra.mxu0 0.0
  %2302 = vmatprep.subr.mxu0 0.0
  %2303 = vmatpush1.xpose.msra.mxu0 0.0
  %2304 = vmatprep.subr.mxu0 0.0
  %2305 = vmatpush1.xpose.msra.mxu0 0.0
  %2306 = vmatprep.subr.mxu0 0.0
  %2307 = vmatpush1.xpose.msra.mxu0 0.0
  %2308 = vmatprep.subr.mxu0 0.0
  %2309 = vmatpush1.xpose.msra.mxu0 0.0
  %2310 = vmatprep.subr.mxu0 0.0
  %2311 = vmatpush1.xpose.msra.mxu0 0.0
  %2312 = vmatprep.mubr.f32.mxu0 %v652
  %2313 = vmatmul.mubr.f32.gmra.mrb[0].mxu0 %v650
  %v2314 = vpop.f32.mrb[0].mxu0
  %v2315 = vadd.f32 %v2235, %v2314
  %v2316 = vpop.f32.mrb[0].mxu0
  %2317 = vmatprep.mubr.f32.mxu0 %v658
  %2318 = vmatmul.mubr.f32.gmra.mrb[0].mxu0 %v656
  %v2319 = vpop.f32.mrb[0].mxu0
  %v2320 = vadd.f32 %v2240, %v2319
  %v2321 = vpop.f32.mrb[0].mxu0
  %2322 = vmatprep.mubr.f32.mxu0 1.0
  %2323 = vmatmul.mubr.f32.gmra.mrb[0].mxu0 1.0
  %v2324 = vpop.f32.mrb[0].mxu0
  %v2325 = vadd.f32 %v2245, %v2324
  %v2326 = vpop.f32.mrb[0].mxu0
  %2327 = vdwg.mxu0
  %2328 = vmatprep.subr.mxu0 %v1761
  %2329 = vmatpush1.xpose.msra.mxu0 %v1760
  %2330 = vmatprep.subr.mxu0 %v1777
  %2331 = vmatpush1.xpose.msra.mxu0 %v1776
  %2332 = vmatprep.subr.mxu0 %v1793
  %2333 = vmatpush1.xpose.msra.mxu0 %v1792
  %2334 = vmatprep.subr.mxu0 %v1809
  %2335 = vmatpush1.xpose.msra.mxu0 %v1808
  %2336 = vmatprep.subr.mxu0 %v1825
  %2337 = vmatpush1.xpose.msra.mxu0 %v1824
  %2338 = vmatprep.subr.mxu0 %v1841
  %2339 = vmatpush1.xpose.msra.mxu0 %v1840
  %2340 = vmatprep.subr.mxu0 %v1857
  %2341 = vmatpush1.xpose.msra.mxu0 %v1856
  %2342 = vmatprep.subr.mxu0 %v1873
  %2343 = vmatpush1.xpose.msra.mxu0 %v1872
  %2344 = vmatprep.subr.mxu0 %v1889
  %2345 = vmatpush1.xpose.msra.mxu0 %v1888
  %2346 = vmatprep.subr.mxu0 %v1905
  %2347 = vmatpush1.xpose.msra.mxu0 %v1904
  %2348 = vmatprep.subr.mxu0 %v1921
  %2349 = vmatpush1.xpose.msra.mxu0 %v1920
  %2350 = vmatprep.subr.mxu0 %v1937
  %2351 = vmatpush1.xpose.msra.mxu0 %v1936
  %2352 = vmatprep.subr.mxu0 %v1953
  %2353 = vmatpush1.xpose.msra.mxu0 %v1952
  %2354 = vmatprep.subr.mxu0 %v1969
  %2355 = vmatpush1.xpose.msra.mxu0 %v1968
  %2356 = vmatprep.subr.mxu0 %v1985
  %2357 = vmatpush1.xpose.msra.mxu0 %v1984
  %2358 = vmatprep.subr.mxu0 %v2001
  %2359 = vmatpush1.xpose.msra.mxu0 %v2000
  %2360 = vmatprep.subr.mxu0 0.0
  %2361 = vmatpush1.xpose.msra.mxu0 0.0
  %2362 = vmatprep.subr.mxu0 0.0
  %2363 = vmatpush1.xpose.msra.mxu0 0.0
  %2364 = vmatprep.subr.mxu0 0.0
  %2365 = vmatpush1.xpose.msra.mxu0 0.0
  %2366 = vmatprep.subr.mxu0 0.0
  %2367 = vmatpush1.xpose.msra.mxu0 0.0
  %2368 = vmatprep.subr.mxu0 0.0
  %2369 = vmatpush1.xpose.msra.mxu0 0.0
  %2370 = vmatprep.subr.mxu0 0.0
  %2371 = vmatpush1.xpose.msra.mxu0 0.0
  %2372 = vmatprep.subr.mxu0 0.0
  %2373 = vmatpush1.xpose.msra.mxu0 0.0
  %2374 = vmatprep.subr.mxu0 0.0
  %2375 = vmatpush1.xpose.msra.mxu0 0.0
  %2376 = vmatprep.subr.mxu0 0.0
  %2377 = vmatpush1.xpose.msra.mxu0 0.0
  %2378 = vmatprep.subr.mxu0 0.0
  %2379 = vmatpush1.xpose.msra.mxu0 0.0
  %2380 = vmatprep.subr.mxu0 0.0
  %2381 = vmatpush1.xpose.msra.mxu0 0.0
  %2382 = vmatprep.subr.mxu0 0.0
  %2383 = vmatpush1.xpose.msra.mxu0 0.0
  %2384 = vmatprep.subr.mxu0 0.0
  %2385 = vmatpush1.xpose.msra.mxu0 0.0
  %2386 = vmatprep.subr.mxu0 0.0
  %2387 = vmatpush1.xpose.msra.mxu0 0.0
  %2388 = vmatprep.subr.mxu0 0.0
  %2389 = vmatpush1.xpose.msra.mxu0 0.0
  %2390 = vmatprep.subr.mxu0 0.0
  %2391 = vmatpush1.xpose.msra.mxu0 0.0
  %2392 = vmatprep.mubr.f32.mxu0 %v760
  %2393 = vmatmul.mubr.f32.gmra.mrb[0].mxu0 %v758
  %v2394 = vpop.f32.mrb[0].mxu0
  %v2395 = vadd.f32 %v2315, %v2394
  %v2396 = vpop.f32.mrb[0].mxu0
  %2397 = vmatprep.mubr.f32.mxu0 %v766
  %2398 = vmatmul.mubr.f32.gmra.mrb[0].mxu0 %v764
  %v2399 = vpop.f32.mrb[0].mxu0
  %v2400 = vadd.f32 %v2320, %v2399
  %v2401 = vpop.f32.mrb[0].mxu0
  %2402 = vmatprep.mubr.f32.mxu0 1.0
  %2403 = vmatmul.mubr.f32.gmra.mrb[0].mxu0 1.0
  %v2404 = vpop.f32.mrb[0].mxu0
  %v2405 = vadd.f32 %v2325, %v2404
  %v2406 = vpop.f32.mrb[0].mxu0
  %2407 = vdwg.mxu0
  %2408 = vmatprep.subr.mxu0 %v1763
  %2409 = vmatpush1.xpose.msra.mxu0 %v1762
  %2410 = vmatprep.subr.mxu0 %v1779
  %2411 = vmatpush1.xpose.msra.mxu0 %v1778
  %2412 = vmatprep.subr.mxu0 %v1795
  %2413 = vmatpush1.xpose.msra.mxu0 %v1794
  %2414 = vmatprep.subr.mxu0 %v1811
  %2415 = vmatpush1.xpose.msra.mxu0 %v1810
  %2416 = vmatprep.subr.mxu0 %v1827
  %2417 = vmatpush1.xpose.msra.mxu0 %v1826
  %2418 = vmatprep.subr.mxu0 %v1843
  %2419 = vmatpush1.xpose.msra.mxu0 %v1842
  %2420 = vmatprep.subr.mxu0 %v1859
  %2421 = vmatpush1.xpose.msra.mxu0 %v1858
  %2422 = vmatprep.subr.mxu0 %v1875
  %2423 = vmatpush1.xpose.msra.mxu0 %v1874
  %2424 = vmatprep.subr.mxu0 %v1891
  %2425 = vmatpush1.xpose.msra.mxu0 %v1890
  %2426 = vmatprep.subr.mxu0 %v1907
  %2427 = vmatpush1.xpose.msra.mxu0 %v1906
  %2428 = vmatprep.subr.mxu0 %v1923
  %2429 = vmatpush1.xpose.msra.mxu0 %v1922
  %2430 = vmatprep.subr.mxu0 %v1939
  %2431 = vmatpush1.xpose.msra.mxu0 %v1938
  %2432 = vmatprep.subr.mxu0 %v1955
  %2433 = vmatpush1.xpose.msra.mxu0 %v1954
  %2434 = vmatprep.subr.mxu0 %v1971
  %2435 = vmatpush1.xpose.msra.mxu0 %v1970
  %2436 = vmatprep.subr.mxu0 %v1987
  %2437 = vmatpush1.xpose.msra.mxu0 %v1986
  %2438 = vmatprep.subr.mxu0 %v2003
  %2439 = vmatpush1.xpose.msra.mxu0 %v2002
  %2440 = vmatprep.subr.mxu0 0.0
  %2441 = vmatpush1.xpose.msra.mxu0 0.0
  %2442 = vmatprep.subr.mxu0 0.0
  %2443 = vmatpush1.xpose.msra.mxu0 0.0
  %2444 = vmatprep.subr.mxu0 0.0
  %2445 = vmatpush1.xpose.msra.mxu0 0.0
  %2446 = vmatprep.subr.mxu0 0.0
  %2447 = vmatpush1.xpose.msra.mxu0 0.0
  %2448 = vmatprep.subr.mxu0 0.0
  %2449 = vmatpush1.xpose.msra.mxu0 0.0
  %2450 = vmatprep.subr.mxu0 0.0
  %2451 = vmatpush1.xpose.msra.mxu0 0.0
  %2452 = vmatprep.subr.mxu0 0.0
  %2453 = vmatpush1.xpose.msra.mxu0 0.0
  %2454 = vmatprep.subr.mxu0 0.0
  %2455 = vmatpush1.xpose.msra.mxu0 0.0
  %2456 = vmatprep.subr.mxu0 0.0
  %2457 = vmatpush1.xpose.msra.mxu0 0.0
  %2458 = vmatprep.subr.mxu0 0.0
  %2459 = vmatpush1.xpose.msra.mxu0 0.0
  %2460 = vmatprep.subr.mxu0 0.0
  %2461 = vmatpush1.xpose.msra.mxu0 0.0
  %2462 = vmatprep.subr.mxu0 0.0
  %2463 = vmatpush1.xpose.msra.mxu0 0.0
  %2464 = vmatprep.subr.mxu0 0.0
  %2465 = vmatpush1.xpose.msra.mxu0 0.0
  %2466 = vmatprep.subr.mxu0 0.0
  %2467 = vmatpush1.xpose.msra.mxu0 0.0
  %2468 = vmatprep.subr.mxu0 0.0
  %2469 = vmatpush1.xpose.msra.mxu0 0.0
  %2470 = vmatprep.subr.mxu0 0.0
  %2471 = vmatpush1.xpose.msra.mxu0 0.0
  %2472 = vmatprep.mubr.f32.mxu0 %v837
  %2473 = vmatmul.mubr.f32.gmra.mrb[0].mxu0 %v835
  %v2474 = vpop.f32.mrb[0].mxu0
  %v2475 = vadd.f32 %v2395, %v2474
  %v2476 = vpop.f32.mrb[0].mxu0
  %2477 = vmatprep.mubr.f32.mxu0 %v843
  %2478 = vmatmul.mubr.f32.gmra.mrb[0].mxu0 %v841
  %v2479 = vpop.f32.mrb[0].mxu0
  %v2480 = vadd.f32 %v2400, %v2479
  %v2481 = vpop.f32.mrb[0].mxu0
  %2482 = vmatprep.mubr.f32.mxu0 1.0
  %2483 = vmatmul.mubr.f32.gmra.mrb[0].mxu0 1.0
  %v2484 = vpop.f32.mrb[0].mxu0
  %v2485 = vadd.f32 %v2405, %v2484
  %v2486 = vpop.f32.mrb[0].mxu0
  %2487 = vdwg.mxu0
  %2488 = vmatprep.subr.mxu0 %v1765
  %2489 = vmatpush1.xpose.msra.mxu0 %v1764
  %2490 = vmatprep.subr.mxu0 %v1781
  %2491 = vmatpush1.xpose.msra.mxu0 %v1780
  %2492 = vmatprep.subr.mxu0 %v1797
  %2493 = vmatpush1.xpose.msra.mxu0 %v1796
  %2494 = vmatprep.subr.mxu0 %v1813
  %2495 = vmatpush1.xpose.msra.mxu0 %v1812
  %2496 = vmatprep.subr.mxu0 %v1829
  %2497 = vmatpush1.xpose.msra.mxu0 %v1828
  %2498 = vmatprep.subr.mxu0 %v1845
  %2499 = vmatpush1.xpose.msra.mxu0 %v1844
  %2500 = vmatprep.subr.mxu0 %v1861
  %2501 = vmatpush1.xpose.msra.mxu0 %v1860
  %2502 = vmatprep.subr.mxu0 %v1877
  %2503 = vmatpush1.xpose.msra.mxu0 %v1876
  %2504 = vmatprep.subr.mxu0 %v1893
  %2505 = vmatpush1.xpose.msra.mxu0 %v1892
  %2506 = vmatprep.subr.mxu0 %v1909
  %2507 = vmatpush1.xpose.msra.mxu0 %v1908
  %2508 = vmatprep.subr.mxu0 %v1925
  %2509 = vmatpush1.xpose.msra.mxu0 %v1924
  %2510 = vmatprep.subr.mxu0 %v1941
  %2511 = vmatpush1.xpose.msra.mxu0 %v1940
  %2512 = vmatprep.subr.mxu0 %v1957
  %2513 = vmatpush1.xpose.msra.mxu0 %v1956
  %2514 = vmatprep.subr.mxu0 %v1973
  %2515 = vmatpush1.xpose.msra.mxu0 %v1972
  %2516 = vmatprep.subr.mxu0 %v1989
  %2517 = vmatpush1.xpose.msra.mxu0 %v1988
  %2518 = vmatprep.subr.mxu0 %v2005
  %2519 = vmatpush1.xpose.msra.mxu0 %v2004
  %2520 = vmatprep.subr.mxu0 0.0
  %2521 = vmatpush1.xpose.msra.mxu0 0.0
  %2522 = vmatprep.subr.mxu0 0.0
  %2523 = vmatpush1.xpose.msra.mxu0 0.0
  %2524 = vmatprep.subr.mxu0 0.0
  %2525 = vmatpush1.xpose.msra.mxu0 0.0
  %2526 = vmatprep.subr.mxu0 0.0
  %2527 = vmatpush1.xpose.msra.mxu0 0.0
  %2528 = vmatprep.subr.mxu0 0.0
  %2529 = vmatpush1.xpose.msra.mxu0 0.0
  %2530 = vmatprep.subr.mxu0 0.0
  %2531 = vmatpush1.xpose.msra.mxu0 0.0
  %2532 = vmatprep.subr.mxu0 0.0
  %2533 = vmatpush1.xpose.msra.mxu0 0.0
  %2534 = vmatprep.subr.mxu0 0.0
  %2535 = vmatpush1.xpose.msra.mxu0 0.0
  %2536 = vmatprep.subr.mxu0 0.0
  %2537 = vmatpush1.xpose.msra.mxu0 0.0
  %2538 = vmatprep.subr.mxu0 0.0
  %2539 = vmatpush1.xpose.msra.mxu0 0.0
  %2540 = vmatprep.subr.mxu0 0.0
  %2541 = vmatpush1.xpose.msra.mxu0 0.0
  %2542 = vmatprep.subr.mxu0 0.0
  %2543 = vmatpush1.xpose.msra.mxu0 0.0
  %2544 = vmatprep.subr.mxu0 0.0
  %2545 = vmatpush1.xpose.msra.mxu0 0.0
  %2546 = vmatprep.subr.mxu0 0.0
  %2547 = vmatpush1.xpose.msra.mxu0 0.0
  %2548 = vmatprep.subr.mxu0 0.0
  %2549 = vmatpush1.xpose.msra.mxu0 0.0
  %2550 = vmatprep.subr.mxu0 0.0
  %2551 = vmatpush1.xpose.msra.mxu0 0.0
  %2552 = vmatprep.mubr.f32.mxu0 %v946
  %2553 = vmatmul.mubr.f32.gmra.mrb[0].mxu0 %v944
  %v2554 = vpop.f32.mrb[0].mxu0
  %v2555 = vadd.f32 %v2475, %v2554
  %v2556 = vpop.f32.mrb[0].mxu0
  %2557 = vmatprep.mubr.f32.mxu0 %v952
  %2558 = vmatmul.mubr.f32.gmra.mrb[0].mxu0 %v950
  %v2559 = vpop.f32.mrb[0].mxu0
  %v2560 = vadd.f32 %v2480, %v2559
  %v2561 = vpop.f32.mrb[0].mxu0
  %2562 = vmatprep.mubr.f32.mxu0 1.0
  %2563 = vmatmul.mubr.f32.gmra.mrb[0].mxu0 1.0
  %v2564 = vpop.f32.mrb[0].mxu0
  %v2565 = vadd.f32 %v2485, %v2564
  %v2566 = vpop.f32.mrb[0].mxu0
  %2567 = vdwg.mxu0
  %2568 = vmatprep.subr.mxu0 %v1767
  %2569 = vmatpush1.xpose.msra.mxu0 %v1766
  %2570 = vmatprep.subr.mxu0 %v1783
  %2571 = vmatpush1.xpose.msra.mxu0 %v1782
  %2572 = vmatprep.subr.mxu0 %v1799
  %2573 = vmatpush1.xpose.msra.mxu0 %v1798
  %2574 = vmatprep.subr.mxu0 %v1815
  %2575 = vmatpush1.xpose.msra.mxu0 %v1814
  %2576 = vmatprep.subr.mxu0 %v1831
  %2577 = vmatpush1.xpose.msra.mxu0 %v1830
  %2578 = vmatprep.subr.mxu0 %v1847
  %2579 = vmatpush1.xpose.msra.mxu0 %v1846
  %2580 = vmatprep.subr.mxu0 %v1863
  %2581 = vmatpush1.xpose.msra.mxu0 %v1862
  %2582 = vmatprep.subr.mxu0 %v1879
  %2583 = vmatpush1.xpose.msra.mxu0 %v1878
  %2584 = vmatprep.subr.mxu0 %v1895
  %2585 = vmatpush1.xpose.msra.mxu0 %v1894
  %2586 = vmatprep.subr.mxu0 %v1911
  %2587 = vmatpush1.xpose.msra.mxu0 %v1910
  %2588 = vmatprep.subr.mxu0 %v1927
  %2589 = vmatpush1.xpose.msra.mxu0 %v1926
  %2590 = vmatprep.subr.mxu0 %v1943
  %2591 = vmatpush1.xpose.msra.mxu0 %v1942
  %2592 = vmatprep.subr.mxu0 %v1959
  %2593 = vmatpush1.xpose.msra.mxu0 %v1958
  %2594 = vmatprep.subr.mxu0 %v1975
  %2595 = vmatpush1.xpose.msra.mxu0 %v1974
  %2596 = vmatprep.subr.mxu0 %v1991
  %2597 = vmatpush1.xpose.msra.mxu0 %v1990
  %2598 = vmatprep.subr.mxu0 %v2007
  %2599 = vmatpush1.xpose.msra.mxu0 %v2006
  %2600 = vmatprep.subr.mxu0 0.0
  %2601 = vmatpush1.xpose.msra.mxu0 0.0
  %2602 = vmatprep.subr.mxu0 0.0
  %2603 = vmatpush1.xpose.msra.mxu0 0.0
  %2604 = vmatprep.subr.mxu0 0.0
  %2605 = vmatpush1.xpose.msra.mxu0 0.0
  %2606 = vmatprep.subr.mxu0 0.0
  %2607 = vmatpush1.xpose.msra.mxu0 0.0
  %2608 = vmatprep.subr.mxu0 0.0
  %2609 = vmatpush1.xpose.msra.mxu0 0.0
  %2610 = vmatprep.subr.mxu0 0.0
  %2611 = vmatpush1.xpose.msra.mxu0 0.0
  %2612 = vmatprep.subr.mxu0 0.0
  %2613 = vmatpush1.xpose.msra.mxu0 0.0
  %2614 = vmatprep.subr.mxu0 0.0
  %2615 = vmatpush1.xpose.msra.mxu0 0.0
  %2616 = vmatprep.subr.mxu0 0.0
  %2617 = vmatpush1.xpose.msra.mxu0 0.0
  %2618 = vmatprep.subr.mxu0 0.0
  %2619 = vmatpush1.xpose.msra.mxu0 0.0
  %2620 = vmatprep.subr.mxu0 0.0
  %2621 = vmatpush1.xpose.msra.mxu0 0.0
  %2622 = vmatprep.subr.mxu0 0.0
  %2623 = vmatpush1.xpose.msra.mxu0 0.0
  %2624 = vmatprep.subr.mxu0 0.0
  %2625 = vmatpush1.xpose.msra.mxu0 0.0
  %2626 = vmatprep.subr.mxu0 0.0
  %2627 = vmatpush1.xpose.msra.mxu0 0.0
  %2628 = vmatprep.subr.mxu0 0.0
  %2629 = vmatpush1.xpose.msra.mxu0 0.0
  %2630 = vmatprep.subr.mxu0 0.0
  %2631 = vmatpush1.xpose.msra.mxu0 0.0
  %2632 = vmatprep.mubr.f32.mxu0 %v1023
  %2633 = vmatmul.mubr.f32.gmra.mrb[0].mxu0 %v1021
  %v2634 = vpop.f32.mrb[0].mxu0
  %v2635 = vadd.f32 %v2555, %v2634
  %v2636 = vpop.f32.mrb[0].mxu0
  %2637 = vmatprep.mubr.f32.mxu0 %v1029
  %2638 = vmatmul.mubr.f32.gmra.mrb[0].mxu0 %v1027
  %v2639 = vpop.f32.mrb[0].mxu0
  %v2640 = vadd.f32 %v2560, %v2639
  %v2641 = vpop.f32.mrb[0].mxu0
  %2642 = vmatprep.mubr.f32.mxu0 1.0
  %2643 = vmatmul.mubr.f32.gmra.mrb[0].mxu0 1.0
  %v2644 = vpop.f32.mrb[0].mxu0
  %v2645 = vadd.f32 %v2565, %v2644
  %v2646 = vpop.f32.mrb[0].mxu0
  %2647 = vdwg.mxu0
  %v2648 = vmax.f32 %v2645, 1.0
  %v2649 = vlaneseq
  %v2650 = vshrl.u32 %v2649, 7
  %v2651 = vsub.s32 0, %v2650
  %v2652 = vrot.slane %v2648, %v2651
  %v2653 = vrcp.pop %v2652
  %v2654 = vmul.f32 %v2635, %v2653
  %v2655 = vmul.f32 %v2640, %v2653
  %2656 = vst [vmem:[%s7] sm:$0xff] %v2654
  %2657 = vst [vmem:[%s7 + $0x8] sm:$0xff] %v2655
  // Predicated region
  $region26: #{fisheye_lss_forward.1} parent=0 // pred_check
    _
  $region27: #{fisheye_lss_forward.1} parent=0 // pred_check_branch
    %2659 = sbr.rel (0) target = $region29
  $region28: #{fisheye_lss_forward.1} parent=0 // pred_region
    _
  $region29: #{fisheye_lss_forward.1} parent=0 // pred_fallthru
    _
  // Predicated region
  $region30: #{fisheye_lss_forward.1} parent=0 // pred_check
    _
  $region31: #{fisheye_lss_forward.1} parent=0 // pred_check_branch
    %2661 = sbr.rel (0) target = $region33
  $region32: #{fisheye_lss_forward.1} parent=0 // pred_region
    _
  $region33: #{fisheye_lss_forward.1} parent=0 // pred_fallthru
    _
  // Predicated region
  $region34: #{fisheye_lss_forward.1} parent=0 // pred_check
    _
  $region35: #{fisheye_lss_forward.1} parent=0 // pred_check_branch
    %2663 = sbr.rel (0) target = $region37
  $region36: #{fisheye_lss_forward.1} parent=0 // pred_region
    _
  $region37: #{fisheye_lss_forward.1} parent=0 // pred_fallthru
    _
  // Predicated region
  $region38: #{fisheye_lss_forward.1} parent=0 // pred_check
    _
  $region39: #{fisheye_lss_forward.1} parent=0 // pred_check_branch
    %2665 = sbr.rel (0) target = $region41
  $region40: #{fisheye_lss_forward.1} parent=0 // pred_region
    _
  $region41: #{fisheye_lss_forward.1} parent=0 // pred_fallthru
    _

</llo_original>
